<compile_context>
chip_gen: v7x
topology: tpu7x:2x2x1
jax: 0.10.0
libtpu: 0.0.40
codegen_flags: <defaults>
</compile_context>

<pallas_src>
import functools

import numpy as np
import jax
import jax.numpy as jnp
from jax.experimental import pallas as pl
from jax.experimental.pallas import tpu as pltpu

KH = KW = 4      # conv kernel
STRIDE = 2       # conv stride
PAD = 1          # conv padding
CONV_CHANNELS = ((1, 32), (32, 32), (32, 64), (64, 64))


# ---------------------------------------------------------------------------
# Wrapper-side (plain JAX) one-time prep helpers.
# ---------------------------------------------------------------------------
def _layer_geometry(h, w):
    """[(h_in, w_in, h_out, w_out, cin, cout)] for the 4 conv layers."""
    sizes = []
    hi, wi = h, w
    for cin, cout in CONV_CHANNELS:
        assert hi % 2 == 0 and wi % 2 == 0, "spatial size must stay even"
        sizes.append((hi, wi, hi // 2, wi // 2, cin, cout))
        hi, wi = hi // 2, wi // 2
    return sizes


def _phase_pack(x_nhwc):
    """(N,H,W,C) -> phase-packed padded (N, H/2+1, W/2+1, 4*C):
       out[n,i,j,(a*2+b)*C+c] = x_pad[n, 2i+a, 2j+b, c] (zero pad of 1)."""
    n, h, w, c = x_nhwc.shape
    xp = jnp.pad(x_nhwc, ((0, 0), (PAD, PAD), (PAD, PAD), (0, 0)))
    hh, wh = (h + 2 * PAD) // 2, (w + 2 * PAD) // 2
    t = xp.reshape(n, hh, 2, wh, 2, c).transpose(0, 1, 3, 2, 4, 5)
    return t.reshape(n, hh, wh, 4 * c)


def _conv_weight_slabs(w):
    """(KH,KW,Cin,Cout) -> (4, 4*Cin, Cout), slab index r0*2+c0, row order
       (a*2+b)*Cin + ci with kh = 2*r0+a, kw = 2*c0+b (matches the phase-packed
       slab layout used in the kernel)."""
    _, _, cin, cout = w.shape
    w6 = w.reshape(2, 2, 2, 2, cin, cout)          # (r0, a, c0, b, cin, cout)
    w6 = w6.transpose(0, 2, 1, 3, 4, 5)            # (r0, c0, a, b, cin, cout)
    return w6.reshape(4, 4 * cin, cout)


# ---------------------------------------------------------------------------
# Fused kernel: 4 convs + dense + fused mu/logvar + reparameterization.
# ---------------------------------------------------------------------------
def _make_fused_kernel(nb, sizes, d1, latent, emit_hidden):
    ho4, wo4, c4 = sizes[-1][2], sizes[-1][3], sizes[-1][5]
    n_pix4 = ho4 * wo4

    def conv_from_pp(pp_ref, w_ref, b_ref, ho, wo):
        """pp_ref: (nb, ho+1, wo+1, 4*cin) f32.  4 accumulating MXU matmuls,
           bf16 inputs, f32 accumulation, f32 bias+ReLU epilogue."""
        m = nb * ho * wo
        acc = None
        for r0 in range(2):
            for c0 in range(2):
                slab = pp_ref[:, r0:r0 + ho, c0:c0 + wo, :]
                slab = slab.reshape(m, slab.shape[-1]).astype(jnp.bfloat16)
                part = jnp.dot(slab, w_ref[r0 * 2 + c0],
                               preferred_element_type=jnp.float32)
                acc = part if acc is None else acc + part
        return jnp.maximum(acc + b_ref[...], 0.0)                 # (m, cout) f32

    def split_to_pp(y, y_scr, pp_scr, ho, wo, c):
        """y: (nb*ho*wo, c) f32 post-ReLU -> next layer's phase-packed,
           zero-padded input in pp_scr: pp[n,i,j,(a*2+b)*c+cc] = ypad[n,2i+a,2j+b,cc].
           Column parity via strided sublane reads; row parity via major-dim
           reshape+index; zero borders come from zero-initializing pp_scr."""
        m = nb * ho * wo
        hq, wq = ho // 2, wo // 2
        y_scr[...] = y
        pp_scr[...] = jnp.zeros_like(pp_scr)
        for p_r in range(2):
            for p_c in range(2):
                col = y_scr[pl.ds(p_c, m // 2, stride=2), :]       # cols s = 2t+p_c
                q = col.reshape(nb * hq, 2, wq, c)[:, p_r, :, :]   # rows r = 2r2+p_r
                q = q.reshape(nb, hq, wq, c)
                ph = (1 - p_r) * 2 + (1 - p_c)                     # dest phase (a,b)
                pp_scr[:, p_r:p_r + hq, p_c:p_c + wq, ph * c:(ph + 1) * c] = q

    def kernel(pp1_ref, w1, b1, w2, b2, w3, b3, w4, b4,
               wd_ref, bd_ref, wml_ref, bml_ref, eps_ref,
               zml_ref, *rest):
        if emit_hidden:
            h_refs = rest[:4]
            scr = rest[4:]
        else:
            h_refs = None
            scr = rest

        w_refs = (w1, w2, w3, w4)
        b_refs = (b1, b2, b3, b4)

        # ---- layer 1 (phase-packed image shipped by the wrapper) ----
        ho, wo, cout = sizes[0][2], sizes[0][3], sizes[0][5]
        y = conv_from_pp(pp1_ref, w_refs[0], b_refs[0], ho, wo)
        if emit_hidden:
            h_refs[0][...] = y.reshape(nb, ho * wo, cout).astype(jnp.bfloat16)

        # ---- layers 2..4: in-kernel stride-2 phase split + 4-slab conv ----
        for l in range(1, 4):
            p_ho, p_wo, p_c = sizes[l - 1][2], sizes[l - 1][3], sizes[l - 1][5]
            y_scr, pp_scr = scr[2 * (l - 1)], scr[2 * (l - 1) + 1]
            split_to_pp(y, y_scr, pp_scr, p_ho, p_wo, p_c)
            ho, wo, cout = sizes[l][2], sizes[l][3], sizes[l][5]
            y = conv_from_pp(pp_scr, w_refs[l], b_refs[l], ho, wo)
            if emit_hidden:
                h_refs[l][...] = y.reshape(nb, ho * wo, cout).astype(jnp.bfloat16)

        # ---- head: dense (NCHW flatten folded into the weight) -> mu|logvar -> z ----
        # NOTE: the PyTorch module has no activation after `dense` -- kept faithful.
        if n_pix4 == 1:
            hfeat = jnp.dot(y.astype(jnp.bfloat16), wd_ref[0],
                            preferred_element_type=jnp.float32)
        else:
            y4_scr = scr[6]
            y4_scr[...] = y.reshape(nb, ho4, wo4, c4)
            hfeat = jnp.zeros((nb, d1), jnp.float32)
            for p in range(n_pix4):
                i, j = p // wo4, p % wo4
                hfeat = hfeat + jnp.dot(
                    y4_scr[:, i, j, :].astype(jnp.bfloat16), wd_ref[p],
                    preferred_element_type=jnp.float32)
        hfeat = hfeat + bd_ref[...]

        ml = jnp.dot(hfeat.astype(jnp.bfloat16), wml_ref[...],
                     preferred_element_type=jnp.float32) + bml_ref[...]
        mu = ml[:, :latent]
        lv = ml[:, latent:]
        z = mu + jnp.exp(0.5 * lv) * eps_ref[:, 0, :]
        zml_ref[:, 0, :] = jnp.concatenate([z, mu, lv], axis=-1)

    return kernel


def _bcast_spec(shape):
    nd = len(shape)
    return pl.BlockSpec(shape, lambda i, _n=nd: (0,) * _n)


def _batched_spec(block_shape):
    n_rest = len(block_shape) - 1
    return pl.BlockSpec(block_shape, lambda i, _r=n_rest: (i,) + (0,) * _r)


# ---------------------------------------------------------------------------
# Public forward (mirrors CNN2DShapesEncoder.forward, num_sampling == 1).
# ---------------------------------------------------------------------------
@functools.partial(jax.jit, static_argnames=("hidden_states", "batch_block"))
def cnn2d_shapes_encoder(params, x_nchw, eps, hidden_states=True, batch_block=None):
    n, c_in, h, w = x_nchw.shape
    assert c_in == 1, "2D-Shapes encoder expects single-channel input"
    if batch_block is None:
        nb = n // 2 if (n % 2 == 0 and n >= 2) else n   # grid >= 2 -> both v7x TCs
    else:
        nb = int(batch_block)
    assert nb >= 1 and n % nb == 0, "batch_block must divide batch"
    grid = (n // nb,)

    sizes = _layer_geometry(h, w)
    ho4, wo4, c4 = sizes[-1][2], sizes[-1][3], sizes[-1][5]
    n_pix4 = ho4 * wo4
    wd, bd = params["dense"]
    wmu, bmu = params["mu"]
    wlv, blv = params["logvar"]
    d_in, d1 = wd.shape
    latent = wmu.shape[1]
    assert d_in == c4 * n_pix4, "dense_dim[0] must match flattened conv output"

    # ---- one-time prep (fused / constant-folded by XLA under jit) ----
    x_nhwc = jnp.transpose(x_nchw, (0, 2, 3, 1))
    pp1 = _phase_pack(x_nhwc).astype(jnp.float32)          # (N, H/2+1, W/2+1, 4)

    conv_w = [_conv_weight_slabs(wl).astype(jnp.bfloat16) for wl, _ in params["convs"]]
    conv_b = [bl.reshape(1, -1).astype(jnp.float32) for _, bl in params["convs"]]

    # dense weight rows are in PyTorch NCHW-flat order (c, r, s) -> (pixel, c, d1).
    wd_r = wd.reshape(c4, n_pix4, d1).transpose(1, 0, 2).astype(jnp.bfloat16)
    bd_r = bd.reshape(1, d1).astype(jnp.float32)
    wml = jnp.concatenate([wmu, wlv], axis=1).astype(jnp.bfloat16)       # (d1, 2L)
    bml = jnp.concatenate([bmu, blv]).reshape(1, 2 * latent).astype(jnp.float32)
    eps3 = eps.reshape(n, 1, latent).astype(jnp.float32)

    # ---- operands / specs (order matches the kernel signature) ----
    operands = [pp1]
    in_specs = [_batched_spec((nb,) + pp1.shape[1:])]
    for l in range(4):
        operands += [conv_w[l], conv_b[l]]
        in_specs += [_bcast_spec(conv_w[l].shape), _bcast_spec(conv_b[l].shape)]
    operands += [wd_r, bd_r, wml, bml, eps3]
    in_specs += [_bcast_spec(wd_r.shape), _bcast_spec(bd_r.shape),
                 _bcast_spec(wml.shape), _bcast_spec(bml.shape),
                 _batched_spec((nb, 1, latent))]

    out_shape = [jax.ShapeDtypeStruct((n, 1, 3 * latent), jnp.float32)]
    out_specs = [_batched_spec((nb, 1, 3 * latent))]
    if hidden_states:
        for _, _, ho, wo, _, cout in sizes:
            out_shape.append(jax.ShapeDtypeStruct((n, ho * wo, cout), jnp.bfloat16))
            out_specs.append(_batched_spec((nb, ho * wo, cout)))

    scratch_shapes = []
    for l in range(3):                       # transitions after conv layers 1..3
        ho, wo, cout = sizes[l][2], sizes[l][3], sizes[l][5]
        scratch_shapes.append(pltpu.VMEM((nb * ho * wo, cout), jnp.float32))
        scratch_shapes.append(
            pltpu.VMEM((nb, ho // 2 + 1, wo // 2 + 1, 4 * cout), jnp.float32))
    if n_pix4 > 1:
        scratch_shapes.append(pltpu.VMEM((nb, ho4, wo4, c4), jnp.float32))

    kernel = _make_fused_kernel(nb, sizes, d1, latent, hidden_states)
    outs = pl.pallas_call(
        kernel,
        out_shape=tuple(out_shape),
        grid=grid,
        in_specs=in_specs,
        out_specs=tuple(out_specs),
        scratch_shapes=tuple(scratch_shapes),
        compiler_params=pltpu.CompilerParams(
            dimension_semantics=("parallel",),          # batch blocks -> both TCs
            vmem_limit_bytes=48 * 1024 * 1024),         # explicit, v7x (64 MiB) safe
    )(*operands)

    zml = outs[0]
    z = zml[:, 0, :latent]
    mu = zml[:, 0, latent:2 * latent]
    logvar = zml[:, 0, 2 * latent:]

    all_hidden = ()
    if hidden_states:
        all_hidden = (x_nchw,)
        for (_, _, ho, wo, _, cout), hflat in zip(sizes, outs[1:]):
            hnhwc = hflat.reshape(n, ho, wo, cout).astype(jnp.float32)
            all_hidden = all_hidden + (jnp.transpose(hnhwc, (0, 3, 1, 2)),)
    # TODO(synk): num_sampling > 1 branch (eps of shape (S, N, L)) not implemented.
    return z, mu, logvar, all_hidden


# ---------------------------------------------------------------------------
# Deterministic parameter init (PyTorch-style uniform(-1/sqrt(fan_in), +...)).
# ---------------------------------------------------------------------------
def init_params(key, dense_dim, latent_dim):
    keys = jax.random.split(key, 2 * len(CONV_CHANNELS) + 6)
    ki = 0
    convs = []
    for cin, cout in CONV_CHANNELS:
        bound = 1.0 / float(cin * KH * KW) ** 0.5
        wl = jax.random.uniform(keys[ki], (KH, KW, cin, cout), jnp.float32, -bound, bound)
        bl = jax.random.uniform(keys[ki + 1], (cout,), jnp.float32, -bound, bound)
        convs.append((wl, bl))
        ki += 2

    def lin(k1, k2, fin, fout):
        bound = 1.0 / float(fin) ** 0.5
        return (jax.random.uniform(k1, (fin, fout), jnp.float32, -bound, bound),
                jax.random.uniform(k2, (fout,), jnp.float32, -bound, bound))

    d0, d1 = dense_dim
    dense = lin(keys[ki], keys[ki + 1], d0, d1); ki += 2
    mu = lin(keys[ki], keys[ki + 1], d1, latent_dim); ki += 2
    logvar = lin(keys[ki], keys[ki + 1], d1, latent_dim); ki += 2
    return {"convs": convs, "dense": dense, "mu": mu, "logvar": logvar}


# ---------------------------------------------------------------------------
# Pure-JAX/XLA reference for numerical validation.
# ---------------------------------------------------------------------------
def _reference_forward(params, x_nchw, eps):
    out = x_nchw
    hiddens = (out,)
    for wl, bl in params["convs"]:
        out = jax.lax.conv_general_dilated(
            out, wl, window_strides=(STRIDE, STRIDE),
            padding=((PAD, PAD), (PAD, PAD)),
            dimension_numbers=("NCHW", "HWIO", "NCHW"))
        out = jnp.maximum(out + bl.reshape(1, -1, 1, 1), 0.0)
        hiddens = hiddens + (out,)
    feat = out.reshape(out.shape[0], -1)                    # NCHW flatten, like PyTorch
    wd, bd = params["dense"]
    hfeat = feat @ wd + bd
    wmu, bmu = params["mu"]
    wlv, blv = params["logvar"]
    mu = hfeat @ wmu + bmu
    lv = hfeat @ wlv + blv
    z = mu + jnp.exp(0.5 * lv) * eps
    return z, mu, lv, hiddens


if __name__ == "__main__":
    # Small config: 16x16 single-channel input -> 4 stride-2 convs -> 1x1x64.
    latent_dim = 8
    dense_dim = (64, 32)          # 64 = 64ch * 1 * 1 after four stride-2 convs on 16x16

    key = jax.random.PRNGKey(0)
    k_params, k_x, k_eps = jax.random.split(key, 3)
    params = init_params(k_params, dense_dim, latent_dim)

    x = jax.random.normal(k_x, (2, 1, 16, 16), dtype=jnp.float32)       # NCHW like PyTorch
    eps = jax.random.normal(k_eps, (2, latent_dim), dtype=jnp.float32)  # randn_like(logvar)

    z, mu, logvar, hiddens = cnn2d_shapes_encoder(params, x, eps, hidden_states=True)
    jax.block_until_ready((z, mu, logvar, hiddens))

    assert z.shape == (2, latent_dim)
    assert mu.shape == (2, latent_dim)
    assert logvar.shape == (2, latent_dim)
    assert len(hiddens) == 5                       # input + 4 conv hidden states
    assert hiddens[1].shape == (2, 32, 8, 8)
    assert hiddens[4].shape == (2, 64, 1, 1)
    assert bool(jnp.all(jnp.isfinite(z)))

    # Numerical check vs pure-XLA reference (loose tols: matmuls use bf16 MXU inputs,
    # hidden states are emitted in bf16).
    z_r, mu_r, lv_r, hid_r = _reference_forward(params, x, eps)
    np.testing.assert_allclose(np.asarray(mu), np.asarray(mu_r), rtol=5e-2, atol=5e-2)
    np.testing.assert_allclose(np.asarray(logvar), np.asarray(lv_r), rtol=5e-2, atol=5e-2)
    np.testing.assert_allclose(np.asarray(z), np.asarray(z_r), rtol=5e-2, atol=5e-2)
    for got, want in zip(hiddens, hid_r):
        np.testing.assert_allclose(np.asarray(got), np.asarray(want), rtol=5e-2, atol=5e-2)

    # hidden_states=False path: a kernel with no hidden-state outputs at all.
    z2, mu2, lv2, hs2 = cnn2d_shapes_encoder(params, x, eps, hidden_states=False)
    jax.block_until_ready((z2, mu2, lv2))
    assert hs2 == ()
    np.testing.assert_allclose(np.asarray(z2), np.asarray(z), rtol=1e-5, atol=1e-5)
    np.testing.assert_allclose(np.asarray(mu2), np.asarray(mu), rtol=1e-5, atol=1e-5)

    print("KERNEL_OK")
</pallas_src>

<mosaic_0001>
module attributes {stable_mosaic.version = 11 : i64} {
  func.func @kernel(%arg0: i32, %arg1: memref<1x9x9x4xf32, #tpu.memory_space<vmem>>, %arg2: memref<4x4x32xbf16, #tpu.memory_space<vmem>>, %arg3: memref<1x32xf32, #tpu.memory_space<vmem>>, %arg4: memref<4x128x32xbf16, #tpu.memory_space<vmem>>, %arg5: memref<1x32xf32, #tpu.memory_space<vmem>>, %arg6: memref<4x128x64xbf16, #tpu.memory_space<vmem>>, %arg7: memref<1x64xf32, #tpu.memory_space<vmem>>, %arg8: memref<4x256x64xbf16, #tpu.memory_space<vmem>>, %arg9: memref<1x64xf32, #tpu.memory_space<vmem>>, %arg10: memref<1x64x32xbf16, #tpu.memory_space<vmem>>, %arg11: memref<1x32xf32, #tpu.memory_space<vmem>>, %arg12: memref<32x16xbf16, #tpu.memory_space<vmem>>, %arg13: memref<1x16xf32, #tpu.memory_space<vmem>>, %arg14: memref<1x1x8xf32, #tpu.memory_space<vmem>>, %arg15: memref<1x1x24xf32, #tpu.memory_space<vmem>>, %arg16: memref<1x64x32xbf16, #tpu.memory_space<vmem>>, %arg17: memref<1x16x32xbf16, #tpu.memory_space<vmem>>, %arg18: memref<1x4x64xbf16, #tpu.memory_space<vmem>>, %arg19: memref<1x1x64xbf16, #tpu.memory_space<vmem>>, %arg20: memref<64x32xf32, #tpu.memory_space<vmem>>, %arg21: memref<1x5x5x128xf32, #tpu.memory_space<vmem>>, %arg22: memref<16x32xf32, #tpu.memory_space<vmem>>, %arg23: memref<1x3x3x128xf32, #tpu.memory_space<vmem>>, %arg24: memref<4x64xf32, #tpu.memory_space<vmem>>, %arg25: memref<1x2x2x256xf32, #tpu.memory_space<vmem>>) attributes {dimension_semantics = [#tpu.dimension_semantics<parallel>], iteration_bounds = array<i64: 2>, scalar_prefetch = 0 : i64, scratch_operands = 6 : i64, tpu.core_type = #tpu.core_type<tc>, window_params = [{transform_indices = @transform_0, window_bounds = array<i64: 1, 9, 9, 4>}, {pipeline_mode = #tpu.pipeline_mode<synchronous>, transform_indices = @transform_1, window_bounds = array<i64: 4, 4, 32>}, {pipeline_mode = #tpu.pipeline_mode<synchronous>, transform_indices = @transform_2, window_bounds = array<i64: 1, 32>}, {pipeline_mode = #tpu.pipeline_mode<synchronous>, transform_indices = @transform_3, window_bounds = array<i64: 4, 128, 32>}, {pipeline_mode = #tpu.pipeline_mode<synchronous>, transform_indices = @transform_4, window_bounds = array<i64: 1, 32>}, {pipeline_mode = #tpu.pipeline_mode<synchronous>, transform_indices = @transform_5, window_bounds = array<i64: 4, 128, 64>}, {pipeline_mode = #tpu.pipeline_mode<synchronous>, transform_indices = @transform_6, window_bounds = array<i64: 1, 64>}, {pipeline_mode = #tpu.pipeline_mode<synchronous>, transform_indices = @transform_7, window_bounds = array<i64: 4, 256, 64>}, {pipeline_mode = #tpu.pipeline_mode<synchronous>, transform_indices = @transform_8, window_bounds = array<i64: 1, 64>}, {pipeline_mode = #tpu.pipeline_mode<synchronous>, transform_indices = @transform_9, window_bounds = array<i64: 1, 64, 32>}, {pipeline_mode = #tpu.pipeline_mode<synchronous>, transform_indices = @transform_10, window_bounds = array<i64: 1, 32>}, {pipeline_mode = #tpu.pipeline_mode<synchronous>, transform_indices = @transform_11, window_bounds = array<i64: 32, 16>}, {pipeline_mode = #tpu.pipeline_mode<synchronous>, transform_indices = @transform_12, window_bounds = array<i64: 1, 16>}, {transform_indices = @transform_13, window_bounds = array<i64: 1, 1, 8>}, {transform_indices = @transform_14, window_bounds = array<i64: 1, 1, 24>}, {transform_indices = @transform_15, window_bounds = array<i64: 1, 64, 32>}, {transform_indices = @transform_16, window_bounds = array<i64: 1, 16, 32>}, {transform_indices = @transform_17, window_bounds = array<i64: 1, 4, 64>}, {transform_indices = @transform_18, window_bounds = array<i64: 1, 1, 64>}]} {
    %c0 = arith.constant 0 : index
    %c0_0 = arith.constant 0 : index
    %c0_1 = arith.constant 0 : index
    %c0_2 = arith.constant 0 : index
    %0 = vector.load %arg1[%c0, %c0_0, %c0_1, %c0_2] : memref<1x9x9x4xf32, #tpu.memory_space<vmem>>, vector<1x8x8x4xf32>
    %1 = vector.shape_cast %0 : vector<1x8x8x4xf32> to vector<64x4xf32>
    %2 = arith.truncf %1 : vector<64x4xf32> to vector<64x4xbf16>
    %c0_3 = arith.constant 0 : index
    %c0_4 = arith.constant 0 : index
    %c0_5 = arith.constant 0 : index
    %3 = vector.load %arg2[%c0_3, %c0_4, %c0_5] : memref<4x4x32xbf16, #tpu.memory_space<vmem>>, vector<1x4x32xbf16>
    %4 = vector.shape_cast %3 : vector<1x4x32xbf16> to vector<4x32xbf16>
    %cst = arith.constant dense<0.000000e+00> : vector<64x32xf32>
    %5 = tpu.matmul %2, %4, %cst {dimension_numbers = #tpu.dot_dimension_numbers<[1], [0], [0], [1], [0, 0, 1, 1], [], []>} : vector<64x4xbf16>, vector<4x32xbf16>, vector<64x32xf32> -> vector<64x32xf32>
    %c0_6 = arith.constant 0 : index
    %c0_7 = arith.constant 0 : index
    %c1 = arith.constant 1 : index
    %c0_8 = arith.constant 0 : index
    %6 = vector.load %arg1[%c0_6, %c0_7, %c1, %c0_8] : memref<1x9x9x4xf32, #tpu.memory_space<vmem>>, vector<1x8x8x4xf32>
    %7 = vector.shape_cast %6 : vector<1x8x8x4xf32> to vector<64x4xf32>
    %8 = arith.truncf %7 : vector<64x4xf32> to vector<64x4xbf16>
    %c1_9 = arith.constant 1 : index
    %c0_10 = arith.constant 0 : index
    %c0_11 = arith.constant 0 : index
    %9 = vector.load %arg2[%c1_9, %c0_10, %c0_11] : memref<4x4x32xbf16, #tpu.memory_space<vmem>>, vector<1x4x32xbf16>
    %10 = vector.shape_cast %9 : vector<1x4x32xbf16> to vector<4x32xbf16>
    %cst_12 = arith.constant dense<0.000000e+00> : vector<64x32xf32>
    %11 = tpu.matmul %8, %10, %cst_12 {dimension_numbers = #tpu.dot_dimension_numbers<[1], [0], [0], [1], [0, 0, 1, 1], [], []>} : vector<64x4xbf16>, vector<4x32xbf16>, vector<64x32xf32> -> vector<64x32xf32>
    %12 = arith.addf %5, %11 : vector<64x32xf32>
    %c0_13 = arith.constant 0 : index
    %c1_14 = arith.constant 1 : index
    %c0_15 = arith.constant 0 : index
    %c0_16 = arith.constant 0 : index
    %13 = vector.load %arg1[%c0_13, %c1_14, %c0_15, %c0_16] : memref<1x9x9x4xf32, #tpu.memory_space<vmem>>, vector<1x8x8x4xf32>
    %14 = vector.shape_cast %13 : vector<1x8x8x4xf32> to vector<64x4xf32>
    %15 = arith.truncf %14 : vector<64x4xf32> to vector<64x4xbf16>
    %c2 = arith.constant 2 : index
    %c0_17 = arith.constant 0 : index
    %c0_18 = arith.constant 0 : index
    %16 = vector.load %arg2[%c2, %c0_17, %c0_18] : memref<4x4x32xbf16, #tpu.memory_space<vmem>>, vector<1x4x32xbf16>
    %17 = vector.shape_cast %16 : vector<1x4x32xbf16> to vector<4x32xbf16>
    %cst_19 = arith.constant dense<0.000000e+00> : vector<64x32xf32>
    %18 = tpu.matmul %15, %17, %cst_19 {dimension_numbers = #tpu.dot_dimension_numbers<[1], [0], [0], [1], [0, 0, 1, 1], [], []>} : vector<64x4xbf16>, vector<4x32xbf16>, vector<64x32xf32> -> vector<64x32xf32>
    %19 = arith.addf %12, %18 : vector<64x32xf32>
    %c0_20 = arith.constant 0 : index
    %c1_21 = arith.constant 1 : index
    %c1_22 = arith.constant 1 : index
    %c0_23 = arith.constant 0 : index
    %20 = vector.load %arg1[%c0_20, %c1_21, %c1_22, %c0_23] : memref<1x9x9x4xf32, #tpu.memory_space<vmem>>, vector<1x8x8x4xf32>
    %21 = vector.shape_cast %20 : vector<1x8x8x4xf32> to vector<64x4xf32>
    %22 = arith.truncf %21 : vector<64x4xf32> to vector<64x4xbf16>
    %c3 = arith.constant 3 : index
    %c0_24 = arith.constant 0 : index
    %c0_25 = arith.constant 0 : index
    %23 = vector.load %arg2[%c3, %c0_24, %c0_25] : memref<4x4x32xbf16, #tpu.memory_space<vmem>>, vector<1x4x32xbf16>
    %24 = vector.shape_cast %23 : vector<1x4x32xbf16> to vector<4x32xbf16>
    %cst_26 = arith.constant dense<0.000000e+00> : vector<64x32xf32>
    %25 = tpu.matmul %22, %24, %cst_26 {dimension_numbers = #tpu.dot_dimension_numbers<[1], [0], [0], [1], [0, 0, 1, 1], [], []>} : vector<64x4xbf16>, vector<4x32xbf16>, vector<64x32xf32> -> vector<64x32xf32>
    %26 = arith.addf %19, %25 : vector<64x32xf32>
    %c0_27 = arith.constant 0 : index
    %c0_28 = arith.constant 0 : index
    %27 = vector.load %arg3[%c0_27, %c0_28] : memref<1x32xf32, #tpu.memory_space<vmem>>, vector<1x32xf32>
    %28 = vector.broadcast %27 : vector<1x32xf32> to vector<64x32xf32>
    %29 = arith.addf %26, %28 : vector<64x32xf32>
    %cst_29 = arith.constant 0.000000e+00 : f32
    %30 = vector.broadcast %cst_29 : f32 to vector<64x32xf32>
    %31 = arith.maximumf %29, %30 : vector<64x32xf32>
    %32 = vector.shape_cast %31 : vector<64x32xf32> to vector<1x64x32xf32>
    %33 = arith.truncf %32 : vector<1x64x32xf32> to vector<1x64x32xbf16>
    %c0_30 = arith.constant 0 : index
    %c0_31 = arith.constant 0 : index
    %c0_32 = arith.constant 0 : index
    %34 = vector.load %arg16[%c0_30, %c0_31, %c0_32] : memref<1x64x32xbf16, #tpu.memory_space<vmem>>, vector<1x64x32xbf16>
    tpu.vector_store %arg16[%c0_30, %c0_31, %c0_32], %33 {strides = array<i32>} : memref<1x64x32xbf16, #tpu.memory_space<vmem>>, vector<1x64x32xbf16>,
    %c0_33 = arith.constant 0 : index
    %c0_34 = arith.constant 0 : index
    %35 = vector.load %arg20[%c0_33, %c0_34] : memref<64x32xf32, #tpu.memory_space<vmem>>, vector<64x32xf32>
    tpu.vector_store %arg20[%c0_33, %c0_34], %31 {strides = array<i32>} : memref<64x32xf32, #tpu.memory_space<vmem>>, vector<64x32xf32>,
    %cst_35 = arith.constant 0.000000e+00 : f32
    %36 = vector.broadcast %cst_35 : f32 to vector<1x5x5x128xf32>
    %c0_36 = arith.constant 0 : index
    %c0_37 = arith.constant 0 : index
    %c0_38 = arith.constant 0 : index
    %c0_39 = arith.constant 0 : index
    %37 = vector.load %arg21[%c0_36, %c0_37, %c0_38, %c0_39] : memref<1x5x5x128xf32, #tpu.memory_space<vmem>>, vector<1x5x5x128xf32>
    tpu.vector_store %arg21[%c0_36, %c0_37, %c0_38, %c0_39], %36 {strides = array<i32>} : memref<1x5x5x128xf32, #tpu.memory_space<vmem>>, vector<1x5x5x128xf32>,
    %c0_40 = arith.constant 0 : index
    %c0_41 = arith.constant 0 : index
    %38 = tpu.strided_load %arg20[%c0_40, %c0_41] {strides = array<i32: 2, 1>} : memref<64x32xf32, #tpu.memory_space<vmem>>, vector<32x32xf32>
    %39 = vector.shape_cast %38 : vector<32x32xf32> to vector<4x2x4x32xf32>
    %40 = vector.extract_strided_slice %39 {offsets = [0, 0, 0, 0], sizes = [4, 1, 4, 32], strides = [1, 1, 1, 1]} : vector<4x2x4x32xf32> to vector<4x1x4x32xf32>
    %41 = vector.shape_cast %40 : vector<4x1x4x32xf32> to vector<4x4x32xf32>
    %42 = vector.shape_cast %41 : vector<4x4x32xf32> to vector<1x4x4x32xf32>
    %c0_42 = arith.constant 0 : index
    %c0_43 = arith.constant 0 : index
    %c0_44 = arith.constant 0 : index
    %c96 = arith.constant 96 : index
    %43 = vector.load %arg21[%c0_42, %c0_43, %c0_44, %c96] : memref<1x5x5x128xf32, #tpu.memory_space<vmem>>, vector<1x4x4x32xf32>
    tpu.vector_store %arg21[%c0_42, %c0_43, %c0_44, %c96], %42 {strides = array<i32>} : memref<1x5x5x128xf32, #tpu.memory_space<vmem>>, vector<1x4x4x32xf32>,
    %c1_45 = arith.constant 1 : index
    %c0_46 = arith.constant 0 : index
    %44 = tpu.strided_load %arg20[%c1_45, %c0_46] {strides = array<i32: 2, 1>} : memref<64x32xf32, #tpu.memory_space<vmem>>, vector<32x32xf32>
    %45 = vector.shape_cast %44 : vector<32x32xf32> to vector<4x2x4x32xf32>
    %46 = vector.extract_strided_slice %45 {offsets = [0, 0, 0, 0], sizes = [4, 1, 4, 32], strides = [1, 1, 1, 1]} : vector<4x2x4x32xf32> to vector<4x1x4x32xf32>
    %47 = vector.shape_cast %46 : vector<4x1x4x32xf32> to vector<4x4x32xf32>
    %48 = vector.shape_cast %47 : vector<4x4x32xf32> to vector<1x4x4x32xf32>
    %c0_47 = arith.constant 0 : index
    %c0_48 = arith.constant 0 : index
    %c1_49 = arith.constant 1 : index
    %c64 = arith.constant 64 : index
    %49 = vector.load %arg21[%c0_47, %c0_48, %c1_49, %c64] : memref<1x5x5x128xf32, #tpu.memory_space<vmem>>, vector<1x4x4x32xf32>
    tpu.vector_store %arg21[%c0_47, %c0_48, %c1_49, %c64], %48 {strides = array<i32>} : memref<1x5x5x128xf32, #tpu.memory_space<vmem>>, vector<1x4x4x32xf32>,
    %c0_50 = arith.constant 0 : index
    %c0_51 = arith.constant 0 : index
    %50 = tpu.strided_load %arg20[%c0_50, %c0_51] {strides = array<i32: 2, 1>} : memref<64x32xf32, #tpu.memory_space<vmem>>, vector<32x32xf32>
    %51 = vector.shape_cast %50 : vector<32x32xf32> to vector<4x2x4x32xf32>
    %52 = vector.extract_strided_slice %51 {offsets = [0, 1, 0, 0], sizes = [4, 1, 4, 32], strides = [1, 1, 1, 1]} : vector<4x2x4x32xf32> to vector<4x1x4x32xf32>
    %53 = vector.shape_cast %52 : vector<4x1x4x32xf32> to vector<4x4x32xf32>
    %54 = vector.shape_cast %53 : vector<4x4x32xf32> to vector<1x4x4x32xf32>
    %c0_52 = arith.constant 0 : index
    %c1_53 = arith.constant 1 : index
    %c0_54 = arith.constant 0 : index
    %c32 = arith.constant 32 : index
    %55 = vector.load %arg21[%c0_52, %c1_53, %c0_54, %c32] : memref<1x5x5x128xf32, #tpu.memory_space<vmem>>, vector<1x4x4x32xf32>
    tpu.vector_store %arg21[%c0_52, %c1_53, %c0_54, %c32], %54 {strides = array<i32>} : memref<1x5x5x128xf32, #tpu.memory_space<vmem>>, vector<1x4x4x32xf32>,
    %c1_55 = arith.constant 1 : index
    %c0_56 = arith.constant 0 : index
    %56 = tpu.strided_load %arg20[%c1_55, %c0_56] {strides = array<i32: 2, 1>} : memref<64x32xf32, #tpu.memory_space<vmem>>, vector<32x32xf32>
    %57 = vector.shape_cast %56 : vector<32x32xf32> to vector<4x2x4x32xf32>
    %58 = vector.extract_strided_slice %57 {offsets = [0, 1, 0, 0], sizes = [4, 1, 4, 32], strides = [1, 1, 1, 1]} : vector<4x2x4x32xf32> to vector<4x1x4x32xf32>
    %59 = vector.shape_cast %58 : vector<4x1x4x32xf32> to vector<4x4x32xf32>
    %60 = vector.shape_cast %59 : vector<4x4x32xf32> to vector<1x4x4x32xf32>
    %c0_57 = arith.constant 0 : index
    %c1_58 = arith.constant 1 : index
    %c1_59 = arith.constant 1 : index
    %c0_60 = arith.constant 0 : index
    %61 = vector.load %arg21[%c0_57, %c1_58, %c1_59, %c0_60] : memref<1x5x5x128xf32, #tpu.memory_space<vmem>>, vector<1x4x4x32xf32>
    tpu.vector_store %arg21[%c0_57, %c1_58, %c1_59, %c0_60], %60 {strides = array<i32>} : memref<1x5x5x128xf32, #tpu.memory_space<vmem>>, vector<1x4x4x32xf32>,
    %c0_61 = arith.constant 0 : index
    %c0_62 = arith.constant 0 : index
    %c0_63 = arith.constant 0 : index
    %c0_64 = arith.constant 0 : index
    %62 = vector.load %arg21[%c0_61, %c0_62, %c0_63, %c0_64] : memref<1x5x5x128xf32, #tpu.memory_space<vmem>>, vector<1x4x4x128xf32>
    %63 = vector.shape_cast %62 : vector<1x4x4x128xf32> to vector<16x128xf32>
    %64 = arith.truncf %63 : vector<16x128xf32> to vector<16x128xbf16>
    %c0_65 = arith.constant 0 : index
    %c0_66 = arith.constant 0 : index
    %c0_67 = arith.constant 0 : index
    %65 = vector.load %arg4[%c0_65, %c0_66, %c0_67] : memref<4x128x32xbf16, #tpu.memory_space<vmem>>, vector<1x128x32xbf16>
    %66 = vector.shape_cast %65 : vector<1x128x32xbf16> to vector<128x32xbf16>
    %cst_68 = arith.constant dense<0.000000e+00> : vector<16x32xf32>
    %67 = tpu.matmul %64, %66, %cst_68 {dimension_numbers = #tpu.dot_dimension_numbers<[1], [0], [0], [1], [0, 0, 1, 1], [], []>} : vector<16x128xbf16>, vector<128x32xbf16>, vector<16x32xf32> -> vector<16x32xf32>
    %c0_69 = arith.constant 0 : index
    %c0_70 = arith.constant 0 : index
    %c1_71 = arith.constant 1 : index
    %c0_72 = arith.constant 0 : index
    %68 = vector.load %arg21[%c0_69, %c0_70, %c1_71, %c0_72] : memref<1x5x5x128xf32, #tpu.memory_space<vmem>>, vector<1x4x4x128xf32>
    %69 = vector.shape_cast %68 : vector<1x4x4x128xf32> to vector<16x128xf32>
    %70 = arith.truncf %69 : vector<16x128xf32> to vector<16x128xbf16>
    %c1_73 = arith.constant 1 : index
    %c0_74 = arith.constant 0 : index
    %c0_75 = arith.constant 0 : index
    %71 = vector.load %arg4[%c1_73, %c0_74, %c0_75] : memref<4x128x32xbf16, #tpu.memory_space<vmem>>, vector<1x128x32xbf16>
    %72 = vector.shape_cast %71 : vector<1x128x32xbf16> to vector<128x32xbf16>
    %cst_76 = arith.constant dense<0.000000e+00> : vector<16x32xf32>
    %73 = tpu.matmul %70, %72, %cst_76 {dimension_numbers = #tpu.dot_dimension_numbers<[1], [0], [0], [1], [0, 0, 1, 1], [], []>} : vector<16x128xbf16>, vector<128x32xbf16>, vector<16x32xf32> -> vector<16x32xf32>
    %74 = arith.addf %67, %73 : vector<16x32xf32>
    %c0_77 = arith.constant 0 : index
    %c1_78 = arith.constant 1 : index
    %c0_79 = arith.constant 0 : index
    %c0_80 = arith.constant 0 : index
    %75 = vector.load %arg21[%c0_77, %c1_78, %c0_79, %c0_80] : memref<1x5x5x128xf32, #tpu.memory_space<vmem>>, vector<1x4x4x128xf32>
    %76 = vector.shape_cast %75 : vector<1x4x4x128xf32> to vector<16x128xf32>
    %77 = arith.truncf %76 : vector<16x128xf32> to vector<16x128xbf16>
    %c2_81 = arith.constant 2 : index
    %c0_82 = arith.constant 0 : index
    %c0_83 = arith.constant 0 : index
    %78 = vector.load %arg4[%c2_81, %c0_82, %c0_83] : memref<4x128x32xbf16, #tpu.memory_space<vmem>>, vector<1x128x32xbf16>
    %79 = vector.shape_cast %78 : vector<1x128x32xbf16> to vector<128x32xbf16>
    %cst_84 = arith.constant dense<0.000000e+00> : vector<16x32xf32>
    %80 = tpu.matmul %77, %79, %cst_84 {dimension_numbers = #tpu.dot_dimension_numbers<[1], [0], [0], [1], [0, 0, 1, 1], [], []>} : vector<16x128xbf16>, vector<128x32xbf16>, vector<16x32xf32> -> vector<16x32xf32>
    %81 = arith.addf %74, %80 : vector<16x32xf32>
    %c0_85 = arith.constant 0 : index
    %c1_86 = arith.constant 1 : index
    %c1_87 = arith.constant 1 : index
    %c0_88 = arith.constant 0 : index
    %82 = vector.load %arg21[%c0_85, %c1_86, %c1_87, %c0_88] : memref<1x5x5x128xf32, #tpu.memory_space<vmem>>, vector<1x4x4x128xf32>
    %83 = vector.shape_cast %82 : vector<1x4x4x128xf32> to vector<16x128xf32>
    %84 = arith.truncf %83 : vector<16x128xf32> to vector<16x128xbf16>
    %c3_89 = arith.constant 3 : index
    %c0_90 = arith.constant 0 : index
    %c0_91 = arith.constant 0 : index
    %85 = vector.load %arg4[%c3_89, %c0_90, %c0_91] : memref<4x128x32xbf16, #tpu.memory_space<vmem>>, vector<1x128x32xbf16>
    %86 = vector.shape_cast %85 : vector<1x128x32xbf16> to vector<128x32xbf16>
    %cst_92 = arith.constant dense<0.000000e+00> : vector<16x32xf32>
    %87 = tpu.matmul %84, %86, %cst_92 {dimension_numbers = #tpu.dot_dimension_numbers<[1], [0], [0], [1], [0, 0, 1, 1], [], []>} : vector<16x128xbf16>, vector<128x32xbf16>, vector<16x32xf32> -> vector<16x32xf32>
    %88 = arith.addf %81, %87 : vector<16x32xf32>
    %c0_93 = arith.constant 0 : index
    %c0_94 = arith.constant 0 : index
    %89 = vector.load %arg5[%c0_93, %c0_94] : memref<1x32xf32, #tpu.memory_space<vmem>>, vector<1x32xf32>
    %90 = vector.broadcast %89 : vector<1x32xf32> to vector<16x32xf32>
    %91 = arith.addf %88, %90 : vector<16x32xf32>
    %cst_95 = arith.constant 0.000000e+00 : f32
    %92 = vector.broadcast %cst_95 : f32 to vector<16x32xf32>
    %93 = arith.maximumf %91, %92 : vector<16x32xf32>
    %94 = vector.shape_cast %93 : vector<16x32xf32> to vector<1x16x32xf32>
    %95 = arith.truncf %94 : vector<1x16x32xf32> to vector<1x16x32xbf16>
    %c0_96 = arith.constant 0 : index
    %c0_97 = arith.constant 0 : index
    %c0_98 = arith.constant 0 : index
    %96 = vector.load %arg17[%c0_96, %c0_97, %c0_98] : memref<1x16x32xbf16, #tpu.memory_space<vmem>>, vector<1x16x32xbf16>
    tpu.vector_store %arg17[%c0_96, %c0_97, %c0_98], %95 {strides = array<i32>} : memref<1x16x32xbf16, #tpu.memory_space<vmem>>, vector<1x16x32xbf16>,
    %c0_99 = arith.constant 0 : index
    %c0_100 = arith.constant 0 : index
    %97 = vector.load %arg22[%c0_99, %c0_100] : memref<16x32xf32, #tpu.memory_space<vmem>>, vector<16x32xf32>
    tpu.vector_store %arg22[%c0_99, %c0_100], %93 {strides = array<i32>} : memref<16x32xf32, #tpu.memory_space<vmem>>, vector<16x32xf32>,
    %cst_101 = arith.constant 0.000000e+00 : f32
    %98 = vector.broadcast %cst_101 : f32 to vector<1x3x3x128xf32>
    %c0_102 = arith.constant 0 : index
    %c0_103 = arith.constant 0 : index
    %c0_104 = arith.constant 0 : index
    %c0_105 = arith.constant 0 : index
    %99 = vector.load %arg23[%c0_102, %c0_103, %c0_104, %c0_105] : memref<1x3x3x128xf32, #tpu.memory_space<vmem>>, vector<1x3x3x128xf32>
    tpu.vector_store %arg23[%c0_102, %c0_103, %c0_104, %c0_105], %98 {strides = array<i32>} : memref<1x3x3x128xf32, #tpu.memory_space<vmem>>, vector<1x3x3x128xf32>,
    %c0_106 = arith.constant 0 : index
    %c0_107 = arith.constant 0 : index
    %100 = tpu.strided_load %arg22[%c0_106, %c0_107] {strides = array<i32: 2, 1>} : memref<16x32xf32, #tpu.memory_space<vmem>>, vector<8x32xf32>
    %101 = vector.shape_cast %100 : vector<8x32xf32> to vector<2x2x2x32xf32>
    %102 = vector.extract_strided_slice %101 {offsets = [0, 0, 0, 0], sizes = [2, 1, 2, 32], strides = [1, 1, 1, 1]} : vector<2x2x2x32xf32> to vector<2x1x2x32xf32>
    %103 = vector.shape_cast %102 : vector<2x1x2x32xf32> to vector<2x2x32xf32>
    %104 = vector.shape_cast %103 : vector<2x2x32xf32> to vector<1x2x2x32xf32>
    %c0_108 = arith.constant 0 : index
    %c0_109 = arith.constant 0 : index
    %c0_110 = arith.constant 0 : index
    %c96_111 = arith.constant 96 : index
    %105 = vector.load %arg23[%c0_108, %c0_109, %c0_110, %c96_111] : memref<1x3x3x128xf32, #tpu.memory_space<vmem>>, vector<1x2x2x32xf32>
    tpu.vector_store %arg23[%c0_108, %c0_109, %c0_110, %c96_111], %104 {strides = array<i32>} : memref<1x3x3x128xf32, #tpu.memory_space<vmem>>, vector<1x2x2x32xf32>,
    %c1_112 = arith.constant 1 : index
    %c0_113 = arith.constant 0 : index
    %106 = tpu.strided_load %arg22[%c1_112, %c0_113] {strides = array<i32: 2, 1>} : memref<16x32xf32, #tpu.memory_space<vmem>>, vector<8x32xf32>
    %107 = vector.shape_cast %106 : vector<8x32xf32> to vector<2x2x2x32xf32>
    %108 = vector.extract_strided_slice %107 {offsets = [0, 0, 0, 0], sizes = [2, 1, 2, 32], strides = [1, 1, 1, 1]} : vector<2x2x2x32xf32> to vector<2x1x2x32xf32>
    %109 = vector.shape_cast %108 : vector<2x1x2x32xf32> to vector<2x2x32xf32>
    %110 = vector.shape_cast %109 : vector<2x2x32xf32> to vector<1x2x2x32xf32>
    %c0_114 = arith.constant 0 : index
    %c0_115 = arith.constant 0 : index
    %c1_116 = arith.constant 1 : index
    %c64_117 = arith.constant 64 : index
    %111 = vector.load %arg23[%c0_114, %c0_115, %c1_116, %c64_117] : memref<1x3x3x128xf32, #tpu.memory_space<vmem>>, vector<1x2x2x32xf32>
    tpu.vector_store %arg23[%c0_114, %c0_115, %c1_116, %c64_117], %110 {strides = array<i32>} : memref<1x3x3x128xf32, #tpu.memory_space<vmem>>, vector<1x2x2x32xf32>,
    %c0_118 = arith.constant 0 : index
    %c0_119 = arith.constant 0 : index
    %112 = tpu.strided_load %arg22[%c0_118, %c0_119] {strides = array<i32: 2, 1>} : memref<16x32xf32, #tpu.memory_space<vmem>>, vector<8x32xf32>
    %113 = vector.shape_cast %112 : vector<8x32xf32> to vector<2x2x2x32xf32>
    %114 = vector.extract_strided_slice %113 {offsets = [0, 1, 0, 0], sizes = [2, 1, 2, 32], strides = [1, 1, 1, 1]} : vector<2x2x2x32xf32> to vector<2x1x2x32xf32>
    %115 = vector.shape_cast %114 : vector<2x1x2x32xf32> to vector<2x2x32xf32>
    %116 = vector.shape_cast %115 : vector<2x2x32xf32> to vector<1x2x2x32xf32>
    %c0_120 = arith.constant 0 : index
    %c1_121 = arith.constant 1 : index
    %c0_122 = arith.constant 0 : index
    %c32_123 = arith.constant 32 : index
    %117 = vector.load %arg23[%c0_120, %c1_121, %c0_122, %c32_123] : memref<1x3x3x128xf32, #tpu.memory_space<vmem>>, vector<1x2x2x32xf32>
    tpu.vector_store %arg23[%c0_120, %c1_121, %c0_122, %c32_123], %116 {strides = array<i32>} : memref<1x3x3x128xf32, #tpu.memory_space<vmem>>, vector<1x2x2x32xf32>,
    %c1_124 = arith.constant 1 : index
    %c0_125 = arith.constant 0 : index
    %118 = tpu.strided_load %arg22[%c1_124, %c0_125] {strides = array<i32: 2, 1>} : memref<16x32xf32, #tpu.memory_space<vmem>>, vector<8x32xf32>
    %119 = vector.shape_cast %118 : vector<8x32xf32> to vector<2x2x2x32xf32>
    %120 = vector.extract_strided_slice %119 {offsets = [0, 1, 0, 0], sizes = [2, 1, 2, 32], strides = [1, 1, 1, 1]} : vector<2x2x2x32xf32> to vector<2x1x2x32xf32>
    %121 = vector.shape_cast %120 : vector<2x1x2x32xf32> to vector<2x2x32xf32>
    %122 = vector.shape_cast %121 : vector<2x2x32xf32> to vector<1x2x2x32xf32>
    %c0_126 = arith.constant 0 : index
    %c1_127 = arith.constant 1 : index
    %c1_128 = arith.constant 1 : index
    %c0_129 = arith.constant 0 : index
    %123 = vector.load %arg23[%c0_126, %c1_127, %c1_128, %c0_129] : memref<1x3x3x128xf32, #tpu.memory_space<vmem>>, vector<1x2x2x32xf32>
    tpu.vector_store %arg23[%c0_126, %c1_127, %c1_128, %c0_129], %122 {strides = array<i32>} : memref<1x3x3x128xf32, #tpu.memory_space<vmem>>, vector<1x2x2x32xf32>,
    %c0_130 = arith.constant 0 : index
    %c0_131 = arith.constant 0 : index
    %c0_132 = arith.constant 0 : index
    %c0_133 = arith.constant 0 : index
    %124 = vector.load %arg23[%c0_130, %c0_131, %c0_132, %c0_133] : memref<1x3x3x128xf32, #tpu.memory_space<vmem>>, vector<1x2x2x128xf32>
    %125 = vector.shape_cast %124 : vector<1x2x2x128xf32> to vector<4x128xf32>
    %126 = arith.truncf %125 : vector<4x128xf32> to vector<4x128xbf16>
    %c0_134 = arith.constant 0 : index
    %c0_135 = arith.constant 0 : index
    %c0_136 = arith.constant 0 : index
    %127 = vector.load %arg6[%c0_134, %c0_135, %c0_136] : memref<4x128x64xbf16, #tpu.memory_space<vmem>>, vector<1x128x64xbf16>
    %128 = vector.shape_cast %127 : vector<1x128x64xbf16> to vector<128x64xbf16>
    %cst_137 = arith.constant dense<0.000000e+00> : vector<4x64xf32>
    %129 = tpu.matmul %126, %128, %cst_137 {dimension_numbers = #tpu.dot_dimension_numbers<[1], [0], [0], [1], [0, 0, 1, 1], [], []>} : vector<4x128xbf16>, vector<128x64xbf16>, vector<4x64xf32> -> vector<4x64xf32>
    %c0_138 = arith.constant 0 : index
    %c0_139 = arith.constant 0 : index
    %c1_140 = arith.constant 1 : index
    %c0_141 = arith.constant 0 : index
    %130 = vector.load %arg23[%c0_138, %c0_139, %c1_140, %c0_141] : memref<1x3x3x128xf32, #tpu.memory_space<vmem>>, vector<1x2x2x128xf32>
    %131 = vector.shape_cast %130 : vector<1x2x2x128xf32> to vector<4x128xf32>
    %132 = arith.truncf %131 : vector<4x128xf32> to vector<4x128xbf16>
    %c1_142 = arith.constant 1 : index
    %c0_143 = arith.constant 0 : index
    %c0_144 = arith.constant 0 : index
    %133 = vector.load %arg6[%c1_142, %c0_143, %c0_144] : memref<4x128x64xbf16, #tpu.memory_space<vmem>>, vector<1x128x64xbf16>
    %134 = vector.shape_cast %133 : vector<1x128x64xbf16> to vector<128x64xbf16>
    %cst_145 = arith.constant dense<0.000000e+00> : vector<4x64xf32>
    %135 = tpu.matmul %132, %134, %cst_145 {dimension_numbers = #tpu.dot_dimension_numbers<[1], [0], [0], [1], [0, 0, 1, 1], [], []>} : vector<4x128xbf16>, vector<128x64xbf16>, vector<4x64xf32> -> vector<4x64xf32>
    %136 = arith.addf %129, %135 : vector<4x64xf32>
    %c0_146 = arith.constant 0 : index
    %c1_147 = arith.constant 1 : index
    %c0_148 = arith.constant 0 : index
    %c0_149 = arith.constant 0 : index
    %137 = vector.load %arg23[%c0_146, %c1_147, %c0_148, %c0_149] : memref<1x3x3x128xf32, #tpu.memory_space<vmem>>, vector<1x2x2x128xf32>
    %138 = vector.shape_cast %137 : vector<1x2x2x128xf32> to vector<4x128xf32>
    %139 = arith.truncf %138 : vector<4x128xf32> to vector<4x128xbf16>
    %c2_150 = arith.constant 2 : index
    %c0_151 = arith.constant 0 : index
    %c0_152 = arith.constant 0 : index
    %140 = vector.load %arg6[%c2_150, %c0_151, %c0_152] : memref<4x128x64xbf16, #tpu.memory_space<vmem>>, vector<1x128x64xbf16>
    %141 = vector.shape_cast %140 : vector<1x128x64xbf16> to vector<128x64xbf16>
    %cst_153 = arith.constant dense<0.000000e+00> : vector<4x64xf32>
    %142 = tpu.matmul %139, %141, %cst_153 {dimension_numbers = #tpu.dot_dimension_numbers<[1], [0], [0], [1], [0, 0, 1, 1], [], []>} : vector<4x128xbf16>, vector<128x64xbf16>, vector<4x64xf32> -> vector<4x64xf32>
    %143 = arith.addf %136, %142 : vector<4x64xf32>
    %c0_154 = arith.constant 0 : index
    %c1_155 = arith.constant 1 : index
    %c1_156 = arith.constant 1 : index
    %c0_157 = arith.constant 0 : index
    %144 = vector.load %arg23[%c0_154, %c1_155, %c1_156, %c0_157] : memref<1x3x3x128xf32, #tpu.memory_space<vmem>>, vector<1x2x2x128xf32>
    %145 = vector.shape_cast %144 : vector<1x2x2x128xf32> to vector<4x128xf32>
    %146 = arith.truncf %145 : vector<4x128xf32> to vector<4x128xbf16>
    %c3_158 = arith.constant 3 : index
    %c0_159 = arith.constant 0 : index
    %c0_160 = arith.constant 0 : index
    %147 = vector.load %arg6[%c3_158, %c0_159, %c0_160] : memref<4x128x64xbf16, #tpu.memory_space<vmem>>, vector<1x128x64xbf16>
    %148 = vector.shape_cast %147 : vector<1x128x64xbf16> to vector<128x64xbf16>
    %cst_161 = arith.constant dense<0.000000e+00> : vector<4x64xf32>
    %149 = tpu.matmul %146, %148, %cst_161 {dimension_numbers = #tpu.dot_dimension_numbers<[1], [0], [0], [1], [0, 0, 1, 1], [], []>} : vector<4x128xbf16>, vector<128x64xbf16>, vector<4x64xf32> -> vector<4x64xf32>
    %150 = arith.addf %143, %149 : vector<4x64xf32>
    %c0_162 = arith.constant 0 : index
    %c0_163 = arith.constant 0 : index
    %151 = vector.load %arg7[%c0_162, %c0_163] : memref<1x64xf32, #tpu.memory_space<vmem>>, vector<1x64xf32>
    %152 = vector.broadcast %151 : vector<1x64xf32> to vector<4x64xf32>
    %153 = arith.addf %150, %152 : vector<4x64xf32>
    %cst_164 = arith.constant 0.000000e+00 : f32
    %154 = vector.broadcast %cst_164 : f32 to vector<4x64xf32>
    %155 = arith.maximumf %153, %154 : vector<4x64xf32>
    %156 = vector.shape_cast %155 : vector<4x64xf32> to vector<1x4x64xf32>
    %157 = arith.truncf %156 : vector<1x4x64xf32> to vector<1x4x64xbf16>
    %c0_165 = arith.constant 0 : index
    %c0_166 = arith.constant 0 : index
    %c0_167 = arith.constant 0 : index
    %158 = vector.load %arg18[%c0_165, %c0_166, %c0_167] : memref<1x4x64xbf16, #tpu.memory_space<vmem>>, vector<1x4x64xbf16>
    tpu.vector_store %arg18[%c0_165, %c0_166, %c0_167], %157 {strides = array<i32>} : memref<1x4x64xbf16, #tpu.memory_space<vmem>>, vector<1x4x64xbf16>,
    %c0_168 = arith.constant 0 : index
    %c0_169 = arith.constant 0 : index
    %159 = vector.load %arg24[%c0_168, %c0_169] : memref<4x64xf32, #tpu.memory_space<vmem>>, vector<4x64xf32>
    tpu.vector_store %arg24[%c0_168, %c0_169], %155 {strides = array<i32>} : memref<4x64xf32, #tpu.memory_space<vmem>>, vector<4x64xf32>,
    %cst_170 = arith.constant 0.000000e+00 : f32
    %160 = vector.broadcast %cst_170 : f32 to vector<1x2x2x256xf32>
    %c0_171 = arith.constant 0 : index
    %c0_172 = arith.constant 0 : index
    %c0_173 = arith.constant 0 : index
    %c0_174 = arith.constant 0 : index
    %161 = vector.load %arg25[%c0_171, %c0_172, %c0_173, %c0_174] : memref<1x2x2x256xf32, #tpu.memory_space<vmem>>, vector<1x2x2x256xf32>
    tpu.vector_store %arg25[%c0_171, %c0_172, %c0_173, %c0_174], %160 {strides = array<i32>} : memref<1x2x2x256xf32, #tpu.memory_space<vmem>>, vector<1x2x2x256xf32>,
    %c0_175 = arith.constant 0 : index
    %c0_176 = arith.constant 0 : index
    %162 = tpu.strided_load %arg24[%c0_175, %c0_176] {strides = array<i32: 2, 1>} : memref<4x64xf32, #tpu.memory_space<vmem>>, vector<2x64xf32>
    %163 = vector.shape_cast %162 : vector<2x64xf32> to vector<1x2x1x64xf32>
    %164 = vector.extract_strided_slice %163 {offsets = [0, 0, 0, 0], sizes = [1, 1, 1, 64], strides = [1, 1, 1, 1]} : vector<1x2x1x64xf32> to vector<1x1x1x64xf32>
    %165 = vector.shape_cast %164 : vector<1x1x1x64xf32> to vector<1x1x64xf32>
    %166 = vector.shape_cast %165 : vector<1x1x64xf32> to vector<1x1x1x64xf32>
    %c0_177 = arith.constant 0 : index
    %c0_178 = arith.constant 0 : index
    %c0_179 = arith.constant 0 : index
    %c192 = arith.constant 192 : index
    %167 = vector.load %arg25[%c0_177, %c0_178, %c0_179, %c192] : memref<1x2x2x256xf32, #tpu.memory_space<vmem>>, vector<1x1x1x64xf32>
    tpu.vector_store %arg25[%c0_177, %c0_178, %c0_179, %c192], %166 {strides = array<i32>} : memref<1x2x2x256xf32, #tpu.memory_space<vmem>>, vector<1x1x1x64xf32>,
    %c1_180 = arith.constant 1 : index
    %c0_181 = arith.constant 0 : index
    %168 = tpu.strided_load %arg24[%c1_180, %c0_181] {strides = array<i32: 2, 1>} : memref<4x64xf32, #tpu.memory_space<vmem>>, vector<2x64xf32>
    %169 = vector.shape_cast %168 : vector<2x64xf32> to vector<1x2x1x64xf32>
    %170 = vector.extract_strided_slice %169 {offsets = [0, 0, 0, 0], sizes = [1, 1, 1, 64], strides = [1, 1, 1, 1]} : vector<1x2x1x64xf32> to vector<1x1x1x64xf32>
    %171 = vector.shape_cast %170 : vector<1x1x1x64xf32> to vector<1x1x64xf32>
    %172 = vector.shape_cast %171 : vector<1x1x64xf32> to vector<1x1x1x64xf32>
    %c0_182 = arith.constant 0 : index
    %c0_183 = arith.constant 0 : index
    %c1_184 = arith.constant 1 : index
    %c128 = arith.constant 128 : index
    %173 = vector.load %arg25[%c0_182, %c0_183, %c1_184, %c128] : memref<1x2x2x256xf32, #tpu.memory_space<vmem>>, vector<1x1x1x64xf32>
    tpu.vector_store %arg25[%c0_182, %c0_183, %c1_184, %c128], %172 {strides = array<i32>} : memref<1x2x2x256xf32, #tpu.memory_space<vmem>>, vector<1x1x1x64xf32>,
    %c0_185 = arith.constant 0 : index
    %c0_186 = arith.constant 0 : index
    %174 = tpu.strided_load %arg24[%c0_185, %c0_186] {strides = array<i32: 2, 1>} : memref<4x64xf32, #tpu.memory_space<vmem>>, vector<2x64xf32>
    %175 = vector.shape_cast %174 : vector<2x64xf32> to vector<1x2x1x64xf32>
    %176 = vector.extract_strided_slice %175 {offsets = [0, 1, 0, 0], sizes = [1, 1, 1, 64], strides = [1, 1, 1, 1]} : vector<1x2x1x64xf32> to vector<1x1x1x64xf32>
    %177 = vector.shape_cast %176 : vector<1x1x1x64xf32> to vector<1x1x64xf32>
    %178 = vector.shape_cast %177 : vector<1x1x64xf32> to vector<1x1x1x64xf32>
    %c0_187 = arith.constant 0 : index
    %c1_188 = arith.constant 1 : index
    %c0_189 = arith.constant 0 : index
    %c64_190 = arith.constant 64 : index
    %179 = vector.load %arg25[%c0_187, %c1_188, %c0_189, %c64_190] : memref<1x2x2x256xf32, #tpu.memory_space<vmem>>, vector<1x1x1x64xf32>
    tpu.vector_store %arg25[%c0_187, %c1_188, %c0_189, %c64_190], %178 {strides = array<i32>} : memref<1x2x2x256xf32, #tpu.memory_space<vmem>>, vector<1x1x1x64xf32>,
    %c1_191 = arith.constant 1 : index
    %c0_192 = arith.constant 0 : index
    %180 = tpu.strided_load %arg24[%c1_191, %c0_192] {strides = array<i32: 2, 1>} : memref<4x64xf32, #tpu.memory_space<vmem>>, vector<2x64xf32>
    %181 = vector.shape_cast %180 : vector<2x64xf32> to vector<1x2x1x64xf32>
    %182 = vector.extract_strided_slice %181 {offsets = [0, 1, 0, 0], sizes = [1, 1, 1, 64], strides = [1, 1, 1, 1]} : vector<1x2x1x64xf32> to vector<1x1x1x64xf32>
    %183 = vector.shape_cast %182 : vector<1x1x1x64xf32> to vector<1x1x64xf32>
    %184 = vector.shape_cast %183 : vector<1x1x64xf32> to vector<1x1x1x64xf32>
    %c0_193 = arith.constant 0 : index
    %c1_194 = arith.constant 1 : index
    %c1_195 = arith.constant 1 : index
    %c0_196 = arith.constant 0 : index
    %185 = vector.load %arg25[%c0_193, %c1_194, %c1_195, %c0_196] : memref<1x2x2x256xf32, #tpu.memory_space<vmem>>, vector<1x1x1x64xf32>
    tpu.vector_store %arg25[%c0_193, %c1_194, %c1_195, %c0_196], %184 {strides = array<i32>} : memref<1x2x2x256xf32, #tpu.memory_space<vmem>>, vector<1x1x1x64xf32>,
    %c0_197 = arith.constant 0 : index
    %c0_198 = arith.constant 0 : index
    %c0_199 = arith.constant 0 : index
    %c0_200 = arith.constant 0 : index
    %186 = vector.load %arg25[%c0_197, %c0_198, %c0_199, %c0_200] : memref<1x2x2x256xf32, #tpu.memory_space<vmem>>, vector<1x1x1x256xf32>
    %187 = vector.shape_cast %186 : vector<1x1x1x256xf32> to vector<1x256xf32>
    %188 = arith.truncf %187 : vector<1x256xf32> to vector<1x256xbf16>
    %c0_201 = arith.constant 0 : index
    %c0_202 = arith.constant 0 : index
    %c0_203 = arith.constant 0 : index
    %189 = vector.load %arg8[%c0_201, %c0_202, %c0_203] : memref<4x256x64xbf16, #tpu.memory_space<vmem>>, vector<1x256x64xbf16>
    %190 = vector.shape_cast %189 : vector<1x256x64xbf16> to vector<256x64xbf16>
    %cst_204 = arith.constant dense<0.000000e+00> : vector<1x64xf32>
    %191 = tpu.matmul %188, %190, %cst_204 {dimension_numbers = #tpu.dot_dimension_numbers<[1], [0], [0], [1], [0, 0, 1, 1], [], []>} : vector<1x256xbf16>, vector<256x64xbf16>, vector<1x64xf32> -> vector<1x64xf32>
    %c0_205 = arith.constant 0 : index
    %c0_206 = arith.constant 0 : index
    %c1_207 = arith.constant 1 : index
    %c0_208 = arith.constant 0 : index
    %192 = vector.load %arg25[%c0_205, %c0_206, %c1_207, %c0_208] : memref<1x2x2x256xf32, #tpu.memory_space<vmem>>, vector<1x1x1x256xf32>
    %193 = vector.shape_cast %192 : vector<1x1x1x256xf32> to vector<1x256xf32>
    %194 = arith.truncf %193 : vector<1x256xf32> to vector<1x256xbf16>
    %c1_209 = arith.constant 1 : index
    %c0_210 = arith.constant 0 : index
    %c0_211 = arith.constant 0 : index
    %195 = vector.load %arg8[%c1_209, %c0_210, %c0_211] : memref<4x256x64xbf16, #tpu.memory_space<vmem>>, vector<1x256x64xbf16>
    %196 = vector.shape_cast %195 : vector<1x256x64xbf16> to vector<256x64xbf16>
    %cst_212 = arith.constant dense<0.000000e+00> : vector<1x64xf32>
    %197 = tpu.matmul %194, %196, %cst_212 {dimension_numbers = #tpu.dot_dimension_numbers<[1], [0], [0], [1], [0, 0, 1, 1], [], []>} : vector<1x256xbf16>, vector<256x64xbf16>, vector<1x64xf32> -> vector<1x64xf32>
    %198 = arith.addf %191, %197 : vector<1x64xf32>
    %c0_213 = arith.constant 0 : index
    %c1_214 = arith.constant 1 : index
    %c0_215 = arith.constant 0 : index
    %c0_216 = arith.constant 0 : index
    %199 = vector.load %arg25[%c0_213, %c1_214, %c0_215, %c0_216] : memref<1x2x2x256xf32, #tpu.memory_space<vmem>>, vector<1x1x1x256xf32>
    %200 = vector.shape_cast %199 : vector<1x1x1x256xf32> to vector<1x256xf32>
    %201 = arith.truncf %200 : vector<1x256xf32> to vector<1x256xbf16>
    %c2_217 = arith.constant 2 : index
    %c0_218 = arith.constant 0 : index
    %c0_219 = arith.constant 0 : index
    %202 = vector.load %arg8[%c2_217, %c0_218, %c0_219] : memref<4x256x64xbf16, #tpu.memory_space<vmem>>, vector<1x256x64xbf16>
    %203 = vector.shape_cast %202 : vector<1x256x64xbf16> to vector<256x64xbf16>
    %cst_220 = arith.constant dense<0.000000e+00> : vector<1x64xf32>
    %204 = tpu.matmul %201, %203, %cst_220 {dimension_numbers = #tpu.dot_dimension_numbers<[1], [0], [0], [1], [0, 0, 1, 1], [], []>} : vector<1x256xbf16>, vector<256x64xbf16>, vector<1x64xf32> -> vector<1x64xf32>
    %205 = arith.addf %198, %204 : vector<1x64xf32>
    %c0_221 = arith.constant 0 : index
    %c1_222 = arith.constant 1 : index
    %c1_223 = arith.constant 1 : index
    %c0_224 = arith.constant 0 : index
    %206 = vector.load %arg25[%c0_221, %c1_222, %c1_223, %c0_224] : memref<1x2x2x256xf32, #tpu.memory_space<vmem>>, vector<1x1x1x256xf32>
    %207 = vector.shape_cast %206 : vector<1x1x1x256xf32> to vector<1x256xf32>
    %208 = arith.truncf %207 : vector<1x256xf32> to vector<1x256xbf16>
    %c3_225 = arith.constant 3 : index
    %c0_226 = arith.constant 0 : index
    %c0_227 = arith.constant 0 : index
    %209 = vector.load %arg8[%c3_225, %c0_226, %c0_227] : memref<4x256x64xbf16, #tpu.memory_space<vmem>>, vector<1x256x64xbf16>
    %210 = vector.shape_cast %209 : vector<1x256x64xbf16> to vector<256x64xbf16>
    %cst_228 = arith.constant dense<0.000000e+00> : vector<1x64xf32>
    %211 = tpu.matmul %208, %210, %cst_228 {dimension_numbers = #tpu.dot_dimension_numbers<[1], [0], [0], [1], [0, 0, 1, 1], [], []>} : vector<1x256xbf16>, vector<256x64xbf16>, vector<1x64xf32> -> vector<1x64xf32>
    %212 = arith.addf %205, %211 : vector<1x64xf32>
    %c0_229 = arith.constant 0 : index
    %c0_230 = arith.constant 0 : index
    %213 = vector.load %arg9[%c0_229, %c0_230] : memref<1x64xf32, #tpu.memory_space<vmem>>, vector<1x64xf32>
    %214 = arith.addf %212, %213 : vector<1x64xf32>
    %cst_231 = arith.constant 0.000000e+00 : f32
    %215 = vector.broadcast %cst_231 : f32 to vector<1x64xf32>
    %216 = arith.maximumf %214, %215 : vector<1x64xf32>
    %217 = vector.shape_cast %216 : vector<1x64xf32> to vector<1x1x64xf32>
    %218 = arith.truncf %217 : vector<1x1x64xf32> to vector<1x1x64xbf16>
    %c0_232 = arith.constant 0 : index
    %c0_233 = arith.constant 0 : index
    %c0_234 = arith.constant 0 : index
    %219 = vector.load %arg19[%c0_232, %c0_233, %c0_234] : memref<1x1x64xbf16, #tpu.memory_space<vmem>>, vector<1x1x64xbf16>
    tpu.vector_store %arg19[%c0_232, %c0_233, %c0_234], %218 {strides = array<i32>} : memref<1x1x64xbf16, #tpu.memory_space<vmem>>, vector<1x1x64xbf16>,
    %220 = arith.truncf %216 : vector<1x64xf32> to vector<1x64xbf16>
    %c0_235 = arith.constant 0 : index
    %c0_236 = arith.constant 0 : index
    %c0_237 = arith.constant 0 : index
    %221 = vector.load %arg10[%c0_235, %c0_236, %c0_237] : memref<1x64x32xbf16, #tpu.memory_space<vmem>>, vector<1x64x32xbf16>
    %222 = vector.shape_cast %221 : vector<1x64x32xbf16> to vector<64x32xbf16>
    %cst_238 = arith.constant dense<0.000000e+00> : vector<1x32xf32>
    %223 = tpu.matmul %220, %222, %cst_238 {dimension_numbers = #tpu.dot_dimension_numbers<[1], [0], [0], [1], [0, 0, 1, 1], [], []>} : vector<1x64xbf16>, vector<64x32xbf16>, vector<1x32xf32> -> vector<1x32xf32>
    %c0_239 = arith.constant 0 : index
    %c0_240 = arith.constant 0 : index
    %224 = vector.load %arg11[%c0_239, %c0_240] : memref<1x32xf32, #tpu.memory_space<vmem>>, vector<1x32xf32>
    %225 = arith.addf %223, %224 : vector<1x32xf32>
    %226 = arith.truncf %225 : vector<1x32xf32> to vector<1x32xbf16>
    %c0_241 = arith.constant 0 : index
    %c0_242 = arith.constant 0 : index
    %227 = vector.load %arg12[%c0_241, %c0_242] : memref<32x16xbf16, #tpu.memory_space<vmem>>, vector<32x16xbf16>
    %cst_243 = arith.constant dense<0.000000e+00> : vector<1x16xf32>
    %228 = tpu.matmul %226, %227, %cst_243 {dimension_numbers = #tpu.dot_dimension_numbers<[1], [0], [0], [1], [0, 0, 1, 1], [], []>} : vector<1x32xbf16>, vector<32x16xbf16>, vector<1x16xf32> -> vector<1x16xf32>
    %c0_244 = arith.constant 0 : index
    %c0_245 = arith.constant 0 : index
    %229 = vector.load %arg13[%c0_244, %c0_245] : memref<1x16xf32, #tpu.memory_space<vmem>>, vector<1x16xf32>
    %230 = arith.addf %228, %229 : vector<1x16xf32>
    %231 = vector.extract_strided_slice %230 {offsets = [0, 0], sizes = [1, 8], strides = [1, 1]} : vector<1x16xf32> to vector<1x8xf32>
    %232 = vector.extract_strided_slice %230 {offsets = [0, 8], sizes = [1, 8], strides = [1, 1]} : vector<1x16xf32> to vector<1x8xf32>
    %cst_246 = arith.constant 5.000000e-01 : f32
    %233 = vector.broadcast %cst_246 : f32 to vector<1x8xf32>
    %234 = arith.mulf %233, %232 : vector<1x8xf32>
    %235 = math.exp %234 : vector<1x8xf32>
    %c0_247 = arith.constant 0 : index
    %c0_248 = arith.constant 0 : index
    %c0_249 = arith.constant 0 : index
    %236 = vector.load %arg14[%c0_247, %c0_248, %c0_249] : memref<1x1x8xf32, #tpu.memory_space<vmem>>, vector<1x1x8xf32>
    %237 = vector.shape_cast %236 : vector<1x1x8xf32> to vector<1x8xf32>
    %238 = arith.mulf %235, %237 : vector<1x8xf32>
    %239 = arith.addf %231, %238 : vector<1x8xf32>
    %240 = tpu.concatenate %239, %231, %232 in 1 : vector<1x8xf32>, vector<1x8xf32>, vector<1x8xf32> -> vector<1x24xf32>
    %c0_250 = arith.constant 0 : index
    %c0_251 = arith.constant 0 : index
    %c0_252 = arith.constant 0 : index
    %241 = vector.load %arg15[%c0_250, %c0_251, %c0_252] : memref<1x1x24xf32, #tpu.memory_space<vmem>>, vector<1x1x24xf32>
    %242 = vector.shape_cast %241 : vector<1x1x24xf32> to vector<1x24xf32>
    %243 = vector.shape_cast %240 : vector<1x24xf32> to vector<1x1x24xf32>
    tpu.vector_store %arg15[%c0_250, %c0_251, %c0_252], %243 {strides = array<i32>} : memref<1x1x24xf32, #tpu.memory_space<vmem>>, vector<1x1x24xf32>,
    return
  }
  func.func @transform_0(%arg0: i32) -> (i32, i32, i32, i32) {
    %c0_i32 = arith.constant 0 : i32
    %c0_i32_0 = arith.constant 0 : i32
    %c0_i32_1 = arith.constant 0 : i32
    %c0_i32_2 = arith.constant 0 : i32
    return %arg0, %c0_i32, %c0_i32_0, %c0_i32_1 : i32, i32, i32, i32
  }
  func.func @transform_1(%arg0: i32) -> (i32, i32, i32) {
    %c0_i32 = arith.constant 0 : i32
    %c0_i32_0 = arith.constant 0 : i32
    %c0_i32_1 = arith.constant 0 : i32
    %c0_i32_2 = arith.constant 0 : i32
    return %c0_i32, %c0_i32_0, %c0_i32_1 : i32, i32, i32
  }
  func.func @transform_2(%arg0: i32) -> (i32, i32) {
    %c0_i32 = arith.constant 0 : i32
    %c0_i32_0 = arith.constant 0 : i32
    %c0_i32_1 = arith.constant 0 : i32
    return %c0_i32, %c0_i32_0 : i32, i32
  }
  func.func @transform_3(%arg0: i32) -> (i32, i32, i32) {
    %c0_i32 = arith.constant 0 : i32
    %c0_i32_0 = arith.constant 0 : i32
    %c0_i32_1 = arith.constant 0 : i32
    %c0_i32_2 = arith.constant 0 : i32
    return %c0_i32, %c0_i32_0, %c0_i32_1 : i32, i32, i32
  }
  func.func @transform_4(%arg0: i32) -> (i32, i32) {
    %c0_i32 = arith.constant 0 : i32
    %c0_i32_0 = arith.constant 0 : i32
    %c0_i32_1 = arith.constant 0 : i32
    return %c0_i32, %c0_i32_0 : i32, i32
  }
  func.func @transform_5(%arg0: i32) -> (i32, i32, i32) {
    %c0_i32 = arith.constant 0 : i32
    %c0_i32_0 = arith.constant 0 : i32
    %c0_i32_1 = arith.constant 0 : i32
    %c0_i32_2 = arith.constant 0 : i32
    return %c0_i32, %c0_i32_0, %c0_i32_1 : i32, i32, i32
  }
  func.func @transform_6(%arg0: i32) -> (i32, i32) {
    %c0_i32 = arith.constant 0 : i32
    %c0_i32_0 = arith.constant 0 : i32
    %c0_i32_1 = arith.constant 0 : i32
    return %c0_i32, %c0_i32_0 : i32, i32
  }
  func.func @transform_7(%arg0: i32) -> (i32, i32, i32) {
    %c0_i32 = arith.constant 0 : i32
    %c0_i32_0 = arith.constant 0 : i32
    %c0_i32_1 = arith.constant 0 : i32
    %c0_i32_2 = arith.constant 0 : i32
    return %c0_i32, %c0_i32_0, %c0_i32_1 : i32, i32, i32
  }
  func.func @transform_8(%arg0: i32) -> (i32, i32) {
    %c0_i32 = arith.constant 0 : i32
    %c0_i32_0 = arith.constant 0 : i32
    %c0_i32_1 = arith.constant 0 : i32
    return %c0_i32, %c0_i32_0 : i32, i32
  }
  func.func @transform_9(%arg0: i32) -> (i32, i32, i32) {
    %c0_i32 = arith.constant 0 : i32
    %c0_i32_0 = arith.constant 0 : i32
    %c0_i32_1 = arith.constant 0 : i32
    %c0_i32_2 = arith.constant 0 : i32
    return %c0_i32, %c0_i32_0, %c0_i32_1 : i32, i32, i32
  }
  func.func @transform_10(%arg0: i32) -> (i32, i32) {
    %c0_i32 = arith.constant 0 : i32
    %c0_i32_0 = arith.constant 0 : i32
    %c0_i32_1 = arith.constant 0 : i32
    return %c0_i32, %c0_i32_0 : i32, i32
  }
  func.func @transform_11(%arg0: i32) -> (i32, i32) {
    %c0_i32 = arith.constant 0 : i32
    %c0_i32_0 = arith.constant 0 : i32
    %c0_i32_1 = arith.constant 0 : i32
    return %c0_i32, %c0_i32_0 : i32, i32
  }
  func.func @transform_12(%arg0: i32) -> (i32, i32) {
    %c0_i32 = arith.constant 0 : i32
    %c0_i32_0 = arith.constant 0 : i32
    %c0_i32_1 = arith.constant 0 : i32
    return %c0_i32, %c0_i32_0 : i32, i32
  }
  func.func @transform_13(%arg0: i32) -> (i32, i32, i32) {
    %c0_i32 = arith.constant 0 : i32
    %c0_i32_0 = arith.constant 0 : i32
    %c0_i32_1 = arith.constant 0 : i32
    return %arg0, %c0_i32, %c0_i32_0 : i32, i32, i32
  }
  func.func @transform_14(%arg0: i32) -> (i32, i32, i32) {
    %c0_i32 = arith.constant 0 : i32
    %c0_i32_0 = arith.constant 0 : i32
    %c0_i32_1 = arith.constant 0 : i32
    return %arg0, %c0_i32, %c0_i32_0 : i32, i32, i32
  }
  func.func @transform_15(%arg0: i32) -> (i32, i32, i32) {
    %c0_i32 = arith.constant 0 : i32
    %c0_i32_0 = arith.constant 0 : i32
    %c0_i32_1 = arith.constant 0 : i32
    return %arg0, %c0_i32, %c0_i32_0 : i32, i32, i32
  }
  func.func @transform_16(%arg0: i32) -> (i32, i32, i32) {
    %c0_i32 = arith.constant 0 : i32
    %c0_i32_0 = arith.constant 0 : i32
    %c0_i32_1 = arith.constant 0 : i32
    return %arg0, %c0_i32, %c0_i32_0 : i32, i32, i32
  }
  func.func @transform_17(%arg0: i32) -> (i32, i32, i32) {
    %c0_i32 = arith.constant 0 : i32
    %c0_i32_0 = arith.constant 0 : i32
    %c0_i32_1 = arith.constant 0 : i32
    return %arg0, %c0_i32, %c0_i32_0 : i32, i32, i32
  }
  func.func @transform_18(%arg0: i32) -> (i32, i32, i32) {
    %c0_i32 = arith.constant 0 : i32
    %c0_i32_0 = arith.constant 0 : i32
    %c0_i32_1 = arith.constant 0 : i32
    return %arg0, %c0_i32, %c0_i32_0 : i32, i32, i32
  }
}

</mosaic_0001>

<llo_original>
// kernel: cnn2d_shapes_encoder.1
$region0: #{cnn2d_shapes_encoder.1}
  #allocation0 [shape = 'u32[]', space=smem, size = 0x4, offset = 0x4, fixed_abs, tag = 'smem constant byte address 0x4 - core index']
  #allocation1 [shape = 'u32[144,128]{1,0:T(1,128)}', space=vmem, size = 0x12000, scoped, tag = 'internal scratch']
  #allocation2 [shape = 'f32[64,32]{1,0:T(8,128)}', space=vmem, size = 0x8000, scoped, tag = 'scratch operand']
  #allocation3 [shape = 'f32[1,5,5,128]{3,2,1,0:T(8,128)}', space=vmem, size = 0x5000, scoped, tag = 'scratch operand']
  #allocation4 [shape = 'f32[16,32]{1,0:T(8,128)}', space=vmem, size = 0x2000, scoped, tag = 'scratch operand']
  #allocation5 [shape = 'f32[1,3,3,128]{3,2,1,0:T(4,128)}', space=vmem, size = 0x1800, scoped, tag = 'scratch operand']
  #allocation6 [shape = 'f32[4,64]{1,0:T(4,128)}', space=vmem, size = 0x800, scoped, tag = 'scratch operand']
  #allocation7 [shape = 'f32[1,2,2,256]{3,2,1,0:T(2,128)}', space=vmem, size = 0x1000, scoped, tag = 'scratch operand']
  %s0 = inlined_call_operand.vmem [shape: f32[2,9,9,4], index: 0, kind: input, shape index: {}]
  %s1 = inlined_call_operand.vmem [shape: bf16[4,4,32], index: 1, kind: input, shape index: {}]
  %s2 = inlined_call_operand.vmem [shape: f32[1,32], index: 2, kind: input, shape index: {}]
  %s3 = inlined_call_operand.vmem [shape: bf16[4,128,32], index: 3, kind: input, shape index: {}]
  %s4 = inlined_call_operand.vmem [shape: f32[1,32], index: 4, kind: input, shape index: {}]
  %s5 = inlined_call_operand.vmem [shape: bf16[4,128,64], index: 5, kind: input, shape index: {}]
  %s6 = inlined_call_operand.vmem [shape: f32[1,64], index: 6, kind: input, shape index: {}]
  %s7 = inlined_call_operand.vmem [shape: bf16[4,256,64], index: 7, kind: input, shape index: {}]
  %s8 = inlined_call_operand.vmem [shape: f32[1,64], index: 8, kind: input, shape index: {}]
  %s9 = inlined_call_operand.vmem [shape: bf16[1,64,32], index: 9, kind: input, shape index: {}]
  %s10 = inlined_call_operand.vmem [shape: f32[1,32], index: 10, kind: input, shape index: {}]
  %s11 = inlined_call_operand.vmem [shape: bf16[32,16], index: 11, kind: input, shape index: {}]
  %s12 = inlined_call_operand.vmem [shape: f32[1,16], index: 12, kind: input, shape index: {}]
  %s13 = inlined_call_operand.vmem [shape: f32[2,1,8], index: 13, kind: input, shape index: {}]
  %s14 = inlined_call_operand.vmem [shape: f32[2,1,24], index: 14, kind: output, shape index: {0}]
  %s15 = inlined_call_operand.vmem [shape: bf16[2,64,32], index: 15, kind: output, shape index: {1}]
  %s16 = inlined_call_operand.vmem [shape: bf16[2,16,32], index: 16, kind: output, shape index: {2}]
  %s17 = inlined_call_operand.vmem [shape: bf16[2,4,64], index: 17, kind: output, shape index: {3}]
  %s18 = inlined_call_operand.vmem [shape: bf16[2,1,64], index: 18, kind: output, shape index: {4}]
  %19 = xla_tuple %s14, %s15, %s16, %s17, %s18
  %s20 = sld [smem:[#allocation0]]
  $region121: #{cnn2d_shapes_encoder.1} parent=0
    _
  %s22 = ssub.s32 1, %s20
  %s23 = scalar_select 0, %s22, %s20
  loop: start=0, step=1, limit=4
  $region2: #{cnn2d_shapes_encoder.1} parent=0 // loop_pre_header
    _
  $region3: #{cnn2d_shapes_encoder.1} parent=0 // loop_header
    %s25 = sphi 0, %s29
    %p26 = scmp.ge.s32.totalorder %s25, 4
    %s35 = sphi 0, %s37
    %s38 = sphi 0, %s35
    %s39 = sphi 0, %s38
    %s55 = sphi 0, %s39
    %s59 = sphi 0, %s59
    %s61 = sphi 0, %s59
    %s62 = sphi 0, %s61
    %s76 = sphi 0, %s62
    %s80 = sphi 0, %s80
    %s82 = sphi 0, %s80
    %s83 = sphi 0, %s82
    %s97 = sphi 0, %s83
    %s101 = sphi 0, %s101
    %s103 = sphi 0, %s101
    %s104 = sphi 0, %s103
    %s118 = sphi 0, %s104
    %s122 = sphi 0, %s122
    %s124 = sphi 0, %s122
    %s125 = sphi 0, %s124
    %s139 = sphi 0, %s125
    %s143 = sphi 0, %s143
    %s145 = sphi 0, %s143
    %s146 = sphi 0, %s145
    %s160 = sphi 0, %s146
    %s164 = sphi 0, %s164
    %s166 = sphi 0, %s164
    %s167 = sphi 0, %s166
    %s181 = sphi 0, %s167
    %s185 = sphi 0, %s185
    %s187 = sphi 0, %s185
    %s188 = sphi 0, %s187
    %s202 = sphi 0, %s188
    %s206 = sphi 0, %s206
    %s208 = sphi 0, %s206
    %s209 = sphi 0, %s208
    %s223 = sphi 0, %s209
    %s227 = sphi 0, %s227
    %s229 = sphi 0, %s227
    %s230 = sphi 0, %s229
    %s244 = sphi 0, %s230
    %s248 = sphi 0, %s248
    %s250 = sphi 0, %s248
    %s251 = sphi 0, %s250
    %s265 = sphi 0, %s251
    %s269 = sphi 0, %s269
    %s271 = sphi 0, %s269
    %s272 = sphi 0, %s271
    %s286 = sphi 0, %s272
    %s290 = sphi 0, %s290
    %s292 = sphi 0, %s290
    %s293 = sphi 0, %s292
    %s307 = sphi 0, %s293
    %s313 = sphi 0, %s315
    %s316 = sphi 0, %s313
    %s317 = sphi 0, %s316
    %s333 = sphi 0, %s317
    %s339 = sphi 0, %s341
    %s342 = sphi 0, %s339
    %s343 = sphi 0, %s342
    %s359 = sphi 0, %s343
    %s365 = sphi 0, %s367
    %s368 = sphi 0, %s365
    %s369 = sphi 0, %s368
    %s385 = sphi 0, %s369
    %s391 = sphi 0, %s393
    %s394 = sphi 0, %s391
    %s395 = sphi 0, %s394
    %s411 = sphi 0, %s395
    %s417 = sphi 0, %s419
    %s420 = sphi 0, %s417
    %s421 = sphi 0, %s420
    %s437 = sphi 0, %s421
    %s443 = sphi 0, %s445
    %s446 = sphi 0, %s443
    %s447 = sphi 0, %s446
    %s463 = sphi 0, %s447
  $region4: #{cnn2d_shapes_encoder.1} parent=0 // loop_header_branch
    %28 = sbr.rel (%p26) target = $region8
  $region5: #{cnn2d_shapes_encoder.1} parent=0 // loop_body
    %s30 = ssub.s32 %s25, 1
    %s31 = ssub.s32 %s25, 2
    %s32 = sadd.s32 %s25, 1
    %s33 = ssub.s32 %s25, %s32
    %p34 = scmp.eq.s32.totalorder %s33, 0
    %s36 = sadd.s32 %s35, 1
    %s37 = scalar_select %p34, %s35, %s36
    %p40 = pneg %p34
    %p41 = scmp.eq.s32.totalorder %s25, 1
    %p42 = por %p40, %p41
    %p43 = scmp.ne.s32.totalorder %s35, %s38
    %p44 = scmp.eq.s32.totalorder %s25, 0
    %p45 = por %p43, %p44
    %p46 = scmp.ne.s32.totalorder %s35, %s38
    %p47 = scmp.eq.s32.totalorder %s30, 1
    %p48 = por %p46, %p47
    %p49 = scmp.ne.s32.totalorder %s38, %s39
    %p50 = scmp.eq.s32.totalorder %s30, 0
    %p51 = por %p49, %p50
    %p52 = scmp.ne.s32.totalorder %s38, %s39
    %p53 = scmp.eq.s32.totalorder %s31, 1
    %p54 = por %p52, %p53
    %p56 = scmp.ne.s32.totalorder %s39, %s55
    %p57 = scmp.eq.s32.totalorder %s31, 0
    %p58 = por %p56, %p57
    %s60 = sadd.s32 %s59, 1
    %p63 = scmp.eq.s32.totalorder %s25, 1
    %p64 = scmp.ne.s32.totalorder %s59, %s61
    %p65 = scmp.eq.s32.totalorder %s25, 0
    %p66 = por %p64, %p65
    %p67 = scmp.ne.s32.totalorder %s59, %s61
    %p68 = scmp.eq.s32.totalorder %s30, 1
    %p69 = por %p67, %p68
    %p70 = scmp.ne.s32.totalorder %s61, %s62
    %p71 = scmp.eq.s32.totalorder %s30, 0
    %p72 = por %p70, %p71
    %p73 = scmp.ne.s32.totalorder %s61, %s62
    %p74 = scmp.eq.s32.totalorder %s31, 1
    %p75 = por %p73, %p74
    %p77 = scmp.ne.s32.totalorder %s62, %s76
    %p78 = scmp.eq.s32.totalorder %s31, 0
    %p79 = por %p77, %p78
    %s81 = sadd.s32 %s80, 1
    %p84 = scmp.eq.s32.totalorder %s25, 1
    %p85 = scmp.ne.s32.totalorder %s80, %s82
    %p86 = scmp.eq.s32.totalorder %s25, 0
    %p87 = por %p85, %p86
    %p88 = scmp.ne.s32.totalorder %s80, %s82
    %p89 = scmp.eq.s32.totalorder %s30, 1
    %p90 = por %p88, %p89
    %p91 = scmp.ne.s32.totalorder %s82, %s83
    %p92 = scmp.eq.s32.totalorder %s30, 0
    %p93 = por %p91, %p92
    %p94 = scmp.ne.s32.totalorder %s82, %s83
    %p95 = scmp.eq.s32.totalorder %s31, 1
    %p96 = por %p94, %p95
    %p98 = scmp.ne.s32.totalorder %s83, %s97
    %p99 = scmp.eq.s32.totalorder %s31, 0
    %p100 = por %p98, %p99
    %s102 = sadd.s32 %s101, 1
    %p105 = scmp.eq.s32.totalorder %s25, 1
    %p106 = scmp.ne.s32.totalorder %s101, %s103
    %p107 = scmp.eq.s32.totalorder %s25, 0
    %p108 = por %p106, %p107
    %p109 = scmp.ne.s32.totalorder %s101, %s103
    %p110 = scmp.eq.s32.totalorder %s30, 1
    %p111 = por %p109, %p110
    %p112 = scmp.ne.s32.totalorder %s103, %s104
    %p113 = scmp.eq.s32.totalorder %s30, 0
    %p114 = por %p112, %p113
    %p115 = scmp.ne.s32.totalorder %s103, %s104
    %p116 = scmp.eq.s32.totalorder %s31, 1
    %p117 = por %p115, %p116
    %p119 = scmp.ne.s32.totalorder %s104, %s118
    %p120 = scmp.eq.s32.totalorder %s31, 0
    %p121 = por %p119, %p120
    %s123 = sadd.s32 %s122, 1
    %p126 = scmp.eq.s32.totalorder %s25, 1
    %p127 = scmp.ne.s32.totalorder %s122, %s124
    %p128 = scmp.eq.s32.totalorder %s25, 0
    %p129 = por %p127, %p128
    %p130 = scmp.ne.s32.totalorder %s122, %s124
    %p131 = scmp.eq.s32.totalorder %s30, 1
    %p132 = por %p130, %p131
    %p133 = scmp.ne.s32.totalorder %s124, %s125
    %p134 = scmp.eq.s32.totalorder %s30, 0
    %p135 = por %p133, %p134
    %p136 = scmp.ne.s32.totalorder %s124, %s125
    %p137 = scmp.eq.s32.totalorder %s31, 1
    %p138 = por %p136, %p137
    %p140 = scmp.ne.s32.totalorder %s125, %s139
    %p141 = scmp.eq.s32.totalorder %s31, 0
    %p142 = por %p140, %p141
    %s144 = sadd.s32 %s143, 1
    %p147 = scmp.eq.s32.totalorder %s25, 1
    %p148 = scmp.ne.s32.totalorder %s143, %s145
    %p149 = scmp.eq.s32.totalorder %s25, 0
    %p150 = por %p148, %p149
    %p151 = scmp.ne.s32.totalorder %s143, %s145
    %p152 = scmp.eq.s32.totalorder %s30, 1
    %p153 = por %p151, %p152
    %p154 = scmp.ne.s32.totalorder %s145, %s146
    %p155 = scmp.eq.s32.totalorder %s30, 0
    %p156 = por %p154, %p155
    %p157 = scmp.ne.s32.totalorder %s145, %s146
    %p158 = scmp.eq.s32.totalorder %s31, 1
    %p159 = por %p157, %p158
    %p161 = scmp.ne.s32.totalorder %s146, %s160
    %p162 = scmp.eq.s32.totalorder %s31, 0
    %p163 = por %p161, %p162
    %s165 = sadd.s32 %s164, 1
    %p168 = scmp.eq.s32.totalorder %s25, 1
    %p169 = scmp.ne.s32.totalorder %s164, %s166
    %p170 = scmp.eq.s32.totalorder %s25, 0
    %p171 = por %p169, %p170
    %p172 = scmp.ne.s32.totalorder %s164, %s166
    %p173 = scmp.eq.s32.totalorder %s30, 1
    %p174 = por %p172, %p173
    %p175 = scmp.ne.s32.totalorder %s166, %s167
    %p176 = scmp.eq.s32.totalorder %s30, 0
    %p177 = por %p175, %p176
    %p178 = scmp.ne.s32.totalorder %s166, %s167
    %p179 = scmp.eq.s32.totalorder %s31, 1
    %p180 = por %p178, %p179
    %p182 = scmp.ne.s32.totalorder %s167, %s181
    %p183 = scmp.eq.s32.totalorder %s31, 0
    %p184 = por %p182, %p183
    %s186 = sadd.s32 %s185, 1
    %p189 = scmp.eq.s32.totalorder %s25, 1
    %p190 = scmp.ne.s32.totalorder %s185, %s187
    %p191 = scmp.eq.s32.totalorder %s25, 0
    %p192 = por %p190, %p191
    %p193 = scmp.ne.s32.totalorder %s185, %s187
    %p194 = scmp.eq.s32.totalorder %s30, 1
    %p195 = por %p193, %p194
    %p196 = scmp.ne.s32.totalorder %s187, %s188
    %p197 = scmp.eq.s32.totalorder %s30, 0
    %p198 = por %p196, %p197
    %p199 = scmp.ne.s32.totalorder %s187, %s188
    %p200 = scmp.eq.s32.totalorder %s31, 1
    %p201 = por %p199, %p200
    %p203 = scmp.ne.s32.totalorder %s188, %s202
    %p204 = scmp.eq.s32.totalorder %s31, 0
    %p205 = por %p203, %p204
    %s207 = sadd.s32 %s206, 1
    %p210 = scmp.eq.s32.totalorder %s25, 1
    %p211 = scmp.ne.s32.totalorder %s206, %s208
    %p212 = scmp.eq.s32.totalorder %s25, 0
    %p213 = por %p211, %p212
    %p214 = scmp.ne.s32.totalorder %s206, %s208
    %p215 = scmp.eq.s32.totalorder %s30, 1
    %p216 = por %p214, %p215
    %p217 = scmp.ne.s32.totalorder %s208, %s209
    %p218 = scmp.eq.s32.totalorder %s30, 0
    %p219 = por %p217, %p218
    %p220 = scmp.ne.s32.totalorder %s208, %s209
    %p221 = scmp.eq.s32.totalorder %s31, 1
    %p222 = por %p220, %p221
    %p224 = scmp.ne.s32.totalorder %s209, %s223
    %p225 = scmp.eq.s32.totalorder %s31, 0
    %p226 = por %p224, %p225
    %s228 = sadd.s32 %s227, 1
    %p231 = scmp.eq.s32.totalorder %s25, 1
    %p232 = scmp.ne.s32.totalorder %s227, %s229
    %p233 = scmp.eq.s32.totalorder %s25, 0
    %p234 = por %p232, %p233
    %p235 = scmp.ne.s32.totalorder %s227, %s229
    %p236 = scmp.eq.s32.totalorder %s30, 1
    %p237 = por %p235, %p236
    %p238 = scmp.ne.s32.totalorder %s229, %s230
    %p239 = scmp.eq.s32.totalorder %s30, 0
    %p240 = por %p238, %p239
    %p241 = scmp.ne.s32.totalorder %s229, %s230
    %p242 = scmp.eq.s32.totalorder %s31, 1
    %p243 = por %p241, %p242
    %p245 = scmp.ne.s32.totalorder %s230, %s244
    %p246 = scmp.eq.s32.totalorder %s31, 0
    %p247 = por %p245, %p246
    %s249 = sadd.s32 %s248, 1
    %p252 = scmp.eq.s32.totalorder %s25, 1
    %p253 = scmp.ne.s32.totalorder %s248, %s250
    %p254 = scmp.eq.s32.totalorder %s25, 0
    %p255 = por %p253, %p254
    %p256 = scmp.ne.s32.totalorder %s248, %s250
    %p257 = scmp.eq.s32.totalorder %s30, 1
    %p258 = por %p256, %p257
    %p259 = scmp.ne.s32.totalorder %s250, %s251
    %p260 = scmp.eq.s32.totalorder %s30, 0
    %p261 = por %p259, %p260
    %p262 = scmp.ne.s32.totalorder %s250, %s251
    %p263 = scmp.eq.s32.totalorder %s31, 1
    %p264 = por %p262, %p263
    %p266 = scmp.ne.s32.totalorder %s251, %s265
    %p267 = scmp.eq.s32.totalorder %s31, 0
    %p268 = por %p266, %p267
    %s270 = sadd.s32 %s269, 1
    %p273 = scmp.eq.s32.totalorder %s25, 1
    %p274 = scmp.ne.s32.totalorder %s269, %s271
    %p275 = scmp.eq.s32.totalorder %s25, 0
    %p276 = por %p274, %p275
    %p277 = scmp.ne.s32.totalorder %s269, %s271
    %p278 = scmp.eq.s32.totalorder %s30, 1
    %p279 = por %p277, %p278
    %p280 = scmp.ne.s32.totalorder %s271, %s272
    %p281 = scmp.eq.s32.totalorder %s30, 0
    %p282 = por %p280, %p281
    %p283 = scmp.ne.s32.totalorder %s271, %s272
    %p284 = scmp.eq.s32.totalorder %s31, 1
    %p285 = por %p283, %p284
    %p287 = scmp.ne.s32.totalorder %s272, %s286
    %p288 = scmp.eq.s32.totalorder %s31, 0
    %p289 = por %p287, %p288
    %s291 = sadd.s32 %s290, 1
    %p294 = scmp.eq.s32.totalorder %s25, 1
    %p295 = scmp.ne.s32.totalorder %s290, %s292
    %p296 = scmp.eq.s32.totalorder %s25, 0
    %p297 = por %p295, %p296
    %p298 = scmp.ne.s32.totalorder %s290, %s292
    %p299 = scmp.eq.s32.totalorder %s30, 1
    %p300 = por %p298, %p299
    %p301 = scmp.ne.s32.totalorder %s292, %s293
    %p302 = scmp.eq.s32.totalorder %s30, 0
    %p303 = por %p301, %p302
    %p304 = scmp.ne.s32.totalorder %s292, %s293
    %p305 = scmp.eq.s32.totalorder %s31, 1
    %p306 = por %p304, %p305
    %p308 = scmp.ne.s32.totalorder %s293, %s307
    %p309 = scmp.eq.s32.totalorder %s31, 0
    %p310 = por %p308, %p309
    %s311 = ssub.s32 %s25, %s32
    %p312 = scmp.eq.s32.totalorder %s311, 0
    %s314 = sadd.s32 %s313, 1
    %s315 = scalar_select %p312, %s313, %s314
    %p318 = pneg %p312
    %p319 = scmp.eq.s32.totalorder %s25, 1
    %p320 = por %p318, %p319
    %p321 = scmp.ne.s32.totalorder %s313, %s316
    %p322 = scmp.eq.s32.totalorder %s25, 0
    %p323 = por %p321, %p322
    %p324 = scmp.ne.s32.totalorder %s313, %s316
    %p325 = scmp.eq.s32.totalorder %s30, 1
    %p326 = por %p324, %p325
    %p327 = scmp.ne.s32.totalorder %s316, %s317
    %p328 = scmp.eq.s32.totalorder %s30, 0
    %p329 = por %p327, %p328
    %p330 = scmp.ne.s32.totalorder %s316, %s317
    %p331 = scmp.eq.s32.totalorder %s31, 1
    %p332 = por %p330, %p331
    %p334 = scmp.ne.s32.totalorder %s317, %s333
    %p335 = scmp.eq.s32.totalorder %s31, 0
    %p336 = por %p334, %p335
    %s337 = ssub.s32 %s25, %s32
    %p338 = scmp.eq.s32.totalorder %s337, 0
    %s340 = sadd.s32 %s339, 1
    %s341 = scalar_select %p338, %s339, %s340
    %p344 = pneg %p338
    %p345 = scmp.eq.s32.totalorder %s25, 1
    %p346 = por %p344, %p345
    %p347 = scmp.ne.s32.totalorder %s339, %s342
    %p348 = scmp.eq.s32.totalorder %s25, 0
    %p349 = por %p347, %p348
    %p350 = scmp.ne.s32.totalorder %s339, %s342
    %p351 = scmp.eq.s32.totalorder %s30, 1
    %p352 = por %p350, %p351
    %p353 = scmp.ne.s32.totalorder %s342, %s343
    %p354 = scmp.eq.s32.totalorder %s30, 0
    %p355 = por %p353, %p354
    %p356 = scmp.ne.s32.totalorder %s342, %s343
    %p357 = scmp.eq.s32.totalorder %s31, 1
    %p358 = por %p356, %p357
    %p360 = scmp.ne.s32.totalorder %s343, %s359
    %p361 = scmp.eq.s32.totalorder %s31, 0
    %p362 = por %p360, %p361
    %s363 = ssub.s32 %s25, %s32
    %p364 = scmp.eq.s32.totalorder %s363, 0
    %s366 = sadd.s32 %s365, 1
    %s367 = scalar_select %p364, %s365, %s366
    %p370 = pneg %p364
    %p371 = scmp.eq.s32.totalorder %s25, 1
    %p372 = por %p370, %p371
    %p373 = scmp.ne.s32.totalorder %s365, %s368
    %p374 = scmp.eq.s32.totalorder %s25, 0
    %p375 = por %p373, %p374
    %p376 = scmp.ne.s32.totalorder %s365, %s368
    %p377 = scmp.eq.s32.totalorder %s30, 1
    %p378 = por %p376, %p377
    %p379 = scmp.ne.s32.totalorder %s368, %s369
    %p380 = scmp.eq.s32.totalorder %s30, 0
    %p381 = por %p379, %p380
    %p382 = scmp.ne.s32.totalorder %s368, %s369
    %p383 = scmp.eq.s32.totalorder %s31, 1
    %p384 = por %p382, %p383
    %p386 = scmp.ne.s32.totalorder %s369, %s385
    %p387 = scmp.eq.s32.totalorder %s31, 0
    %p388 = por %p386, %p387
    %s389 = ssub.s32 %s25, %s32
    %p390 = scmp.eq.s32.totalorder %s389, 0
    %s392 = sadd.s32 %s391, 1
    %s393 = scalar_select %p390, %s391, %s392
    %p396 = pneg %p390
    %p397 = scmp.eq.s32.totalorder %s25, 1
    %p398 = por %p396, %p397
    %p399 = scmp.ne.s32.totalorder %s391, %s394
    %p400 = scmp.eq.s32.totalorder %s25, 0
    %p401 = por %p399, %p400
    %p402 = scmp.ne.s32.totalorder %s391, %s394
    %p403 = scmp.eq.s32.totalorder %s30, 1
    %p404 = por %p402, %p403
    %p405 = scmp.ne.s32.totalorder %s394, %s395
    %p406 = scmp.eq.s32.totalorder %s30, 0
    %p407 = por %p405, %p406
    %p408 = scmp.ne.s32.totalorder %s394, %s395
    %p409 = scmp.eq.s32.totalorder %s31, 1
    %p410 = por %p408, %p409
    %p412 = scmp.ne.s32.totalorder %s395, %s411
    %p413 = scmp.eq.s32.totalorder %s31, 0
    %p414 = por %p412, %p413
    %s415 = ssub.s32 %s25, %s32
    %p416 = scmp.eq.s32.totalorder %s415, 0
    %s418 = sadd.s32 %s417, 1
    %s419 = scalar_select %p416, %s417, %s418
    %p422 = pneg %p416
    %p423 = scmp.eq.s32.totalorder %s25, 1
    %p424 = por %p422, %p423
    %p425 = scmp.ne.s32.totalorder %s417, %s420
    %p426 = scmp.eq.s32.totalorder %s25, 0
    %p427 = por %p425, %p426
    %p428 = scmp.ne.s32.totalorder %s417, %s420
    %p429 = scmp.eq.s32.totalorder %s30, 1
    %p430 = por %p428, %p429
    %p431 = scmp.ne.s32.totalorder %s420, %s421
    %p432 = scmp.eq.s32.totalorder %s30, 0
    %p433 = por %p431, %p432
    %p434 = scmp.ne.s32.totalorder %s420, %s421
    %p435 = scmp.eq.s32.totalorder %s31, 1
    %p436 = por %p434, %p435
    %p438 = scmp.ne.s32.totalorder %s421, %s437
    %p439 = scmp.eq.s32.totalorder %s31, 0
    %p440 = por %p438, %p439
    %s441 = ssub.s32 %s25, %s32
    %p442 = scmp.eq.s32.totalorder %s441, 0
    %s444 = sadd.s32 %s443, 1
    %s445 = scalar_select %p442, %s443, %s444
    %p448 = pneg %p442
    %p449 = scmp.eq.s32.totalorder %s25, 1
    %p450 = por %p448, %p449
    %p451 = scmp.ne.s32.totalorder %s443, %s446
    %p452 = scmp.eq.s32.totalorder %s25, 0
    %p453 = por %p451, %p452
    %p454 = scmp.ne.s32.totalorder %s443, %s446
    %p455 = scmp.eq.s32.totalorder %s30, 1
    %p456 = por %p454, %p455
    %p457 = scmp.ne.s32.totalorder %s446, %s447
    %p458 = scmp.eq.s32.totalorder %s30, 0
    %p459 = por %p457, %p458
    %p460 = scmp.ne.s32.totalorder %s446, %s447
    %p461 = scmp.eq.s32.totalorder %s31, 1
    %p462 = por %p460, %p461
    %p464 = scmp.ne.s32.totalorder %s447, %s463
    %p465 = scmp.eq.s32.totalorder %s31, 0
    %p466 = por %p464, %p465
    %p467 = scmp.le.s32.totalorder 1, %s25
    %p468 = scmp.lt.s32.totalorder %s25, 3
    %p469 = pnand %p467, %p468
    %p470 = pneg %p469
    // Predicated region
    $region9: #{cnn2d_shapes_encoder.1} parent=5 // pred_check
      _
    $region10: #{cnn2d_shapes_encoder.1} parent=5 // pred_check_branch
      %472 = sbr.rel (%p469) target = $region12
    $region11: #{cnn2d_shapes_encoder.1} parent=5 // pred_region
      %s473 = ssub.s32 %s25, 1
      // Predicated region
      $region13: #{cnn2d_shapes_encoder.1} parent=11 // pred_check
        %p474 = pneg %p72
      $region14: #{cnn2d_shapes_encoder.1} parent=11 // pred_check_branch
        %476 = sbr.rel (%p474) target = $region16
      $region15: #{cnn2d_shapes_encoder.1} parent=11 // pred_region
        _
      $region16: #{cnn2d_shapes_encoder.1} parent=11 // pred_fallthru
        _
      // Predicated region
      $region17: #{cnn2d_shapes_encoder.1} parent=11 // pred_check
        %p477 = pneg %p93
      $region18: #{cnn2d_shapes_encoder.1} parent=11 // pred_check_branch
        %479 = sbr.rel (%p477) target = $region20
      $region19: #{cnn2d_shapes_encoder.1} parent=11 // pred_region
        _
      $region20: #{cnn2d_shapes_encoder.1} parent=11 // pred_fallthru
        _
      // Predicated region
      $region21: #{cnn2d_shapes_encoder.1} parent=11 // pred_check
        %p480 = pneg %p114
      $region22: #{cnn2d_shapes_encoder.1} parent=11 // pred_check_branch
        %482 = sbr.rel (%p480) target = $region24
      $region23: #{cnn2d_shapes_encoder.1} parent=11 // pred_region
        _
      $region24: #{cnn2d_shapes_encoder.1} parent=11 // pred_fallthru
        _
      // Predicated region
      $region25: #{cnn2d_shapes_encoder.1} parent=11 // pred_check
        %p483 = pneg %p135
      $region26: #{cnn2d_shapes_encoder.1} parent=11 // pred_check_branch
        %485 = sbr.rel (%p483) target = $region28
      $region27: #{cnn2d_shapes_encoder.1} parent=11 // pred_region
        _
      $region28: #{cnn2d_shapes_encoder.1} parent=11 // pred_fallthru
        _
      // Predicated region
      $region29: #{cnn2d_shapes_encoder.1} parent=11 // pred_check
        %p486 = pneg %p156
      $region30: #{cnn2d_shapes_encoder.1} parent=11 // pred_check_branch
        %488 = sbr.rel (%p486) target = $region32
      $region31: #{cnn2d_shapes_encoder.1} parent=11 // pred_region
        _
      $region32: #{cnn2d_shapes_encoder.1} parent=11 // pred_fallthru
        _
      // Predicated region
      $region33: #{cnn2d_shapes_encoder.1} parent=11 // pred_check
        %p489 = pneg %p177
      $region34: #{cnn2d_shapes_encoder.1} parent=11 // pred_check_branch
        %491 = sbr.rel (%p489) target = $region36
      $region35: #{cnn2d_shapes_encoder.1} parent=11 // pred_region
        _
      $region36: #{cnn2d_shapes_encoder.1} parent=11 // pred_fallthru
        _
      // Predicated region
      $region37: #{cnn2d_shapes_encoder.1} parent=11 // pred_check
        %p492 = pneg %p198
      $region38: #{cnn2d_shapes_encoder.1} parent=11 // pred_check_branch
        %494 = sbr.rel (%p492) target = $region40
      $region39: #{cnn2d_shapes_encoder.1} parent=11 // pred_region
        _
      $region40: #{cnn2d_shapes_encoder.1} parent=11 // pred_fallthru
        _
      // Predicated region
      $region41: #{cnn2d_shapes_encoder.1} parent=11 // pred_check
        %p495 = pneg %p219
      $region42: #{cnn2d_shapes_encoder.1} parent=11 // pred_check_branch
        %497 = sbr.rel (%p495) target = $region44
      $region43: #{cnn2d_shapes_encoder.1} parent=11 // pred_region
        _
      $region44: #{cnn2d_shapes_encoder.1} parent=11 // pred_fallthru
        _
      // Predicated region
      $region45: #{cnn2d_shapes_encoder.1} parent=11 // pred_check
        %p498 = pneg %p240
      $region46: #{cnn2d_shapes_encoder.1} parent=11 // pred_check_branch
        %500 = sbr.rel (%p498) target = $region48
      $region47: #{cnn2d_shapes_encoder.1} parent=11 // pred_region
        _
      $region48: #{cnn2d_shapes_encoder.1} parent=11 // pred_fallthru
        _
      // Predicated region
      $region49: #{cnn2d_shapes_encoder.1} parent=11 // pred_check
        %p501 = pneg %p261
      $region50: #{cnn2d_shapes_encoder.1} parent=11 // pred_check_branch
        %503 = sbr.rel (%p501) target = $region52
      $region51: #{cnn2d_shapes_encoder.1} parent=11 // pred_region
        _
      $region52: #{cnn2d_shapes_encoder.1} parent=11 // pred_fallthru
        _
      // Predicated region
      $region53: #{cnn2d_shapes_encoder.1} parent=11 // pred_check
        %p504 = pneg %p282
      $region54: #{cnn2d_shapes_encoder.1} parent=11 // pred_check_branch
        %506 = sbr.rel (%p504) target = $region56
      $region55: #{cnn2d_shapes_encoder.1} parent=11 // pred_region
        _
      $region56: #{cnn2d_shapes_encoder.1} parent=11 // pred_fallthru
        _
      // Predicated region
      $region57: #{cnn2d_shapes_encoder.1} parent=11 // pred_check
        %p507 = pneg %p303
      $region58: #{cnn2d_shapes_encoder.1} parent=11 // pred_check_branch
        %509 = sbr.rel (%p507) target = $region60
      $region59: #{cnn2d_shapes_encoder.1} parent=11 // pred_region
        _
      $region60: #{cnn2d_shapes_encoder.1} parent=11 // pred_fallthru
        _
    $region12: #{cnn2d_shapes_encoder.1} parent=5 // pred_fallthru
      _
    %p510 = scmp.lt.s32.totalorder %s25, 2
    // Predicated region
    $region61: #{cnn2d_shapes_encoder.1} parent=5 // pred_check
      %p511 = pneg %p510
    $region62: #{cnn2d_shapes_encoder.1} parent=5 // pred_check_branch
      %513 = sbr.rel (%p511) target = $region64
    $region63: #{cnn2d_shapes_encoder.1} parent=5 // pred_region
      // Predicated region
      $region65: #{cnn2d_shapes_encoder.1} parent=63 // pred_check
        %p514 = pneg %p45
      $region66: #{cnn2d_shapes_encoder.1} parent=63 // pred_check_branch
        %516 = sbr.rel (%p514) target = $region68
      $region67: #{cnn2d_shapes_encoder.1} parent=63 // pred_region
        %p517 = scmp.lt.s32.totalorder %s25, 1
        %s518 = scalar_select %p517, %s25, 1
        %s519 = smul.addr %s518, 18
        %s520 = smul.addr %s519, 8
        %s521 = scalar_lea.vmem %s0, %s520
      $region68: #{cnn2d_shapes_encoder.1} parent=63 // pred_fallthru
        _
      // Predicated region
      $region69: #{cnn2d_shapes_encoder.1} parent=63 // pred_check
        %p522 = pneg %p323
      $region70: #{cnn2d_shapes_encoder.1} parent=63 // pred_check_branch
        %524 = sbr.rel (%p522) target = $region72
      $region71: #{cnn2d_shapes_encoder.1} parent=63 // pred_region
        %p525 = scmp.lt.s32.totalorder %s25, 1
        %s526 = scalar_select %p525, %s25, 1
        %s527 = scalar_lea.vmem %s13, %s526
      $region72: #{cnn2d_shapes_encoder.1} parent=63 // pred_fallthru
        _
    $region64: #{cnn2d_shapes_encoder.1} parent=5 // pred_fallthru
      _
    %p528 = scmp.le.s32.totalorder 1, %s25
    %p529 = scmp.lt.s32.totalorder %s25, 3
    %p530 = pnand %p528, %p529
    %p531 = pneg %p530
    // Predicated region
    $region73: #{cnn2d_shapes_encoder.1} parent=5 // pred_check
      _
    $region74: #{cnn2d_shapes_encoder.1} parent=5 // pred_check_branch
      %533 = sbr.rel (%p530) target = $region76
    $region75: #{cnn2d_shapes_encoder.1} parent=5 // pred_region
      %s534 = ssub.s32 %s25, 1
      %p535 = scmp.lt.s32.totalorder %s30, 1
      %s536 = scalar_select %p535, %s30, 1
      %s537 = smul.addr %s536, 18
      %s538 = smul.addr %s537, 8
      %s539 = scalar_lea.vmem %s0, %s538
      %p540 = pneg %p51
      %p541 = pneg %p48
      %p542 = pneg %p72
      %p543 = pneg %p69
      %p544 = pneg %p93
      %p545 = pneg %p90
      %p546 = pneg %p114
      %p547 = pneg %p111
      %p548 = pneg %p135
      %p549 = pneg %p132
      %p550 = pneg %p156
      %p551 = pneg %p153
      %p552 = pneg %p177
      %p553 = pneg %p174
      %p554 = pneg %p198
      %p555 = pneg %p195
      %p556 = pneg %p219
      %p557 = pneg %p216
      %p558 = pneg %p240
      %p559 = pneg %p237
      %p560 = pneg %p261
      %p561 = pneg %p258
      %p562 = pneg %p282
      %p563 = pneg %p279
      %p564 = pneg %p303
      %p565 = pneg %p300
      %p566 = scmp.lt.s32.totalorder %s30, 1
      %s567 = scalar_select %p566, %s30, 1
      %s568 = scalar_lea.vmem %s13, %s567
      %p569 = pneg %p329
      %p570 = pneg %p326
      %p571 = pneg %p355
      %p572 = pneg %p352
      %p573 = scmp.lt.s32.totalorder %s30, 1
      %s574 = scalar_select %p573, %s30, 1
      %s575 = scalar_lea.vmem %s14, %s574
      %p576 = pneg %p381
      %p577 = pneg %p378
      %p578 = scmp.lt.s32.totalorder %s30, 1
      %s579 = scalar_select %p578, %s30, 1
      %s580 = smul.addr %s579, 8
      %s581 = smul.addr %s580, 4
      %s582 = scalar_lea.vmem %s15, %s581
      %p583 = pneg %p407
      %p584 = pneg %p404
      %p585 = scmp.lt.s32.totalorder %s30, 1
      %s586 = scalar_select %p585, %s30, 1
      %s587 = smul.addr %s586, 2
      %s588 = smul.addr %s587, 4
      %s589 = scalar_lea.vmem %s16, %s588
      %p590 = pneg %p433
      %p591 = pneg %p430
      %p592 = scmp.lt.s32.totalorder %s30, 1
      %s593 = scalar_select %p592, %s30, 1
      %s594 = smul.addr %s593, 2
      %s595 = scalar_lea.vmem %s17, %s594
      %p596 = pneg %p459
      %p597 = pneg %p456
      %p598 = scmp.lt.s32.totalorder %s30, 1
      %s599 = scalar_select %p598, %s30, 1
      %s600 = scalar_lea.vmem %s18, %s599
      %p601 = scmp.lt.s32.totalorder %s30, 1
      %s602 = scalar_select %p601, %s30, 1
      %s603 = smul.addr %s602, 18
      %s604 = smul.addr %s603, 8
      %s605 = scalar_lea.vmem %s0, %s604
      %p606 = scmp.lt.s32.totalorder %s30, 1
      %s607 = scalar_select %p606, %s30, 1
      %s608 = scalar_lea.vmem %s13, %s607
      %p609 = scmp.lt.s32.totalorder %s30, 1
      %s610 = scalar_select %p609, %s30, 1
      %s611 = scalar_lea.vmem %s14, %s610
      %p612 = scmp.lt.s32.totalorder %s30, 1
      %s613 = scalar_select %p612, %s30, 1
      %s614 = smul.addr %s613, 8
      %s615 = smul.addr %s614, 4
      %s616 = scalar_lea.vmem %s15, %s615
      %p617 = scmp.lt.s32.totalorder %s30, 1
      %s618 = scalar_select %p617, %s30, 1
      %s619 = smul.addr %s618, 2
      %s620 = smul.addr %s619, 4
      %s621 = scalar_lea.vmem %s16, %s620
      %p622 = scmp.lt.s32.totalorder %s30, 1
      %s623 = scalar_select %p622, %s30, 1
      %s624 = smul.addr %s623, 2
      %s625 = scalar_lea.vmem %s17, %s624
      %p626 = scmp.lt.s32.totalorder %s30, 1
      %s627 = scalar_select %p626, %s30, 1
      %s628 = scalar_lea.vmem %s18, %s627
      %v630 = vld [vmem:[%s605] sm:$0xff]
      %v631 = vld [vmem:[%s605 + $0x10] sm:$0xff]
      %v632 = vld [vmem:[%s605 + $0x20] sm:$0xff]
      %v633 = vld [vmem:[%s605 + $0x30] sm:$0xff]
      %v634 = vld [vmem:[%s605 + $0x40] sm:$0xff]
      %v635 = vld [vmem:[%s605 + $0x50] sm:$0xff]
      %v636 = vld [vmem:[%s605 + $0x60] sm:$0xff]
      %v637 = vld [vmem:[%s605 + $0x70] sm:$0xff]
      %v638 = vpack.c.bf16 %v631, %v630
      %v639 = vpack.c.bf16 %v633, %v632
      %v640 = vpack.c.bf16 %v635, %v634
      %v641 = vpack.c.bf16 %v637, %v636
      %v642 = vld [vmem:[%s1] sm:$0x3]
      %v643 = vld [vmem:[%s605 + $0x1] sm:$0xff]
      %v644 = vld [vmem:[%s605 + $0x11] sm:$0xff]
      %v645 = vld [vmem:[%s605 + $0x21] sm:$0xff]
      %v646 = vld [vmem:[%s605 + $0x31] sm:$0xff]
      %v647 = vld [vmem:[%s605 + $0x41] sm:$0xff]
      %v648 = vld [vmem:[%s605 + $0x51] sm:$0xff]
      %v649 = vld [vmem:[%s605 + $0x61] sm:$0xff]
      %v650 = vld [vmem:[%s605 + $0x71] sm:$0xff]
      %v651 = vpack.c.bf16 %v644, %v643
      %v652 = vpack.c.bf16 %v646, %v645
      %v653 = vpack.c.bf16 %v648, %v647
      %v654 = vpack.c.bf16 %v650, %v649
      %s655 = scalar_lea.vmem %s1, 2
      %v656 = vld [vmem:[%s655] sm:$0x3]
      %vm657 = vcmask 31744
      %v659 = vsel %vm657, %v651, 0
      %v662 = vsel %vm657, %v652, 0
      %v665 = vsel %vm657, %v653, 0
      %v668 = vsel %vm657, %v654, 0
      %vm670 = vcmask 1041408
      %v672 = vsel %vm670, %v656, 0
      %674 = vmatprep.subr.bf16.mxu0 0
      %675 = vmatpush1.bf16.msra.mxu0 %v672
      %676 = vmatprep.subr.bf16.mxu0 0
      %677 = vmatpush1.bf16.msra.mxu0 0
      %678 = vmatprep.subr.bf16.mxu0 0
      %679 = vmatpush1.bf16.msra.mxu0 0
      %680 = vmatprep.subr.bf16.mxu0 0
      %681 = vmatpush1.bf16.msra.mxu0 0
      %682 = vmatprep.subr.bf16.mxu0 0
      %683 = vmatpush1.bf16.msra.mxu0 0
      %684 = vmatprep.subr.bf16.mxu0 0
      %685 = vmatpush1.bf16.msra.mxu0 0
      %686 = vmatprep.subr.bf16.mxu0 0
      %687 = vmatpush1.bf16.msra.mxu0 0
      %688 = vmatprep.subr.bf16.mxu0 0
      %689 = vmatpush1.bf16.msra.mxu0 0
      %690 = vmatprep.subr.bf16.mxu0 0
      %691 = vmatpush1.bf16.msra.mxu0 0
      %692 = vmatprep.subr.bf16.mxu0 0
      %693 = vmatpush1.bf16.msra.mxu0 0
      %694 = vmatprep.subr.bf16.mxu0 0
      %695 = vmatpush1.bf16.msra.mxu0 0
      %696 = vmatprep.subr.bf16.mxu0 0
      %697 = vmatpush1.bf16.msra.mxu0 0
      %698 = vmatprep.subr.bf16.mxu0 0
      %699 = vmatpush1.bf16.msra.mxu0 0
      %700 = vmatprep.subr.bf16.mxu0 0
      %701 = vmatpush1.bf16.msra.mxu0 0
      %702 = vmatprep.subr.bf16.mxu0 0
      %703 = vmatpush1.bf16.msra.mxu0 0
      %704 = vmatprep.subr.bf16.mxu0 0
      %705 = vmatpush1.bf16.msra.mxu0 0
      %706 = vmatprep.mubr.bf16.mxu0 0
      %707 = vmatmul.mubr.bf16.gmra.mrb[0].mxu0 %v659
      %v708 = vpop.f32.mrb[0].mxu0
      %v709 = vadd.f32 0.0, %v708
      %v710 = vpop.f32.mrb[0].mxu0
      %v711 = vpop.f32.mrb[0].mxu0
      %v712 = vadd.f32 0.0, %v711
      %v713 = vpop.f32.mrb[0].mxu0
      %714 = vmatprep.mubr.bf16.mxu0 0
      %715 = vmatmul.mubr.bf16.gmra.mrb[0].mxu0 %v662
      %v716 = vpop.f32.mrb[0].mxu0
      %v717 = vadd.f32 0.0, %v716
      %v718 = vpop.f32.mrb[0].mxu0
      %v719 = vpop.f32.mrb[0].mxu0
      %v720 = vadd.f32 0.0, %v719
      %v721 = vpop.f32.mrb[0].mxu0
      %722 = vmatprep.mubr.bf16.mxu0 0
      %723 = vmatmul.mubr.bf16.gmra.mrb[0].mxu0 %v665
      %v724 = vpop.f32.mrb[0].mxu0
      %v725 = vadd.f32 0.0, %v724
      %v726 = vpop.f32.mrb[0].mxu0
      %v727 = vpop.f32.mrb[0].mxu0
      %v728 = vadd.f32 0.0, %v727
      %v729 = vpop.f32.mrb[0].mxu0
      %730 = vmatprep.mubr.bf16.mxu0 0
      %731 = vmatmul.mubr.bf16.gmra.mrb[0].mxu0 %v668
      %v732 = vpop.f32.mrb[0].mxu0
      %v733 = vadd.f32 0.0, %v732
      %v734 = vpop.f32.mrb[0].mxu0
      %v735 = vpop.f32.mrb[0].mxu0
      %v736 = vadd.f32 0.0, %v735
      %v737 = vpop.f32.mrb[0].mxu0
      %738 = vdwg.mxu0
      %v740 = vsel %vm657, %v638, 0
      %v743 = vsel %vm657, %v639, 0
      %v746 = vsel %vm657, %v640, 0
      %v749 = vsel %vm657, %v641, 0
      %v752 = vsel %vm670, %v642, 0
      %754 = vmatprep.subr.bf16.mxu0 0
      %755 = vmatpush1.bf16.msra.mxu0 %v752
      %756 = vmatprep.subr.bf16.mxu0 0
      %757 = vmatpush1.bf16.msra.mxu0 0
      %758 = vmatprep.subr.bf16.mxu0 0
      %759 = vmatpush1.bf16.msra.mxu0 0
      %760 = vmatprep.subr.bf16.mxu0 0
      %761 = vmatpush1.bf16.msra.mxu0 0
      %762 = vmatprep.subr.bf16.mxu0 0
      %763 = vmatpush1.bf16.msra.mxu0 0
      %764 = vmatprep.subr.bf16.mxu0 0
      %765 = vmatpush1.bf16.msra.mxu0 0
      %766 = vmatprep.subr.bf16.mxu0 0
      %767 = vmatpush1.bf16.msra.mxu0 0
      %768 = vmatprep.subr.bf16.mxu0 0
      %769 = vmatpush1.bf16.msra.mxu0 0
      %770 = vmatprep.subr.bf16.mxu0 0
      %771 = vmatpush1.bf16.msra.mxu0 0
      %772 = vmatprep.subr.bf16.mxu0 0
      %773 = vmatpush1.bf16.msra.mxu0 0
      %774 = vmatprep.subr.bf16.mxu0 0
      %775 = vmatpush1.bf16.msra.mxu0 0
      %776 = vmatprep.subr.bf16.mxu0 0
      %777 = vmatpush1.bf16.msra.mxu0 0
      %778 = vmatprep.subr.bf16.mxu0 0
      %779 = vmatpush1.bf16.msra.mxu0 0
      %780 = vmatprep.subr.bf16.mxu0 0
      %781 = vmatpush1.bf16.msra.mxu0 0
      %782 = vmatprep.subr.bf16.mxu0 0
      %783 = vmatpush1.bf16.msra.mxu0 0
      %784 = vmatprep.subr.bf16.mxu0 0
      %785 = vmatpush1.bf16.msra.mxu0 0
      %786 = vmatprep.mubr.bf16.mxu0 0
      %787 = vmatmul.mubr.bf16.gmra.mrb[0].mxu0 %v740
      %v788 = vpop.f32.mrb[0].mxu0
      %v789 = vadd.f32 %v709, %v788
      %v790 = vpop.f32.mrb[0].mxu0
      %v791 = vpop.f32.mrb[0].mxu0
      %v792 = vadd.f32 %v712, %v791
      %v793 = vpop.f32.mrb[0].mxu0
      %794 = vmatprep.mubr.bf16.mxu0 0
      %795 = vmatmul.mubr.bf16.gmra.mrb[0].mxu0 %v743
      %v796 = vpop.f32.mrb[0].mxu0
      %v797 = vadd.f32 %v717, %v796
      %v798 = vpop.f32.mrb[0].mxu0
      %v799 = vpop.f32.mrb[0].mxu0
      %v800 = vadd.f32 %v720, %v799
      %v801 = vpop.f32.mrb[0].mxu0
      %802 = vmatprep.mubr.bf16.mxu0 0
      %803 = vmatmul.mubr.bf16.gmra.mrb[0].mxu0 %v746
      %v804 = vpop.f32.mrb[0].mxu0
      %v805 = vadd.f32 %v725, %v804
      %v806 = vpop.f32.mrb[0].mxu0
      %v807 = vpop.f32.mrb[0].mxu0
      %v808 = vadd.f32 %v728, %v807
      %v809 = vpop.f32.mrb[0].mxu0
      %810 = vmatprep.mubr.bf16.mxu0 0
      %811 = vmatmul.mubr.bf16.gmra.mrb[0].mxu0 %v749
      %v812 = vpop.f32.mrb[0].mxu0
      %v813 = vadd.f32 %v733, %v812
      %v814 = vpop.f32.mrb[0].mxu0
      %v815 = vpop.f32.mrb[0].mxu0
      %v816 = vadd.f32 %v736, %v815
      %v817 = vpop.f32.mrb[0].mxu0
      %818 = vdwg.mxu0
      %s819 = scalar_lea.vmem %s605, 16
      %v820 = vld [vmem:[%s819] sm:$0xff]
      %v821 = vld [vmem:[%s819 + $0x10] sm:$0xff]
      %v822 = vld [vmem:[%s819 + $0x20] sm:$0xff]
      %v823 = vld [vmem:[%s819 + $0x30] sm:$0xff]
      %v824 = vld [vmem:[%s819 + $0x40] sm:$0xff]
      %v825 = vld [vmem:[%s819 + $0x50] sm:$0xff]
      %v826 = vld [vmem:[%s819 + $0x60] sm:$0xff]
      %v827 = vld [vmem:[%s819 + $0x70] sm:$0xff]
      %v828 = vpack.c.bf16 %v821, %v820
      %v829 = vpack.c.bf16 %v823, %v822
      %v830 = vpack.c.bf16 %v825, %v824
      %v831 = vpack.c.bf16 %v827, %v826
      %s832 = scalar_lea.vmem %s1, 4
      %v833 = vld [vmem:[%s832] sm:$0x3]
      %v835 = vsel %vm657, %v828, 0
      %v838 = vsel %vm657, %v829, 0
      %v841 = vsel %vm657, %v830, 0
      %v844 = vsel %vm657, %v831, 0
      %v847 = vsel %vm670, %v833, 0
      %849 = vmatprep.subr.bf16.mxu0 0
      %850 = vmatpush1.bf16.msra.mxu0 %v847
      %851 = vmatprep.subr.bf16.mxu0 0
      %852 = vmatpush1.bf16.msra.mxu0 0
      %853 = vmatprep.subr.bf16.mxu0 0
      %854 = vmatpush1.bf16.msra.mxu0 0
      %855 = vmatprep.subr.bf16.mxu0 0
      %856 = vmatpush1.bf16.msra.mxu0 0
      %857 = vmatprep.subr.bf16.mxu0 0
      %858 = vmatpush1.bf16.msra.mxu0 0
      %859 = vmatprep.subr.bf16.mxu0 0
      %860 = vmatpush1.bf16.msra.mxu0 0
      %861 = vmatprep.subr.bf16.mxu0 0
      %862 = vmatpush1.bf16.msra.mxu0 0
      %863 = vmatprep.subr.bf16.mxu0 0
      %864 = vmatpush1.bf16.msra.mxu0 0
      %865 = vmatprep.subr.bf16.mxu0 0
      %866 = vmatpush1.bf16.msra.mxu0 0
      %867 = vmatprep.subr.bf16.mxu0 0
      %868 = vmatpush1.bf16.msra.mxu0 0
      %869 = vmatprep.subr.bf16.mxu0 0
      %870 = vmatpush1.bf16.msra.mxu0 0
      %871 = vmatprep.subr.bf16.mxu0 0
      %872 = vmatpush1.bf16.msra.mxu0 0
      %873 = vmatprep.subr.bf16.mxu0 0
      %874 = vmatpush1.bf16.msra.mxu0 0
      %875 = vmatprep.subr.bf16.mxu0 0
      %876 = vmatpush1.bf16.msra.mxu0 0
      %877 = vmatprep.subr.bf16.mxu0 0
      %878 = vmatpush1.bf16.msra.mxu0 0
      %879 = vmatprep.subr.bf16.mxu0 0
      %880 = vmatpush1.bf16.msra.mxu0 0
      %881 = vmatprep.mubr.bf16.mxu0 0
      %882 = vmatmul.mubr.bf16.gmra.mrb[0].mxu0 %v835
      %v883 = vpop.f32.mrb[0].mxu0
      %v884 = vadd.f32 0.0, %v883
      %v885 = vpop.f32.mrb[0].mxu0
      %v886 = vpop.f32.mrb[0].mxu0
      %v887 = vadd.f32 0.0, %v886
      %v888 = vpop.f32.mrb[0].mxu0
      %889 = vmatprep.mubr.bf16.mxu0 0
      %890 = vmatmul.mubr.bf16.gmra.mrb[0].mxu0 %v838
      %v891 = vpop.f32.mrb[0].mxu0
      %v892 = vadd.f32 0.0, %v891
      %v893 = vpop.f32.mrb[0].mxu0
      %v894 = vpop.f32.mrb[0].mxu0
      %v895 = vadd.f32 0.0, %v894
      %v896 = vpop.f32.mrb[0].mxu0
      %897 = vmatprep.mubr.bf16.mxu0 0
      %898 = vmatmul.mubr.bf16.gmra.mrb[0].mxu0 %v841
      %v899 = vpop.f32.mrb[0].mxu0
      %v900 = vadd.f32 0.0, %v899
      %v901 = vpop.f32.mrb[0].mxu0
      %v902 = vpop.f32.mrb[0].mxu0
      %v903 = vadd.f32 0.0, %v902
      %v904 = vpop.f32.mrb[0].mxu0
      %905 = vmatprep.mubr.bf16.mxu0 0
      %906 = vmatmul.mubr.bf16.gmra.mrb[0].mxu0 %v844
      %v907 = vpop.f32.mrb[0].mxu0
      %v908 = vadd.f32 0.0, %v907
      %v909 = vpop.f32.mrb[0].mxu0
      %v910 = vpop.f32.mrb[0].mxu0
      %v911 = vadd.f32 0.0, %v910
      %v912 = vpop.f32.mrb[0].mxu0
      %913 = vdwg.mxu0
      %v914 = vadd.f32 %v789, %v884
      %v915 = vadd.f32 %v792, %v887
      %v916 = vadd.f32 %v797, %v892
      %v917 = vadd.f32 %v800, %v895
      %v918 = vadd.f32 %v805, %v900
      %v919 = vadd.f32 %v808, %v903
      %v920 = vadd.f32 %v813, %v908
      %v921 = vadd.f32 %v816, %v911
      %v922 = vld [vmem:[%s819 + $0x1] sm:$0xff]
      %v923 = vld [vmem:[%s819 + $0x11] sm:$0xff]
      %v924 = vld [vmem:[%s819 + $0x21] sm:$0xff]
      %v925 = vld [vmem:[%s819 + $0x31] sm:$0xff]
      %v926 = vld [vmem:[%s819 + $0x41] sm:$0xff]
      %v927 = vld [vmem:[%s819 + $0x51] sm:$0xff]
      %v928 = vld [vmem:[%s819 + $0x61] sm:$0xff]
      %v929 = vld [vmem:[%s819 + $0x71] sm:$0xff]
      %v930 = vpack.c.bf16 %v923, %v922
      %v931 = vpack.c.bf16 %v925, %v924
      %v932 = vpack.c.bf16 %v927, %v926
      %v933 = vpack.c.bf16 %v929, %v928
      %s934 = scalar_lea.vmem %s1, 6
      %v935 = vld [vmem:[%s934] sm:$0x3]
      %v937 = vsel %vm657, %v930, 0
      %v940 = vsel %vm657, %v931, 0
      %v943 = vsel %vm657, %v932, 0
      %v946 = vsel %vm657, %v933, 0
      %v949 = vsel %vm670, %v935, 0
      %951 = vmatprep.subr.bf16.mxu0 0
      %952 = vmatpush1.bf16.msra.mxu0 %v949
      %953 = vmatprep.subr.bf16.mxu0 0
      %954 = vmatpush1.bf16.msra.mxu0 0
      %955 = vmatprep.subr.bf16.mxu0 0
      %956 = vmatpush1.bf16.msra.mxu0 0
      %957 = vmatprep.subr.bf16.mxu0 0
      %958 = vmatpush1.bf16.msra.mxu0 0
      %959 = vmatprep.subr.bf16.mxu0 0
      %960 = vmatpush1.bf16.msra.mxu0 0
      %961 = vmatprep.subr.bf16.mxu0 0
      %962 = vmatpush1.bf16.msra.mxu0 0
      %963 = vmatprep.subr.bf16.mxu0 0
      %964 = vmatpush1.bf16.msra.mxu0 0
      %965 = vmatprep.subr.bf16.mxu0 0
      %966 = vmatpush1.bf16.msra.mxu0 0
      %967 = vmatprep.subr.bf16.mxu0 0
      %968 = vmatpush1.bf16.msra.mxu0 0
      %969 = vmatprep.subr.bf16.mxu0 0
      %970 = vmatpush1.bf16.msra.mxu0 0
      %971 = vmatprep.subr.bf16.mxu0 0
      %972 = vmatpush1.bf16.msra.mxu0 0
      %973 = vmatprep.subr.bf16.mxu0 0
      %974 = vmatpush1.bf16.msra.mxu0 0
      %975 = vmatprep.subr.bf16.mxu0 0
      %976 = vmatpush1.bf16.msra.mxu0 0
      %977 = vmatprep.subr.bf16.mxu0 0
      %978 = vmatpush1.bf16.msra.mxu0 0
      %979 = vmatprep.subr.bf16.mxu0 0
      %980 = vmatpush1.bf16.msra.mxu0 0
      %981 = vmatprep.subr.bf16.mxu0 0
      %982 = vmatpush1.bf16.msra.mxu0 0
      %983 = vmatprep.mubr.bf16.mxu0 0
      %984 = vmatmul.mubr.bf16.gmra.mrb[0].mxu0 %v937
      %v985 = vpop.f32.mrb[0].mxu0
      %v986 = vadd.f32 0.0, %v985
      %v987 = vpop.f32.mrb[0].mxu0
      %v988 = vpop.f32.mrb[0].mxu0
      %v989 = vadd.f32 0.0, %v988
      %v990 = vpop.f32.mrb[0].mxu0
      %991 = vmatprep.mubr.bf16.mxu0 0
      %992 = vmatmul.mubr.bf16.gmra.mrb[0].mxu0 %v940
      %v993 = vpop.f32.mrb[0].mxu0
      %v994 = vadd.f32 0.0, %v993
      %v995 = vpop.f32.mrb[0].mxu0
      %v996 = vpop.f32.mrb[0].mxu0
      %v997 = vadd.f32 0.0, %v996
      %v998 = vpop.f32.mrb[0].mxu0
      %999 = vmatprep.mubr.bf16.mxu0 0
      %1000 = vmatmul.mubr.bf16.gmra.mrb[0].mxu0 %v943
      %v1001 = vpop.f32.mrb[0].mxu0
      %v1002 = vadd.f32 0.0, %v1001
      %v1003 = vpop.f32.mrb[0].mxu0
      %v1004 = vpop.f32.mrb[0].mxu0
      %v1005 = vadd.f32 0.0, %v1004
      %v1006 = vpop.f32.mrb[0].mxu0
      %1007 = vmatprep.mubr.bf16.mxu0 0
      %1008 = vmatmul.mubr.bf16.gmra.mrb[0].mxu0 %v946
      %v1009 = vpop.f32.mrb[0].mxu0
      %v1010 = vadd.f32 0.0, %v1009
      %v1011 = vpop.f32.mrb[0].mxu0
      %v1012 = vpop.f32.mrb[0].mxu0
      %v1013 = vadd.f32 0.0, %v1012
      %v1014 = vpop.f32.mrb[0].mxu0
      %1015 = vdwg.mxu0
      %v1016 = vadd.f32 %v914, %v986
      %v1017 = vadd.f32 %v915, %v989
      %v1018 = vadd.f32 %v916, %v994
      %v1019 = vadd.f32 %v917, %v997
      %v1020 = vadd.f32 %v918, %v1002
      %v1021 = vadd.f32 %v919, %v1005
      %v1022 = vadd.f32 %v920, %v1010
      %v1023 = vadd.f32 %v921, %v1013
      %v1024 = vld [vmem:[%s2] sm:$0x1]
      %v1026 = vlaneseq
      %v1027 = vshrl.u32 %v1026, 7
      %v1028 = vsub.s32 0, %v1027
      %v1029 = vrot.slane %v1024, %v1028
      %v1031 = vadd.f32 %v1016, %v1029
      %v1032 = vadd.f32 %v1017, %v1029
      %v1033 = vadd.f32 %v1018, %v1029
      %v1034 = vadd.f32 %v1019, %v1029
      %v1035 = vadd.f32 %v1020, %v1029
      %v1036 = vadd.f32 %v1021, %v1029
      %v1037 = vadd.f32 %v1022, %v1029
      %v1038 = vadd.f32 %v1023, %v1029
      %v1039 = vmax.f32 %v1031, 0.0
      %v1040 = vmax.f32 %v1032, 0.0
      %v1041 = vmax.f32 %v1033, 0.0
      %v1042 = vmax.f32 %v1034, 0.0
      %v1043 = vmax.f32 %v1035, 0.0
      %v1044 = vmax.f32 %v1036, 0.0
      %v1045 = vmax.f32 %v1037, 0.0
      %v1046 = vmax.f32 %v1038, 0.0
      %v1047 = vpack.c.bf16 %v1040, %v1039
      %v1048 = vpack.c.bf16 %v1042, %v1041
      %v1049 = vpack.c.bf16 %v1044, %v1043
      %v1050 = vpack.c.bf16 %v1046, %v1045
      %v1055 = vunpack.c.l.b16 %v1047
      %v1056 = vunpack.c.h.b16 %v1047
      %v1057 = vunpack.c.l.b16 %v1048
      %v1058 = vunpack.c.h.b16 %v1048
      %v1059 = vunpack.c.l.b16 %v1049
      %v1060 = vunpack.c.h.b16 %v1049
      %v1061 = vunpack.c.l.b16 %v1050
      %v1062 = vunpack.c.h.b16 %v1050
      %v1063 = vpack.c.b16 %v1055, %v1055
      %v1064 = vpack.c.b16 %v1056, %v1056
      %v1065 = vpack.c.b16 %v1057, %v1057
      %v1066 = vpack.c.b16 %v1058, %v1058
      %v1067 = vpack.c.b16 %v1059, %v1059
      %v1068 = vpack.c.b16 %v1060, %v1060
      %v1069 = vpack.c.b16 %v1061, %v1061
      %v1070 = vpack.c.b16 %v1062, %v1062
      %vm1079 = vcmask 257024
      %1080 = vst.msk [vmem:[%s616] sm:$0xf] %vm1079, %v1063
      %1081 = vst.msk [vmem:[%s616 + $0x4] sm:$0xf] %vm1079, %v1064
      %1082 = vst.msk [vmem:[%s616 + $0x8] sm:$0xf] %vm1079, %v1065
      %1083 = vst.msk [vmem:[%s616 + $0xc] sm:$0xf] %vm1079, %v1066
      %1084 = vst.msk [vmem:[%s616 + $0x10] sm:$0xf] %vm1079, %v1067
      %1085 = vst.msk [vmem:[%s616 + $0x14] sm:$0xf] %vm1079, %v1068
      %1086 = vst.msk [vmem:[%s616 + $0x18] sm:$0xf] %vm1079, %v1069
      %1087 = vst.msk [vmem:[%s616 + $0x1c] sm:$0xf] %vm1079, %v1070
      %vm1088 = vcmask 261120
      %1089 = vst.msk [vmem:[#allocation2] sm:$0xff] %vm1088, %v1039
      %1090 = vst.msk [vmem:[#allocation2 + $0x8] sm:$0xff] %vm1088, %v1040
      %1091 = vst.msk [vmem:[#allocation2 + $0x10] sm:$0xff] %vm1088, %v1041
      %1092 = vst.msk [vmem:[#allocation2 + $0x18] sm:$0xff] %vm1088, %v1042
      %1093 = vst.msk [vmem:[#allocation2 + $0x20] sm:$0xff] %vm1088, %v1043
      %1094 = vst.msk [vmem:[#allocation2 + $0x28] sm:$0xff] %vm1088, %v1044
      %1095 = vst.msk [vmem:[#allocation2 + $0x30] sm:$0xff] %vm1088, %v1045
      %1096 = vst.msk [vmem:[#allocation2 + $0x38] sm:$0xff] %vm1088, %v1046
      %1097 = vst [vmem:[#allocation3] sm:$0x1f] 0.0
      %1098 = vst [vmem:[#allocation3 + $0x8] sm:$0x1f] 0.0
      %1099 = vst [vmem:[#allocation3 + $0x10] sm:$0x1f] 0.0
      %1100 = vst [vmem:[#allocation3 + $0x18] sm:$0x1f] 0.0
      %1101 = vst [vmem:[#allocation3 + $0x20] sm:$0x1f] 0.0
      %v1102 = vld [vmem:[#allocation2] ss:$2 sm:$0xff]
      %s1103 = scalar_lea.vmem [#allocation2], 16
      %v1104 = vld [vmem:[%s1103] ss:$2 sm:$0xff]
      %s1105 = scalar_lea.vmem [#allocation2], 32
      %v1106 = vld [vmem:[%s1105] ss:$2 sm:$0xff]
      %s1107 = scalar_lea.vmem [#allocation2], 48
      %v1108 = vld [vmem:[%s1107] ss:$2 sm:$0xff]
      %1113 = vrot.lane.b32.xlu0 %v1102, 96
      %v1114 = vpop.permute.xlu0 %1113
      %1115 = vrot.lane.b32.xlu0 %v1104, 96
      %v1116 = vpop.permute.xlu0 %1115
      %1117 = vrot.lane.b32.xlu0 %v1106, 96
      %v1118 = vpop.permute.xlu0 %1117
      %1119 = vrot.lane.b32.xlu0 %v1108, 96
      %v1120 = vpop.permute.xlu0 %1119
      %vm1125 = vcmask 1044224
      %1126 = vst.msk [vmem:[#allocation3] sm:$0xf] %vm1125, %v1114
      %1127 = vst.msk [vmem:[#allocation3 + $0x8] sm:$0xf] %vm1125, %v1116
      %1128 = vst.msk [vmem:[#allocation3 + $0x10] sm:$0xf] %vm1125, %v1118
      %1129 = vst.msk [vmem:[#allocation3 + $0x18] sm:$0xf] %vm1125, %v1120
      %s1130 = scalar_lea.vmem [#allocation2], 1
      %v1131 = vld [vmem:[%s1130] ss:$2 sm:$0xff]
      %s1132 = scalar_lea.vmem [#allocation2], 17
      %v1133 = vld [vmem:[%s1132] ss:$2 sm:$0xff]
      %s1134 = scalar_lea.vmem [#allocation2], 33
      %v1135 = vld [vmem:[%s1134] ss:$2 sm:$0xff]
      %s1136 = scalar_lea.vmem [#allocation2], 49
      %v1137 = vld [vmem:[%s1136] ss:$2 sm:$0xff]
      %1142 = vrot.lane.b32.xlu0 %v1131, 64
      %v1143 = vpop.permute.xlu0 %1142
      %1144 = vrot.lane.b32.xlu0 %v1133, 64
      %v1145 = vpop.permute.xlu0 %1144
      %1146 = vrot.lane.b32.xlu0 %v1135, 64
      %v1147 = vpop.permute.xlu0 %1146
      %1148 = vrot.lane.b32.xlu0 %v1137, 64
      %v1149 = vpop.permute.xlu0 %1148
      %vm1154 = vcmask 781824
      %1155 = vst.msk [vmem:[#allocation3 + $0x1] sm:$0xf] %vm1154, %v1143
      %1156 = vst.msk [vmem:[#allocation3 + $0x9] sm:$0xf] %vm1154, %v1145
      %1157 = vst.msk [vmem:[#allocation3 + $0x11] sm:$0xf] %vm1154, %v1147
      %1158 = vst.msk [vmem:[#allocation3 + $0x19] sm:$0xf] %vm1154, %v1149
      %v1159 = vld [vmem:[#allocation2] ss:$2 sm:$0xff]
      %v1160 = vld [vmem:[%s1103] ss:$2 sm:$0xff]
      %v1161 = vld [vmem:[%s1105] ss:$2 sm:$0xff]
      %v1162 = vld [vmem:[%s1107] ss:$2 sm:$0xff]
      %v1167 = vcombine.high %v1159, %v1159
      %v1168 = vcombine.high %v1160, %v1160
      %v1169 = vcombine.high %v1161, %v1161
      %v1170 = vcombine.high %v1162, %v1162
      %1171 = vrot.lane.b32.xlu0 %v1167, 32
      %v1172 = vpop.permute.xlu0 %1171
      %1173 = vrot.lane.b32.xlu0 %v1168, 32
      %v1174 = vpop.permute.xlu0 %1173
      %1175 = vrot.lane.b32.xlu0 %v1169, 32
      %v1176 = vpop.permute.xlu0 %1175
      %1177 = vrot.lane.b32.xlu0 %v1170, 32
      %v1178 = vpop.permute.xlu0 %1177
      %s1183 = scalar_lea.vmem [#allocation3], 8
      %vm1184 = vcmask 519424
      %1185 = vst.msk [vmem:[%s1183] sm:$0xf] %vm1184, %v1172
      %1186 = vst.msk [vmem:[%s1183 + $0x8] sm:$0xf] %vm1184, %v1174
      %1187 = vst.msk [vmem:[%s1183 + $0x10] sm:$0xf] %vm1184, %v1176
      %1188 = vst.msk [vmem:[%s1183 + $0x18] sm:$0xf] %vm1184, %v1178
      %v1189 = vld [vmem:[%s1130] ss:$2 sm:$0xff]
      %v1190 = vld [vmem:[%s1132] ss:$2 sm:$0xff]
      %v1191 = vld [vmem:[%s1134] ss:$2 sm:$0xff]
      %v1192 = vld [vmem:[%s1136] ss:$2 sm:$0xff]
      %v1197 = vcombine.high %v1189, %v1189
      %v1198 = vcombine.high %v1190, %v1190
      %v1199 = vcombine.high %v1191, %v1191
      %v1200 = vcombine.high %v1192, %v1192
      %1205 = vst.msk [vmem:[%s1183 + $0x1] sm:$0xf] %vm1079, %v1197
      %1206 = vst.msk [vmem:[%s1183 + $0x9] sm:$0xf] %vm1079, %v1198
      %1207 = vst.msk [vmem:[%s1183 + $0x11] sm:$0xf] %vm1079, %v1199
      %1208 = vst.msk [vmem:[%s1183 + $0x19] sm:$0xf] %vm1079, %v1200
      %v1209 = vld [vmem:[#allocation3] sm:$0xf]
      %v1210 = vld [vmem:[#allocation3 + $0x8] sm:$0xf]
      %v1211 = vld [vmem:[#allocation3 + $0x10] sm:$0xf]
      %v1212 = vld [vmem:[#allocation3 + $0x18] sm:$0xf]
      %v1217 = vcombine.low %v1209, %v1210
      %v1218 = vcombine.low %v1211, %v1212
      %v1221 = vpack.c.bf16 %v1218, %v1217
      %v1222 = vld [vmem:[%s3] sm:$0xf]
      %v1223 = vld [vmem:[%s3 + $0x4] sm:$0xf]
      %v1224 = vld [vmem:[%s3 + $0x8] sm:$0xf]
      %v1225 = vld [vmem:[%s3 + $0xc] sm:$0xf]
      %v1226 = vld [vmem:[%s3 + $0x10] sm:$0xf]
      %v1227 = vld [vmem:[%s3 + $0x14] sm:$0xf]
      %v1228 = vld [vmem:[%s3 + $0x18] sm:$0xf]
      %v1229 = vld [vmem:[%s3 + $0x1c] sm:$0xf]
      %v1230 = vld [vmem:[%s3 + $0x20] sm:$0xf]
      %v1231 = vld [vmem:[%s3 + $0x24] sm:$0xf]
      %v1232 = vld [vmem:[%s3 + $0x28] sm:$0xf]
      %v1233 = vld [vmem:[%s3 + $0x2c] sm:$0xf]
      %v1234 = vld [vmem:[%s3 + $0x30] sm:$0xf]
      %v1235 = vld [vmem:[%s3 + $0x34] sm:$0xf]
      %v1236 = vld [vmem:[%s3 + $0x38] sm:$0xf]
      %v1237 = vld [vmem:[%s3 + $0x3c] sm:$0xf]
      %v1238 = vld [vmem:[#allocation3 + $0x1] sm:$0xf]
      %v1239 = vld [vmem:[#allocation3 + $0x9] sm:$0xf]
      %v1240 = vld [vmem:[#allocation3 + $0x11] sm:$0xf]
      %v1241 = vld [vmem:[#allocation3 + $0x19] sm:$0xf]
      %v1246 = vcombine.low %v1238, %v1239
      %v1247 = vcombine.low %v1240, %v1241
      %v1250 = vpack.c.bf16 %v1247, %v1246
      %s1251 = scalar_lea.vmem %s3, 64
      %v1252 = vld [vmem:[%s1251] sm:$0xf]
      %v1253 = vld [vmem:[%s1251 + $0x4] sm:$0xf]
      %v1254 = vld [vmem:[%s1251 + $0x8] sm:$0xf]
      %v1255 = vld [vmem:[%s1251 + $0xc] sm:$0xf]
      %v1256 = vld [vmem:[%s1251 + $0x10] sm:$0xf]
      %v1257 = vld [vmem:[%s1251 + $0x14] sm:$0xf]
      %v1258 = vld [vmem:[%s1251 + $0x18] sm:$0xf]
      %v1259 = vld [vmem:[%s1251 + $0x1c] sm:$0xf]
      %v1260 = vld [vmem:[%s1251 + $0x20] sm:$0xf]
      %v1261 = vld [vmem:[%s1251 + $0x24] sm:$0xf]
      %v1262 = vld [vmem:[%s1251 + $0x28] sm:$0xf]
      %v1263 = vld [vmem:[%s1251 + $0x2c] sm:$0xf]
      %v1264 = vld [vmem:[%s1251 + $0x30] sm:$0xf]
      %v1265 = vld [vmem:[%s1251 + $0x34] sm:$0xf]
      %v1266 = vld [vmem:[%s1251 + $0x38] sm:$0xf]
      %v1267 = vld [vmem:[%s1251 + $0x3c] sm:$0xf]
      %v1284 = vunpack.c.l.b16 %v1252
      %v1285 = vunpack.c.l.b16 %v1253
      %v1286 = vunpack.c.l.b16 %v1254
      %v1287 = vunpack.c.l.b16 %v1255
      %v1288 = vunpack.c.l.b16 %v1256
      %v1289 = vunpack.c.l.b16 %v1257
      %v1290 = vunpack.c.l.b16 %v1258
      %v1291 = vunpack.c.l.b16 %v1259
      %v1292 = vunpack.c.l.b16 %v1260
      %v1293 = vunpack.c.l.b16 %v1261
      %v1294 = vunpack.c.l.b16 %v1262
      %v1295 = vunpack.c.l.b16 %v1263
      %v1296 = vunpack.c.l.b16 %v1264
      %v1297 = vunpack.c.l.b16 %v1265
      %v1298 = vunpack.c.l.b16 %v1266
      %v1299 = vunpack.c.l.b16 %v1267
      %v1300 = vpack.c.b16 %v1285, %v1284
      %v1301 = vpack.c.b16 %v1287, %v1286
      %v1302 = vpack.c.b16 %v1289, %v1288
      %v1303 = vpack.c.b16 %v1291, %v1290
      %v1304 = vpack.c.b16 %v1293, %v1292
      %v1305 = vpack.c.b16 %v1295, %v1294
      %v1306 = vpack.c.b16 %v1297, %v1296
      %v1307 = vpack.c.b16 %v1299, %v1298
      %1316 = vmatprep.subr.bf16.mxu0 0
      %1317 = vmatpush1.bf16.msra.mxu0 %v1300
      %1318 = vmatprep.subr.bf16.mxu0 0
      %1319 = vmatpush1.bf16.msra.mxu0 %v1301
      %1320 = vmatprep.subr.bf16.mxu0 0
      %1321 = vmatpush1.bf16.msra.mxu0 %v1302
      %1322 = vmatprep.subr.bf16.mxu0 0
      %1323 = vmatpush1.bf16.msra.mxu0 %v1303
      %1324 = vmatprep.subr.bf16.mxu0 0
      %1325 = vmatpush1.bf16.msra.mxu0 %v1304
      %1326 = vmatprep.subr.bf16.mxu0 0
      %1327 = vmatpush1.bf16.msra.mxu0 %v1305
      %1328 = vmatprep.subr.bf16.mxu0 0
      %1329 = vmatpush1.bf16.msra.mxu0 %v1306
      %1330 = vmatprep.subr.bf16.mxu0 0
      %1331 = vmatpush1.bf16.msra.mxu0 %v1307
      %1332 = vmatprep.subr.bf16.mxu0 0
      %1333 = vmatpush1.bf16.msra.mxu0 0
      %1334 = vmatprep.subr.bf16.mxu0 0
      %1335 = vmatpush1.bf16.msra.mxu0 0
      %1336 = vmatprep.subr.bf16.mxu0 0
      %1337 = vmatpush1.bf16.msra.mxu0 0
      %1338 = vmatprep.subr.bf16.mxu0 0
      %1339 = vmatpush1.bf16.msra.mxu0 0
      %1340 = vmatprep.subr.bf16.mxu0 0
      %1341 = vmatpush1.bf16.msra.mxu0 0
      %1342 = vmatprep.subr.bf16.mxu0 0
      %1343 = vmatpush1.bf16.msra.mxu0 0
      %1344 = vmatprep.subr.bf16.mxu0 0
      %1345 = vmatpush1.bf16.msra.mxu0 0
      %1346 = vmatprep.subr.bf16.mxu0 0
      %1347 = vmatpush1.bf16.msra.mxu0 0
      %1348 = vmatprep.mubr.bf16.mxu0 0
      %1349 = vmatmul.mubr.bf16.gmra.mrb[0].mxu0 %v1250
      %v1350 = vpop.f32.mrb[0].mxu0
      %v1351 = vadd.f32 0.0, %v1350
      %v1352 = vpop.f32.mrb[0].mxu0
      %v1353 = vpop.f32.mrb[0].mxu0
      %v1354 = vadd.f32 0.0, %v1353
      %v1355 = vpop.f32.mrb[0].mxu0
      %1356 = vdwg.mxu0
      %v1373 = vunpack.c.l.b16 %v1222
      %v1374 = vunpack.c.l.b16 %v1223
      %v1375 = vunpack.c.l.b16 %v1224
      %v1376 = vunpack.c.l.b16 %v1225
      %v1377 = vunpack.c.l.b16 %v1226
      %v1378 = vunpack.c.l.b16 %v1227
      %v1379 = vunpack.c.l.b16 %v1228
      %v1380 = vunpack.c.l.b16 %v1229
      %v1381 = vunpack.c.l.b16 %v1230
      %v1382 = vunpack.c.l.b16 %v1231
      %v1383 = vunpack.c.l.b16 %v1232
      %v1384 = vunpack.c.l.b16 %v1233
      %v1385 = vunpack.c.l.b16 %v1234
      %v1386 = vunpack.c.l.b16 %v1235
      %v1387 = vunpack.c.l.b16 %v1236
      %v1388 = vunpack.c.l.b16 %v1237
      %v1389 = vpack.c.b16 %v1374, %v1373
      %v1390 = vpack.c.b16 %v1376, %v1375
      %v1391 = vpack.c.b16 %v1378, %v1377
      %v1392 = vpack.c.b16 %v1380, %v1379
      %v1393 = vpack.c.b16 %v1382, %v1381
      %v1394 = vpack.c.b16 %v1384, %v1383
      %v1395 = vpack.c.b16 %v1386, %v1385
      %v1396 = vpack.c.b16 %v1388, %v1387
      %1405 = vmatprep.subr.bf16.mxu0 0
      %1406 = vmatpush1.bf16.msra.mxu0 %v1389
      %1407 = vmatprep.subr.bf16.mxu0 0
      %1408 = vmatpush1.bf16.msra.mxu0 %v1390
      %1409 = vmatprep.subr.bf16.mxu0 0
      %1410 = vmatpush1.bf16.msra.mxu0 %v1391
      %1411 = vmatprep.subr.bf16.mxu0 0
      %1412 = vmatpush1.bf16.msra.mxu0 %v1392
      %1413 = vmatprep.subr.bf16.mxu0 0
      %1414 = vmatpush1.bf16.msra.mxu0 %v1393
      %1415 = vmatprep.subr.bf16.mxu0 0
      %1416 = vmatpush1.bf16.msra.mxu0 %v1394
      %1417 = vmatprep.subr.bf16.mxu0 0
      %1418 = vmatpush1.bf16.msra.mxu0 %v1395
      %1419 = vmatprep.subr.bf16.mxu0 0
      %1420 = vmatpush1.bf16.msra.mxu0 %v1396
      %1421 = vmatprep.subr.bf16.mxu0 0
      %1422 = vmatpush1.bf16.msra.mxu0 0
      %1423 = vmatprep.subr.bf16.mxu0 0
      %1424 = vmatpush1.bf16.msra.mxu0 0
      %1425 = vmatprep.subr.bf16.mxu0 0
      %1426 = vmatpush1.bf16.msra.mxu0 0
      %1427 = vmatprep.subr.bf16.mxu0 0
      %1428 = vmatpush1.bf16.msra.mxu0 0
      %1429 = vmatprep.subr.bf16.mxu0 0
      %1430 = vmatpush1.bf16.msra.mxu0 0
      %1431 = vmatprep.subr.bf16.mxu0 0
      %1432 = vmatpush1.bf16.msra.mxu0 0
      %1433 = vmatprep.subr.bf16.mxu0 0
      %1434 = vmatpush1.bf16.msra.mxu0 0
      %1435 = vmatprep.subr.bf16.mxu0 0
      %1436 = vmatpush1.bf16.msra.mxu0 0
      %1437 = vmatprep.mubr.bf16.mxu0 0
      %1438 = vmatmul.mubr.bf16.gmra.mrb[0].mxu0 %v1221
      %v1439 = vpop.f32.mrb[0].mxu0
      %v1440 = vadd.f32 %v1351, %v1439
      %v1441 = vpop.f32.mrb[0].mxu0
      %v1442 = vpop.f32.mrb[0].mxu0
      %v1443 = vadd.f32 %v1354, %v1442
      %v1444 = vpop.f32.mrb[0].mxu0
      %1445 = vdwg.mxu0
      %v1446 = vld [vmem:[%s1183] sm:$0xf]
      %v1447 = vld [vmem:[%s1183 + $0x8] sm:$0xf]
      %v1448 = vld [vmem:[%s1183 + $0x10] sm:$0xf]
      %v1449 = vld [vmem:[%s1183 + $0x18] sm:$0xf]
      %v1454 = vcombine.low %v1446, %v1447
      %v1455 = vcombine.low %v1448, %v1449
      %v1458 = vpack.c.bf16 %v1455, %v1454
      %s1459 = scalar_lea.vmem %s3, 128
      %v1460 = vld [vmem:[%s1459] sm:$0xf]
      %v1461 = vld [vmem:[%s1459 + $0x4] sm:$0xf]
      %v1462 = vld [vmem:[%s1459 + $0x8] sm:$0xf]
      %v1463 = vld [vmem:[%s1459 + $0xc] sm:$0xf]
      %v1464 = vld [vmem:[%s1459 + $0x10] sm:$0xf]
      %v1465 = vld [vmem:[%s1459 + $0x14] sm:$0xf]
      %v1466 = vld [vmem:[%s1459 + $0x18] sm:$0xf]
      %v1467 = vld [vmem:[%s1459 + $0x1c] sm:$0xf]
      %v1468 = vld [vmem:[%s1459 + $0x20] sm:$0xf]
      %v1469 = vld [vmem:[%s1459 + $0x24] sm:$0xf]
      %v1470 = vld [vmem:[%s1459 + $0x28] sm:$0xf]
      %v1471 = vld [vmem:[%s1459 + $0x2c] sm:$0xf]
      %v1472 = vld [vmem:[%s1459 + $0x30] sm:$0xf]
      %v1473 = vld [vmem:[%s1459 + $0x34] sm:$0xf]
      %v1474 = vld [vmem:[%s1459 + $0x38] sm:$0xf]
      %v1475 = vld [vmem:[%s1459 + $0x3c] sm:$0xf]
      %v1492 = vunpack.c.l.b16 %v1460
      %v1493 = vunpack.c.l.b16 %v1461
      %v1494 = vunpack.c.l.b16 %v1462
      %v1495 = vunpack.c.l.b16 %v1463
      %v1496 = vunpack.c.l.b16 %v1464
      %v1497 = vunpack.c.l.b16 %v1465
      %v1498 = vunpack.c.l.b16 %v1466
      %v1499 = vunpack.c.l.b16 %v1467
      %v1500 = vunpack.c.l.b16 %v1468
      %v1501 = vunpack.c.l.b16 %v1469
      %v1502 = vunpack.c.l.b16 %v1470
      %v1503 = vunpack.c.l.b16 %v1471
      %v1504 = vunpack.c.l.b16 %v1472
      %v1505 = vunpack.c.l.b16 %v1473
      %v1506 = vunpack.c.l.b16 %v1474
      %v1507 = vunpack.c.l.b16 %v1475
      %v1508 = vpack.c.b16 %v1493, %v1492
      %v1509 = vpack.c.b16 %v1495, %v1494
      %v1510 = vpack.c.b16 %v1497, %v1496
      %v1511 = vpack.c.b16 %v1499, %v1498
      %v1512 = vpack.c.b16 %v1501, %v1500
      %v1513 = vpack.c.b16 %v1503, %v1502
      %v1514 = vpack.c.b16 %v1505, %v1504
      %v1515 = vpack.c.b16 %v1507, %v1506
      %1524 = vmatprep.subr.bf16.mxu0 0
      %1525 = vmatpush1.bf16.msra.mxu0 %v1508
      %1526 = vmatprep.subr.bf16.mxu0 0
      %1527 = vmatpush1.bf16.msra.mxu0 %v1509
      %1528 = vmatprep.subr.bf16.mxu0 0
      %1529 = vmatpush1.bf16.msra.mxu0 %v1510
      %1530 = vmatprep.subr.bf16.mxu0 0
      %1531 = vmatpush1.bf16.msra.mxu0 %v1511
      %1532 = vmatprep.subr.bf16.mxu0 0
      %1533 = vmatpush1.bf16.msra.mxu0 %v1512
      %1534 = vmatprep.subr.bf16.mxu0 0
      %1535 = vmatpush1.bf16.msra.mxu0 %v1513
      %1536 = vmatprep.subr.bf16.mxu0 0
      %1537 = vmatpush1.bf16.msra.mxu0 %v1514
      %1538 = vmatprep.subr.bf16.mxu0 0
      %1539 = vmatpush1.bf16.msra.mxu0 %v1515
      %1540 = vmatprep.subr.bf16.mxu0 0
      %1541 = vmatpush1.bf16.msra.mxu0 0
      %1542 = vmatprep.subr.bf16.mxu0 0
      %1543 = vmatpush1.bf16.msra.mxu0 0
      %1544 = vmatprep.subr.bf16.mxu0 0
      %1545 = vmatpush1.bf16.msra.mxu0 0
      %1546 = vmatprep.subr.bf16.mxu0 0
      %1547 = vmatpush1.bf16.msra.mxu0 0
      %1548 = vmatprep.subr.bf16.mxu0 0
      %1549 = vmatpush1.bf16.msra.mxu0 0
      %1550 = vmatprep.subr.bf16.mxu0 0
      %1551 = vmatpush1.bf16.msra.mxu0 0
      %1552 = vmatprep.subr.bf16.mxu0 0
      %1553 = vmatpush1.bf16.msra.mxu0 0
      %1554 = vmatprep.subr.bf16.mxu0 0
      %1555 = vmatpush1.bf16.msra.mxu0 0
      %1556 = vmatprep.mubr.bf16.mxu0 0
      %1557 = vmatmul.mubr.bf16.gmra.mrb[0].mxu0 %v1458
      %v1558 = vpop.f32.mrb[0].mxu0
      %v1559 = vadd.f32 0.0, %v1558
      %v1560 = vpop.f32.mrb[0].mxu0
      %v1561 = vpop.f32.mrb[0].mxu0
      %v1562 = vadd.f32 0.0, %v1561
      %v1563 = vpop.f32.mrb[0].mxu0
      %1564 = vdwg.mxu0
      %v1565 = vadd.f32 %v1440, %v1559
      %v1566 = vadd.f32 %v1443, %v1562
      %v1567 = vld [vmem:[%s1183 + $0x1] sm:$0xf]
      %v1568 = vld [vmem:[%s1183 + $0x9] sm:$0xf]
      %v1569 = vld [vmem:[%s1183 + $0x11] sm:$0xf]
      %v1570 = vld [vmem:[%s1183 + $0x19] sm:$0xf]
      %v1575 = vcombine.low %v1567, %v1568
      %v1576 = vcombine.low %v1569, %v1570
      %v1579 = vpack.c.bf16 %v1576, %v1575
      %s1580 = scalar_lea.vmem %s3, 192
      %v1581 = vld [vmem:[%s1580] sm:$0xf]
      %v1582 = vld [vmem:[%s1580 + $0x4] sm:$0xf]
      %v1583 = vld [vmem:[%s1580 + $0x8] sm:$0xf]
      %v1584 = vld [vmem:[%s1580 + $0xc] sm:$0xf]
      %v1585 = vld [vmem:[%s1580 + $0x10] sm:$0xf]
      %v1586 = vld [vmem:[%s1580 + $0x14] sm:$0xf]
      %v1587 = vld [vmem:[%s1580 + $0x18] sm:$0xf]
      %v1588 = vld [vmem:[%s1580 + $0x1c] sm:$0xf]
      %v1589 = vld [vmem:[%s1580 + $0x20] sm:$0xf]
      %v1590 = vld [vmem:[%s1580 + $0x24] sm:$0xf]
      %v1591 = vld [vmem:[%s1580 + $0x28] sm:$0xf]
      %v1592 = vld [vmem:[%s1580 + $0x2c] sm:$0xf]
      %v1593 = vld [vmem:[%s1580 + $0x30] sm:$0xf]
      %v1594 = vld [vmem:[%s1580 + $0x34] sm:$0xf]
      %v1595 = vld [vmem:[%s1580 + $0x38] sm:$0xf]
      %v1596 = vld [vmem:[%s1580 + $0x3c] sm:$0xf]
      %v1613 = vunpack.c.l.b16 %v1581
      %v1614 = vunpack.c.l.b16 %v1582
      %v1615 = vunpack.c.l.b16 %v1583
      %v1616 = vunpack.c.l.b16 %v1584
      %v1617 = vunpack.c.l.b16 %v1585
      %v1618 = vunpack.c.l.b16 %v1586
      %v1619 = vunpack.c.l.b16 %v1587
      %v1620 = vunpack.c.l.b16 %v1588
      %v1621 = vunpack.c.l.b16 %v1589
      %v1622 = vunpack.c.l.b16 %v1590
      %v1623 = vunpack.c.l.b16 %v1591
      %v1624 = vunpack.c.l.b16 %v1592
      %v1625 = vunpack.c.l.b16 %v1593
      %v1626 = vunpack.c.l.b16 %v1594
      %v1627 = vunpack.c.l.b16 %v1595
      %v1628 = vunpack.c.l.b16 %v1596
      %v1629 = vpack.c.b16 %v1614, %v1613
      %v1630 = vpack.c.b16 %v1616, %v1615
      %v1631 = vpack.c.b16 %v1618, %v1617
      %v1632 = vpack.c.b16 %v1620, %v1619
      %v1633 = vpack.c.b16 %v1622, %v1621
      %v1634 = vpack.c.b16 %v1624, %v1623
      %v1635 = vpack.c.b16 %v1626, %v1625
      %v1636 = vpack.c.b16 %v1628, %v1627
      %1645 = vmatprep.subr.bf16.mxu0 0
      %1646 = vmatpush1.bf16.msra.mxu0 %v1629
      %1647 = vmatprep.subr.bf16.mxu0 0
      %1648 = vmatpush1.bf16.msra.mxu0 %v1630
      %1649 = vmatprep.subr.bf16.mxu0 0
      %1650 = vmatpush1.bf16.msra.mxu0 %v1631
      %1651 = vmatprep.subr.bf16.mxu0 0
      %1652 = vmatpush1.bf16.msra.mxu0 %v1632
      %1653 = vmatprep.subr.bf16.mxu0 0
      %1654 = vmatpush1.bf16.msra.mxu0 %v1633
      %1655 = vmatprep.subr.bf16.mxu0 0
      %1656 = vmatpush1.bf16.msra.mxu0 %v1634
      %1657 = vmatprep.subr.bf16.mxu0 0
      %1658 = vmatpush1.bf16.msra.mxu0 %v1635
      %1659 = vmatprep.subr.bf16.mxu0 0
      %1660 = vmatpush1.bf16.msra.mxu0 %v1636
      %1661 = vmatprep.subr.bf16.mxu0 0
      %1662 = vmatpush1.bf16.msra.mxu0 0
      %1663 = vmatprep.subr.bf16.mxu0 0
      %1664 = vmatpush1.bf16.msra.mxu0 0
      %1665 = vmatprep.subr.bf16.mxu0 0
      %1666 = vmatpush1.bf16.msra.mxu0 0
      %1667 = vmatprep.subr.bf16.mxu0 0
      %1668 = vmatpush1.bf16.msra.mxu0 0
      %1669 = vmatprep.subr.bf16.mxu0 0
      %1670 = vmatpush1.bf16.msra.mxu0 0
      %1671 = vmatprep.subr.bf16.mxu0 0
      %1672 = vmatpush1.bf16.msra.mxu0 0
      %1673 = vmatprep.subr.bf16.mxu0 0
      %1674 = vmatpush1.bf16.msra.mxu0 0
      %1675 = vmatprep.subr.bf16.mxu0 0
      %1676 = vmatpush1.bf16.msra.mxu0 0
      %1677 = vmatprep.mubr.bf16.mxu0 0
      %1678 = vmatmul.mubr.bf16.gmra.mrb[0].mxu0 %v1579
      %v1679 = vpop.f32.mrb[0].mxu0
      %v1680 = vadd.f32 0.0, %v1679
      %v1681 = vpop.f32.mrb[0].mxu0
      %v1682 = vpop.f32.mrb[0].mxu0
      %v1683 = vadd.f32 0.0, %v1682
      %v1684 = vpop.f32.mrb[0].mxu0
      %1685 = vdwg.mxu0
      %v1686 = vadd.f32 %v1565, %v1680
      %v1687 = vadd.f32 %v1566, %v1683
      %v1688 = vld [vmem:[%s4] sm:$0x1]
      %v1690 = vlaneseq
      %v1691 = vshrl.u32 %v1690, 7
      %v1692 = vsub.s32 0, %v1691
      %v1693 = vrot.slane %v1688, %v1692
      %v1695 = vadd.f32 %v1686, %v1693
      %v1696 = vadd.f32 %v1687, %v1693
      %v1697 = vmax.f32 %v1695, 0.0
      %v1698 = vmax.f32 %v1696, 0.0
      %v1699 = vpack.c.bf16 %v1698, %v1697
      %v1701 = vunpack.c.l.b16 %v1699
      %v1702 = vunpack.c.h.b16 %v1699
      %v1703 = vpack.c.b16 %v1701, %v1701
      %v1704 = vpack.c.b16 %v1702, %v1702
      %1707 = vst.msk [vmem:[%s621] sm:$0xf] %vm1079, %v1703
      %1708 = vst.msk [vmem:[%s621 + $0x4] sm:$0xf] %vm1079, %v1704
      %1709 = vst.msk [vmem:[#allocation4] sm:$0xff] %vm1088, %v1697
      %1710 = vst.msk [vmem:[#allocation4 + $0x8] sm:$0xff] %vm1088, %v1698
      %1711 = vst [vmem:[#allocation5] sm:$0x7] 0.0
      %1712 = vst [vmem:[#allocation5 + $0x4] sm:$0x7] 0.0
      %1713 = vst [vmem:[#allocation5 + $0x8] sm:$0x7] 0.0
      %v1714 = vld [vmem:[#allocation4] ss:$2 sm:$0xff]
      %v1716 = vcombine.high %v1714, %v1714
      %v1718 = vunpack.c.l.s4 1983009808
      %v1719 = vunpack.c.0.s8 %v1718
      %v1720 = vlaneseq
      %v1721 = vshrl.u32 %v1720, 7
      %v1722 = vsub.s32 %v1719, %v1721
      %v1723 = vrot.slane %v1714, %v1722
      %v1725 = vunpack.c.l.s4 1983009808
      %v1726 = vunpack.c.0.s8 %v1725
      %v1727 = vlaneseq
      %v1728 = vshrl.u32 %v1727, 7
      %v1729 = vsub.s32 %v1726, %v1728
      %v1730 = vrot.slane %v1716, %v1729
      %v1732 = vunpack.c.l.s4 1983009808
      %v1733 = vunpack.c.0.s8 %v1732
      %v1734 = vlaneseq
      %v1735 = vshrl.u32 %v1734, 7
      %v1736 = vsub.s32 %v1733, %v1735
      %v1737 = vrot.slane %v1723, %v1736
      %v1739 = vunpack.c.l.s4 1983009808
      %v1740 = vunpack.c.0.s8 %v1739
      %v1741 = vlaneseq
      %v1742 = vshrl.u32 %v1741, 7
      %v1743 = vsub.s32 %v1740, %v1742
      %v1744 = vrot.slane %v1730, %v1743
      %1745 = vrot.lane.b32.xlu0 %v1737, 96
      %v1746 = vpop.permute.xlu0 %1745
      %1747 = vrot.lane.b32.xlu0 %v1744, 96
      %v1748 = vpop.permute.xlu0 %1747
      %vm1751 = vcmask 1042176
      %1752 = vst.msk [vmem:[#allocation5] sm:$0x3] %vm1751, %v1746
      %1753 = vst.msk [vmem:[#allocation5 + $0x4] sm:$0x3] %vm1751, %v1748
      %s1754 = scalar_lea.vmem [#allocation4], 1
      %v1755 = vld [vmem:[%s1754] ss:$2 sm:$0xff]
      %v1757 = vcombine.high %v1755, %v1755
      %v1759 = vunpack.c.l.s4 1983009808
      %v1760 = vunpack.c.0.s8 %v1759
      %v1761 = vlaneseq
      %v1762 = vshrl.u32 %v1761, 7
      %v1763 = vsub.s32 %v1760, %v1762
      %v1764 = vrot.slane %v1755, %v1763
      %v1766 = vunpack.c.l.s4 1983009808
      %v1767 = vunpack.c.0.s8 %v1766
      %v1768 = vlaneseq
      %v1769 = vshrl.u32 %v1768, 7
      %v1770 = vsub.s32 %v1767, %v1769
      %v1771 = vrot.slane %v1757, %v1770
      %v1773 = vunpack.c.l.s4 1983009808
      %v1774 = vunpack.c.0.s8 %v1773
      %v1775 = vlaneseq
      %v1776 = vshrl.u32 %v1775, 7
      %v1777 = vsub.s32 %v1774, %v1776
      %v1778 = vrot.slane %v1764, %v1777
      %v1780 = vunpack.c.l.s4 1983009808
      %v1781 = vunpack.c.0.s8 %v1780
      %v1782 = vlaneseq
      %v1783 = vshrl.u32 %v1782, 7
      %v1784 = vsub.s32 %v1781, %v1783
      %v1785 = vrot.slane %v1771, %v1784
      %1786 = vrot.lane.b32.xlu0 %v1778, 64
      %v1787 = vpop.permute.xlu0 %1786
      %1788 = vrot.lane.b32.xlu0 %v1785, 64
      %v1789 = vpop.permute.xlu0 %1788
      %vm1792 = vcmask 779776
      %1793 = vst.msk [vmem:[#allocation5 + $0x1] sm:$0x3] %vm1792, %v1787
      %1794 = vst.msk [vmem:[#allocation5 + $0x5] sm:$0x3] %vm1792, %v1789
      %v1795 = vld [vmem:[#allocation4] ss:$2 sm:$0xff]
      %v1797 = vcombine.high %v1795, %v1795
      %v1799 = vunpack.c.l.s4 1983009808
      %v1800 = vunpack.c.0.s8 %v1799
      %v1801 = vlaneseq
      %v1802 = vshrl.u32 %v1801, 7
      %v1803 = vsub.s32 %v1800, %v1802
      %v1804 = vrot.slane %v1795, %v1803
      %v1806 = vunpack.c.l.s4 1983009808
      %v1807 = vunpack.c.0.s8 %v1806
      %v1808 = vlaneseq
      %v1809 = vshrl.u32 %v1808, 7
      %v1810 = vsub.s32 %v1807, %v1809
      %v1811 = vrot.slane %v1797, %v1810
      %v1812 = vcombine.high %v1804, %v1804
      %v1813 = vcombine.high %v1811, %v1811
      %v1815 = vunpack.c.l.s4 1983009808
      %v1816 = vunpack.c.0.s8 %v1815
      %v1817 = vlaneseq
      %v1818 = vshrl.u32 %v1817, 7
      %v1819 = vsub.s32 %v1816, %v1818
      %v1820 = vrot.slane %v1812, %v1819
      %v1822 = vunpack.c.l.s4 1983009808
      %v1823 = vunpack.c.0.s8 %v1822
      %v1824 = vlaneseq
      %v1825 = vshrl.u32 %v1824, 7
      %v1826 = vsub.s32 %v1823, %v1825
      %v1827 = vrot.slane %v1813, %v1826
      %1828 = vrot.lane.b32.xlu0 %v1820, 32
      %v1829 = vpop.permute.xlu0 %1828
      %1830 = vrot.lane.b32.xlu0 %v1827, 32
      %v1831 = vpop.permute.xlu0 %1830
      %s1834 = scalar_lea.vmem [#allocation5], 4
      %vm1835 = vcmask 517376
      %1836 = vst.msk [vmem:[%s1834] sm:$0x3] %vm1835, %v1829
      %1837 = vst.msk [vmem:[%s1834 + $0x4] sm:$0x3] %vm1835, %v1831
      %v1838 = vld [vmem:[%s1754] ss:$2 sm:$0xff]
      %v1840 = vcombine.high %v1838, %v1838
      %v1842 = vunpack.c.l.s4 1983009808
      %v1843 = vunpack.c.0.s8 %v1842
      %v1844 = vlaneseq
      %v1845 = vshrl.u32 %v1844, 7
      %v1846 = vsub.s32 %v1843, %v1845
      %v1847 = vrot.slane %v1838, %v1846
      %v1849 = vunpack.c.l.s4 1983009808
      %v1850 = vunpack.c.0.s8 %v1849
      %v1851 = vlaneseq
      %v1852 = vshrl.u32 %v1851, 7
      %v1853 = vsub.s32 %v1850, %v1852
      %v1854 = vrot.slane %v1840, %v1853
      %v1855 = vcombine.high %v1847, %v1847
      %v1856 = vcombine.high %v1854, %v1854
      %vm1859 = vcmask 254976
      %1860 = vst.msk [vmem:[%s1834 + $0x1] sm:$0x3] %vm1859, %v1855
      %1861 = vst.msk [vmem:[%s1834 + $0x5] sm:$0x3] %vm1859, %v1856
      %v1862 = vld [vmem:[#allocation5] sm:$0x3]
      %v1863 = vld [vmem:[#allocation5 + $0x4] sm:$0x3]
      %v1866 = vcombine.low %v1862, %v1863
      %v1868 = vunpack.c.l.s4 1983009808
      %v1869 = vunpack.c.0.s8 %v1868
      %v1870 = vlaneseq
      %v1871 = vshrl.u32 %v1870, 7
      %v1872 = vsub.s32 %v1869, %v1871
      %v1873 = vrot.slane %v1866, %v1872
      %v1875 = vpack.c.bf16 %v1873, %v1873
      %v1876 = vld [vmem:[%s5] sm:$0xf]
      %v1877 = vld [vmem:[%s5 + $0x4] sm:$0xf]
      %v1878 = vld [vmem:[%s5 + $0x8] sm:$0xf]
      %v1879 = vld [vmem:[%s5 + $0xc] sm:$0xf]
      %v1880 = vld [vmem:[%s5 + $0x10] sm:$0xf]
      %v1881 = vld [vmem:[%s5 + $0x14] sm:$0xf]
      %v1882 = vld [vmem:[%s5 + $0x18] sm:$0xf]
      %v1883 = vld [vmem:[%s5 + $0x1c] sm:$0xf]
      %v1884 = vld [vmem:[%s5 + $0x20] sm:$0xf]
      %v1885 = vld [vmem:[%s5 + $0x24] sm:$0xf]
      %v1886 = vld [vmem:[%s5 + $0x28] sm:$0xf]
      %v1887 = vld [vmem:[%s5 + $0x2c] sm:$0xf]
      %v1888 = vld [vmem:[%s5 + $0x30] sm:$0xf]
      %v1889 = vld [vmem:[%s5 + $0x34] sm:$0xf]
      %v1890 = vld [vmem:[%s5 + $0x38] sm:$0xf]
      %v1891 = vld [vmem:[%s5 + $0x3c] sm:$0xf]
      %v1892 = vld [vmem:[#allocation5 + $0x1] sm:$0x3]
      %v1893 = vld [vmem:[#allocation5 + $0x5] sm:$0x3]
      %v1896 = vcombine.low %v1892, %v1893
      %v1898 = vunpack.c.l.s4 1983009808
      %v1899 = vunpack.c.0.s8 %v1898
      %v1900 = vlaneseq
      %v1901 = vshrl.u32 %v1900, 7
      %v1902 = vsub.s32 %v1899, %v1901
      %v1903 = vrot.slane %v1896, %v1902
      %v1905 = vpack.c.bf16 %v1903, %v1903
      %s1906 = scalar_lea.vmem %s5, 64
      %v1907 = vld [vmem:[%s1906] sm:$0xf]
      %v1908 = vld [vmem:[%s1906 + $0x4] sm:$0xf]
      %v1909 = vld [vmem:[%s1906 + $0x8] sm:$0xf]
      %v1910 = vld [vmem:[%s1906 + $0xc] sm:$0xf]
      %v1911 = vld [vmem:[%s1906 + $0x10] sm:$0xf]
      %v1912 = vld [vmem:[%s1906 + $0x14] sm:$0xf]
      %v1913 = vld [vmem:[%s1906 + $0x18] sm:$0xf]
      %v1914 = vld [vmem:[%s1906 + $0x1c] sm:$0xf]
      %v1915 = vld [vmem:[%s1906 + $0x20] sm:$0xf]
      %v1916 = vld [vmem:[%s1906 + $0x24] sm:$0xf]
      %v1917 = vld [vmem:[%s1906 + $0x28] sm:$0xf]
      %v1918 = vld [vmem:[%s1906 + $0x2c] sm:$0xf]
      %v1919 = vld [vmem:[%s1906 + $0x30] sm:$0xf]
      %v1920 = vld [vmem:[%s1906 + $0x34] sm:$0xf]
      %v1921 = vld [vmem:[%s1906 + $0x38] sm:$0xf]
      %v1922 = vld [vmem:[%s1906 + $0x3c] sm:$0xf]
      %v1939 = vunpack.c.l.b16 %v1907
      %v1940 = vunpack.c.l.b16 %v1908
      %v1941 = vunpack.c.l.b16 %v1909
      %v1942 = vunpack.c.l.b16 %v1910
      %v1943 = vunpack.c.l.b16 %v1911
      %v1944 = vunpack.c.l.b16 %v1912
      %v1945 = vunpack.c.l.b16 %v1913
      %v1946 = vunpack.c.l.b16 %v1914
      %v1947 = vunpack.c.l.b16 %v1915
      %v1948 = vunpack.c.l.b16 %v1916
      %v1949 = vunpack.c.l.b16 %v1917
      %v1950 = vunpack.c.l.b16 %v1918
      %v1951 = vunpack.c.l.b16 %v1919
      %v1952 = vunpack.c.l.b16 %v1920
      %v1953 = vunpack.c.l.b16 %v1921
      %v1954 = vunpack.c.l.b16 %v1922
      %v1955 = vpack.c.b16 %v1940, %v1939
      %v1956 = vpack.c.b16 %v1942, %v1941
      %v1957 = vpack.c.b16 %v1944, %v1943
      %v1958 = vpack.c.b16 %v1946, %v1945
      %v1959 = vpack.c.b16 %v1948, %v1947
      %v1960 = vpack.c.b16 %v1950, %v1949
      %v1961 = vpack.c.b16 %v1952, %v1951
      %v1962 = vpack.c.b16 %v1954, %v1953
      %1971 = vmatprep.subr.bf16.mxu0 0
      %1972 = vmatpush1.bf16.msra.mxu0 %v1955
      %1973 = vmatprep.subr.bf16.mxu0 0
      %1974 = vmatpush1.bf16.msra.mxu0 %v1956
      %1975 = vmatprep.subr.bf16.mxu0 0
      %1976 = vmatpush1.bf16.msra.mxu0 %v1957
      %1977 = vmatprep.subr.bf16.mxu0 0
      %1978 = vmatpush1.bf16.msra.mxu0 %v1958
      %1979 = vmatprep.subr.bf16.mxu0 0
      %1980 = vmatpush1.bf16.msra.mxu0 %v1959
      %1981 = vmatprep.subr.bf16.mxu0 0
      %1982 = vmatpush1.bf16.msra.mxu0 %v1960
      %1983 = vmatprep.subr.bf16.mxu0 0
      %1984 = vmatpush1.bf16.msra.mxu0 %v1961
      %1985 = vmatprep.subr.bf16.mxu0 0
      %1986 = vmatpush1.bf16.msra.mxu0 %v1962
      %1987 = vmatprep.subr.bf16.mxu0 0
      %1988 = vmatpush1.bf16.msra.mxu0 0
      %1989 = vmatprep.subr.bf16.mxu0 0
      %1990 = vmatpush1.bf16.msra.mxu0 0
      %1991 = vmatprep.subr.bf16.mxu0 0
      %1992 = vmatpush1.bf16.msra.mxu0 0
      %1993 = vmatprep.subr.bf16.mxu0 0
      %1994 = vmatpush1.bf16.msra.mxu0 0
      %1995 = vmatprep.subr.bf16.mxu0 0
      %1996 = vmatpush1.bf16.msra.mxu0 0
      %1997 = vmatprep.subr.bf16.mxu0 0
      %1998 = vmatpush1.bf16.msra.mxu0 0
      %1999 = vmatprep.subr.bf16.mxu0 0
      %2000 = vmatpush1.bf16.msra.mxu0 0
      %2001 = vmatprep.subr.bf16.mxu0 0
      %2002 = vmatpush1.bf16.msra.mxu0 0
      %2003 = vmatprep.mubr.bf16.mxu0 0
      %2004 = vmatmul.mubr.bf16.gmra.mrb[0].mxu0 %v1905
      %v2005 = vpop.f32.mrb[0].mxu0
      %v2006 = vadd.f32 0.0, %v2005
      %v2007 = vpop.f32.mrb[0].mxu0
      %v2008 = vpop.f32.mrb[0].mxu0
      %v2009 = vpop.f32.mrb[0].mxu0
      %2010 = vdwg.mxu0
      %v2027 = vunpack.c.l.b16 %v1876
      %v2028 = vunpack.c.l.b16 %v1877
      %v2029 = vunpack.c.l.b16 %v1878
      %v2030 = vunpack.c.l.b16 %v1879
      %v2031 = vunpack.c.l.b16 %v1880
      %v2032 = vunpack.c.l.b16 %v1881
      %v2033 = vunpack.c.l.b16 %v1882
      %v2034 = vunpack.c.l.b16 %v1883
      %v2035 = vunpack.c.l.b16 %v1884
      %v2036 = vunpack.c.l.b16 %v1885
      %v2037 = vunpack.c.l.b16 %v1886
      %v2038 = vunpack.c.l.b16 %v1887
      %v2039 = vunpack.c.l.b16 %v1888
      %v2040 = vunpack.c.l.b16 %v1889
      %v2041 = vunpack.c.l.b16 %v1890
      %v2042 = vunpack.c.l.b16 %v1891
      %v2043 = vpack.c.b16 %v2028, %v2027
      %v2044 = vpack.c.b16 %v2030, %v2029
      %v2045 = vpack.c.b16 %v2032, %v2031
      %v2046 = vpack.c.b16 %v2034, %v2033
      %v2047 = vpack.c.b16 %v2036, %v2035
      %v2048 = vpack.c.b16 %v2038, %v2037
      %v2049 = vpack.c.b16 %v2040, %v2039
      %v2050 = vpack.c.b16 %v2042, %v2041
      %2059 = vmatprep.subr.bf16.mxu0 0
      %2060 = vmatpush1.bf16.msra.mxu0 %v2043
      %2061 = vmatprep.subr.bf16.mxu0 0
      %2062 = vmatpush1.bf16.msra.mxu0 %v2044
      %2063 = vmatprep.subr.bf16.mxu0 0
      %2064 = vmatpush1.bf16.msra.mxu0 %v2045
      %2065 = vmatprep.subr.bf16.mxu0 0
      %2066 = vmatpush1.bf16.msra.mxu0 %v2046
      %2067 = vmatprep.subr.bf16.mxu0 0
      %2068 = vmatpush1.bf16.msra.mxu0 %v2047
      %2069 = vmatprep.subr.bf16.mxu0 0
      %2070 = vmatpush1.bf16.msra.mxu0 %v2048
      %2071 = vmatprep.subr.bf16.mxu0 0
      %2072 = vmatpush1.bf16.msra.mxu0 %v2049
      %2073 = vmatprep.subr.bf16.mxu0 0
      %2074 = vmatpush1.bf16.msra.mxu0 %v2050
      %2075 = vmatprep.subr.bf16.mxu0 0
      %2076 = vmatpush1.bf16.msra.mxu0 0
      %2077 = vmatprep.subr.bf16.mxu0 0
      %2078 = vmatpush1.bf16.msra.mxu0 0
      %2079 = vmatprep.subr.bf16.mxu0 0
      %2080 = vmatpush1.bf16.msra.mxu0 0
      %2081 = vmatprep.subr.bf16.mxu0 0
      %2082 = vmatpush1.bf16.msra.mxu0 0
      %2083 = vmatprep.subr.bf16.mxu0 0
      %2084 = vmatpush1.bf16.msra.mxu0 0
      %2085 = vmatprep.subr.bf16.mxu0 0
      %2086 = vmatpush1.bf16.msra.mxu0 0
      %2087 = vmatprep.subr.bf16.mxu0 0
      %2088 = vmatpush1.bf16.msra.mxu0 0
      %2089 = vmatprep.subr.bf16.mxu0 0
      %2090 = vmatpush1.bf16.msra.mxu0 0
      %2091 = vmatprep.mubr.bf16.mxu0 0
      %2092 = vmatmul.mubr.bf16.gmra.mrb[0].mxu0 %v1875
      %v2093 = vpop.f32.mrb[0].mxu0
      %v2094 = vadd.f32 %v2006, %v2093
      %v2095 = vpop.f32.mrb[0].mxu0
      %v2096 = vpop.f32.mrb[0].mxu0
      %v2097 = vpop.f32.mrb[0].mxu0
      %2098 = vdwg.mxu0
      %v2099 = vld [vmem:[%s1834] sm:$0x3]
      %v2100 = vld [vmem:[%s1834 + $0x4] sm:$0x3]
      %v2103 = vcombine.low %v2099, %v2100
      %v2105 = vunpack.c.l.s4 1983009808
      %v2106 = vunpack.c.0.s8 %v2105
      %v2107 = vlaneseq
      %v2108 = vshrl.u32 %v2107, 7
      %v2109 = vsub.s32 %v2106, %v2108
      %v2110 = vrot.slane %v2103, %v2109
      %v2112 = vpack.c.bf16 %v2110, %v2110
      %s2113 = scalar_lea.vmem %s5, 128
      %v2114 = vld [vmem:[%s2113] sm:$0xf]
      %v2115 = vld [vmem:[%s2113 + $0x4] sm:$0xf]
      %v2116 = vld [vmem:[%s2113 + $0x8] sm:$0xf]
      %v2117 = vld [vmem:[%s2113 + $0xc] sm:$0xf]
      %v2118 = vld [vmem:[%s2113 + $0x10] sm:$0xf]
      %v2119 = vld [vmem:[%s2113 + $0x14] sm:$0xf]
      %v2120 = vld [vmem:[%s2113 + $0x18] sm:$0xf]
      %v2121 = vld [vmem:[%s2113 + $0x1c] sm:$0xf]
      %v2122 = vld [vmem:[%s2113 + $0x20] sm:$0xf]
      %v2123 = vld [vmem:[%s2113 + $0x24] sm:$0xf]
      %v2124 = vld [vmem:[%s2113 + $0x28] sm:$0xf]
      %v2125 = vld [vmem:[%s2113 + $0x2c] sm:$0xf]
      %v2126 = vld [vmem:[%s2113 + $0x30] sm:$0xf]
      %v2127 = vld [vmem:[%s2113 + $0x34] sm:$0xf]
      %v2128 = vld [vmem:[%s2113 + $0x38] sm:$0xf]
      %v2129 = vld [vmem:[%s2113 + $0x3c] sm:$0xf]
      %v2146 = vunpack.c.l.b16 %v2114
      %v2147 = vunpack.c.l.b16 %v2115
      %v2148 = vunpack.c.l.b16 %v2116
      %v2149 = vunpack.c.l.b16 %v2117
      %v2150 = vunpack.c.l.b16 %v2118
      %v2151 = vunpack.c.l.b16 %v2119
      %v2152 = vunpack.c.l.b16 %v2120
      %v2153 = vunpack.c.l.b16 %v2121
      %v2154 = vunpack.c.l.b16 %v2122
      %v2155 = vunpack.c.l.b16 %v2123
      %v2156 = vunpack.c.l.b16 %v2124
      %v2157 = vunpack.c.l.b16 %v2125
      %v2158 = vunpack.c.l.b16 %v2126
      %v2159 = vunpack.c.l.b16 %v2127
      %v2160 = vunpack.c.l.b16 %v2128
      %v2161 = vunpack.c.l.b16 %v2129
      %v2162 = vpack.c.b16 %v2147, %v2146
      %v2163 = vpack.c.b16 %v2149, %v2148
      %v2164 = vpack.c.b16 %v2151, %v2150
      %v2165 = vpack.c.b16 %v2153, %v2152
      %v2166 = vpack.c.b16 %v2155, %v2154
      %v2167 = vpack.c.b16 %v2157, %v2156
      %v2168 = vpack.c.b16 %v2159, %v2158
      %v2169 = vpack.c.b16 %v2161, %v2160
      %2178 = vmatprep.subr.bf16.mxu0 0
      %2179 = vmatpush1.bf16.msra.mxu0 %v2162
      %2180 = vmatprep.subr.bf16.mxu0 0
      %2181 = vmatpush1.bf16.msra.mxu0 %v2163
      %2182 = vmatprep.subr.bf16.mxu0 0
      %2183 = vmatpush1.bf16.msra.mxu0 %v2164
      %2184 = vmatprep.subr.bf16.mxu0 0
      %2185 = vmatpush1.bf16.msra.mxu0 %v2165
      %2186 = vmatprep.subr.bf16.mxu0 0
      %2187 = vmatpush1.bf16.msra.mxu0 %v2166
      %2188 = vmatprep.subr.bf16.mxu0 0
      %2189 = vmatpush1.bf16.msra.mxu0 %v2167
      %2190 = vmatprep.subr.bf16.mxu0 0
      %2191 = vmatpush1.bf16.msra.mxu0 %v2168
      %2192 = vmatprep.subr.bf16.mxu0 0
      %2193 = vmatpush1.bf16.msra.mxu0 %v2169
      %2194 = vmatprep.subr.bf16.mxu0 0
      %2195 = vmatpush1.bf16.msra.mxu0 0
      %2196 = vmatprep.subr.bf16.mxu0 0
      %2197 = vmatpush1.bf16.msra.mxu0 0
      %2198 = vmatprep.subr.bf16.mxu0 0
      %2199 = vmatpush1.bf16.msra.mxu0 0
      %2200 = vmatprep.subr.bf16.mxu0 0
      %2201 = vmatpush1.bf16.msra.mxu0 0
      %2202 = vmatprep.subr.bf16.mxu0 0
      %2203 = vmatpush1.bf16.msra.mxu0 0
      %2204 = vmatprep.subr.bf16.mxu0 0
      %2205 = vmatpush1.bf16.msra.mxu0 0
      %2206 = vmatprep.subr.bf16.mxu0 0
      %2207 = vmatpush1.bf16.msra.mxu0 0
      %2208 = vmatprep.subr.bf16.mxu0 0
      %2209 = vmatpush1.bf16.msra.mxu0 0
      %2210 = vmatprep.mubr.bf16.mxu0 0
      %2211 = vmatmul.mubr.bf16.gmra.mrb[0].mxu0 %v2112
      %v2212 = vpop.f32.mrb[0].mxu0
      %v2213 = vadd.f32 0.0, %v2212
      %v2214 = vpop.f32.mrb[0].mxu0
      %v2215 = vpop.f32.mrb[0].mxu0
      %v2216 = vpop.f32.mrb[0].mxu0
      %2217 = vdwg.mxu0
      %v2218 = vadd.f32 %v2094, %v2213
      %v2219 = vld [vmem:[%s1834 + $0x1] sm:$0x3]
      %v2220 = vld [vmem:[%s1834 + $0x5] sm:$0x3]
      %v2223 = vcombine.low %v2219, %v2220
      %v2225 = vunpack.c.l.s4 1983009808
      %v2226 = vunpack.c.0.s8 %v2225
      %v2227 = vlaneseq
      %v2228 = vshrl.u32 %v2227, 7
      %v2229 = vsub.s32 %v2226, %v2228
      %v2230 = vrot.slane %v2223, %v2229
      %v2232 = vpack.c.bf16 %v2230, %v2230
      %s2233 = scalar_lea.vmem %s5, 192
      %v2234 = vld [vmem:[%s2233] sm:$0xf]
      %v2235 = vld [vmem:[%s2233 + $0x4] sm:$0xf]
      %v2236 = vld [vmem:[%s2233 + $0x8] sm:$0xf]
      %v2237 = vld [vmem:[%s2233 + $0xc] sm:$0xf]
      %v2238 = vld [vmem:[%s2233 + $0x10] sm:$0xf]
      %v2239 = vld [vmem:[%s2233 + $0x14] sm:$0xf]
      %v2240 = vld [vmem:[%s2233 + $0x18] sm:$0xf]
      %v2241 = vld [vmem:[%s2233 + $0x1c] sm:$0xf]
      %v2242 = vld [vmem:[%s2233 + $0x20] sm:$0xf]
      %v2243 = vld [vmem:[%s2233 + $0x24] sm:$0xf]
      %v2244 = vld [vmem:[%s2233 + $0x28] sm:$0xf]
      %v2245 = vld [vmem:[%s2233 + $0x2c] sm:$0xf]
      %v2246 = vld [vmem:[%s2233 + $0x30] sm:$0xf]
      %v2247 = vld [vmem:[%s2233 + $0x34] sm:$0xf]
      %v2248 = vld [vmem:[%s2233 + $0x38] sm:$0xf]
      %v2249 = vld [vmem:[%s2233 + $0x3c] sm:$0xf]
      %v2266 = vunpack.c.l.b16 %v2234
      %v2267 = vunpack.c.l.b16 %v2235
      %v2268 = vunpack.c.l.b16 %v2236
      %v2269 = vunpack.c.l.b16 %v2237
      %v2270 = vunpack.c.l.b16 %v2238
      %v2271 = vunpack.c.l.b16 %v2239
      %v2272 = vunpack.c.l.b16 %v2240
      %v2273 = vunpack.c.l.b16 %v2241
      %v2274 = vunpack.c.l.b16 %v2242
      %v2275 = vunpack.c.l.b16 %v2243
      %v2276 = vunpack.c.l.b16 %v2244
      %v2277 = vunpack.c.l.b16 %v2245
      %v2278 = vunpack.c.l.b16 %v2246
      %v2279 = vunpack.c.l.b16 %v2247
      %v2280 = vunpack.c.l.b16 %v2248
      %v2281 = vunpack.c.l.b16 %v2249
      %v2282 = vpack.c.b16 %v2267, %v2266
      %v2283 = vpack.c.b16 %v2269, %v2268
      %v2284 = vpack.c.b16 %v2271, %v2270
      %v2285 = vpack.c.b16 %v2273, %v2272
      %v2286 = vpack.c.b16 %v2275, %v2274
      %v2287 = vpack.c.b16 %v2277, %v2276
      %v2288 = vpack.c.b16 %v2279, %v2278
      %v2289 = vpack.c.b16 %v2281, %v2280
      %2298 = vmatprep.subr.bf16.mxu0 0
      %2299 = vmatpush1.bf16.msra.mxu0 %v2282
      %2300 = vmatprep.subr.bf16.mxu0 0
      %2301 = vmatpush1.bf16.msra.mxu0 %v2283
      %2302 = vmatprep.subr.bf16.mxu0 0
      %2303 = vmatpush1.bf16.msra.mxu0 %v2284
      %2304 = vmatprep.subr.bf16.mxu0 0
      %2305 = vmatpush1.bf16.msra.mxu0 %v2285
      %2306 = vmatprep.subr.bf16.mxu0 0
      %2307 = vmatpush1.bf16.msra.mxu0 %v2286
      %2308 = vmatprep.subr.bf16.mxu0 0
      %2309 = vmatpush1.bf16.msra.mxu0 %v2287
      %2310 = vmatprep.subr.bf16.mxu0 0
      %2311 = vmatpush1.bf16.msra.mxu0 %v2288
      %2312 = vmatprep.subr.bf16.mxu0 0
      %2313 = vmatpush1.bf16.msra.mxu0 %v2289
      %2314 = vmatprep.subr.bf16.mxu0 0
      %2315 = vmatpush1.bf16.msra.mxu0 0
      %2316 = vmatprep.subr.bf16.mxu0 0
      %2317 = vmatpush1.bf16.msra.mxu0 0
      %2318 = vmatprep.subr.bf16.mxu0 0
      %2319 = vmatpush1.bf16.msra.mxu0 0
      %2320 = vmatprep.subr.bf16.mxu0 0
      %2321 = vmatpush1.bf16.msra.mxu0 0
      %2322 = vmatprep.subr.bf16.mxu0 0
      %2323 = vmatpush1.bf16.msra.mxu0 0
      %2324 = vmatprep.subr.bf16.mxu0 0
      %2325 = vmatpush1.bf16.msra.mxu0 0
      %2326 = vmatprep.subr.bf16.mxu0 0
      %2327 = vmatpush1.bf16.msra.mxu0 0
      %2328 = vmatprep.subr.bf16.mxu0 0
      %2329 = vmatpush1.bf16.msra.mxu0 0
      %2330 = vmatprep.mubr.bf16.mxu0 0
      %2331 = vmatmul.mubr.bf16.gmra.mrb[0].mxu0 %v2232
      %v2332 = vpop.f32.mrb[0].mxu0
      %v2333 = vadd.f32 0.0, %v2332
      %v2334 = vpop.f32.mrb[0].mxu0
      %v2335 = vpop.f32.mrb[0].mxu0
      %v2336 = vpop.f32.mrb[0].mxu0
      %2337 = vdwg.mxu0
      %v2338 = vadd.f32 %v2218, %v2333
      %v2339 = vld [vmem:[%s6] sm:$0x1]
      %v2341 = vlaneseq
      %v2342 = vshrl.u32 %v2341, 7
      %v2343 = vsub.s32 0, %v2342
      %v2344 = vrot.slane %v2339, %v2343
      %v2346 = vadd.f32 %v2338, %v2344
      %v2347 = vmax.f32 %v2346, 0.0
      %v2348 = vpack.c.bf16 %v2347, %v2347
      %vm2349 = vcmask 517120
      %2350 = vst.msk [vmem:[%s625] sm:$0x3] %vm2349, %v2348
      %vm2351 = vcmask 519168
      %2352 = vst.msk [vmem:[#allocation6] sm:$0xf] %vm2351, %v2347
      %2353 = vst [vmem:[#allocation7] sm:$0xf] 0.0
      %2354 = vst [vmem:[#allocation7 + $0x4] sm:$0xf] 0.0
      %v2355 = vld [vmem:[#allocation6] ss:$2 sm:$0x3]
      %v2358 = vunpack.c.l.s4 1983009808
      %v2359 = vunpack.c.0.s8 %v2358
      %v2360 = vlaneseq
      %v2361 = vshrl.u32 %v2360, 7
      %v2362 = vsub.s32 %v2359, %v2361
      %v2363 = vrot.slane %v2355, %v2362
      %2364 = vrot.lane.b32.xlu0 %v2363, 64
      %v2365 = vpop.permute.xlu0 %2364
      %vm2367 = vcmask 1040896
      %2368 = vst.msk [vmem:[#allocation7 + $0x2] sm:$0x1] %vm2367, %v2365
      %s2369 = scalar_lea.vmem [#allocation6], 1
      %v2370 = vld [vmem:[%s2369] ss:$2 sm:$0x3]
      %vm2371 = vcmask 516096
      %2372 = vst.msk [vmem:[#allocation7 + $0x3] sm:$0x1] %vm2371, %v2370
      %v2373 = vld [vmem:[#allocation6] ss:$2 sm:$0x3]
      %v2376 = vunpack.c.l.s4 1983009808
      %v2377 = vunpack.c.0.s8 %v2376
      %v2378 = vlaneseq
      %v2379 = vshrl.u32 %v2378, 7
      %v2380 = vsub.s32 %v2377, %v2379
      %v2381 = vrot.slane %v2373, %v2380
      %v2382 = vrot.slane %v2381, 7
      %v2383 = vrot.slane %v2382, 2
      %2384 = vrot.lane.b32.xlu0 %v2383, 64
      %v2385 = vpop.permute.xlu0 %2384
      %s2387 = scalar_lea.vmem [#allocation7], 4
      %2388 = vst.msk [vmem:[%s2387] sm:$0x1] %vm2367, %v2385
      %v2389 = vld [vmem:[%s2369] ss:$2 sm:$0x3]
      %v2392 = vunpack.c.l.s4 1983009808
      %v2393 = vunpack.c.0.s8 %v2392
      %v2394 = vlaneseq
      %v2395 = vshrl.u32 %v2394, 7
      %v2396 = vsub.s32 %v2393, %v2395
      %v2397 = vrot.slane %v2389, %v2396
      %v2398 = vrot.slane %v2397, 7
      %v2399 = vrot.slane %v2398, 2
      %2401 = vst.msk [vmem:[%s2387 + $0x1] sm:$0x1] %vm2371, %v2399
      %v2402 = vld [vmem:[#allocation7] ss:$2 sm:$0x3]
      %v2404 = vlaneseq
      %v2405 = vshrl.u32 %v2404, 7
      %v2406 = vsub.s32 0, %v2405
      %v2407 = vrot.slane %v2402, %v2406
      %v2408 = vlaneseq
      %v2409 = vshrl.u32 %v2408, 7
      %v2410 = vsub.s32 1, %v2409
      %v2411 = vrot.slane %v2402, %v2410
      %v2414 = vpack.c.bf16 %v2407, %v2407
      %v2415 = vpack.c.bf16 %v2411, %v2411
      %v2416 = vld [vmem:[%s7] sm:$0xf]
      %v2417 = vld [vmem:[%s7 + $0x4] sm:$0xf]
      %v2418 = vld [vmem:[%s7 + $0x8] sm:$0xf]
      %v2419 = vld [vmem:[%s7 + $0xc] sm:$0xf]
      %v2420 = vld [vmem:[%s7 + $0x10] sm:$0xf]
      %v2421 = vld [vmem:[%s7 + $0x14] sm:$0xf]
      %v2422 = vld [vmem:[%s7 + $0x18] sm:$0xf]
      %v2423 = vld [vmem:[%s7 + $0x1c] sm:$0xf]
      %v2424 = vld [vmem:[%s7 + $0x20] sm:$0xf]
      %v2425 = vld [vmem:[%s7 + $0x24] sm:$0xf]
      %v2426 = vld [vmem:[%s7 + $0x28] sm:$0xf]
      %v2427 = vld [vmem:[%s7 + $0x2c] sm:$0xf]
      %v2428 = vld [vmem:[%s7 + $0x30] sm:$0xf]
      %v2429 = vld [vmem:[%s7 + $0x34] sm:$0xf]
      %v2430 = vld [vmem:[%s7 + $0x38] sm:$0xf]
      %v2431 = vld [vmem:[%s7 + $0x3c] sm:$0xf]
      %v2432 = vld [vmem:[%s7 + $0x40] sm:$0xf]
      %v2433 = vld [vmem:[%s7 + $0x44] sm:$0xf]
      %v2434 = vld [vmem:[%s7 + $0x48] sm:$0xf]
      %v2435 = vld [vmem:[%s7 + $0x4c] sm:$0xf]
      %v2436 = vld [vmem:[%s7 + $0x50] sm:$0xf]
      %v2437 = vld [vmem:[%s7 + $0x54] sm:$0xf]
      %v2438 = vld [vmem:[%s7 + $0x58] sm:$0xf]
      %v2439 = vld [vmem:[%s7 + $0x5c] sm:$0xf]
      %v2440 = vld [vmem:[%s7 + $0x60] sm:$0xf]
      %v2441 = vld [vmem:[%s7 + $0x64] sm:$0xf]
      %v2442 = vld [vmem:[%s7 + $0x68] sm:$0xf]
      %v2443 = vld [vmem:[%s7 + $0x6c] sm:$0xf]
      %v2444 = vld [vmem:[%s7 + $0x70] sm:$0xf]
      %v2445 = vld [vmem:[%s7 + $0x74] sm:$0xf]
      %v2446 = vld [vmem:[%s7 + $0x78] sm:$0xf]
      %v2447 = vld [vmem:[%s7 + $0x7c] sm:$0xf]
      %s2448 = scalar_lea.vmem [#allocation7], 1
      %v2449 = vld [vmem:[%s2448] ss:$2 sm:$0x3]
      %v2451 = vlaneseq
      %v2452 = vshrl.u32 %v2451, 7
      %v2453 = vsub.s32 0, %v2452
      %v2454 = vrot.slane %v2449, %v2453
      %v2455 = vlaneseq
      %v2456 = vshrl.u32 %v2455, 7
      %v2457 = vsub.s32 1, %v2456
      %v2458 = vrot.slane %v2449, %v2457
      %v2461 = vpack.c.bf16 %v2454, %v2454
      %v2462 = vpack.c.bf16 %v2458, %v2458
      %s2463 = scalar_lea.vmem %s7, 128
      %v2464 = vld [vmem:[%s2463] sm:$0xf]
      %v2465 = vld [vmem:[%s2463 + $0x4] sm:$0xf]
      %v2466 = vld [vmem:[%s2463 + $0x8] sm:$0xf]
      %v2467 = vld [vmem:[%s2463 + $0xc] sm:$0xf]
      %v2468 = vld [vmem:[%s2463 + $0x10] sm:$0xf]
      %v2469 = vld [vmem:[%s2463 + $0x14] sm:$0xf]
      %v2470 = vld [vmem:[%s2463 + $0x18] sm:$0xf]
      %v2471 = vld [vmem:[%s2463 + $0x1c] sm:$0xf]
      %v2472 = vld [vmem:[%s2463 + $0x20] sm:$0xf]
      %v2473 = vld [vmem:[%s2463 + $0x24] sm:$0xf]
      %v2474 = vld [vmem:[%s2463 + $0x28] sm:$0xf]
      %v2475 = vld [vmem:[%s2463 + $0x2c] sm:$0xf]
      %v2476 = vld [vmem:[%s2463 + $0x30] sm:$0xf]
      %v2477 = vld [vmem:[%s2463 + $0x34] sm:$0xf]
      %v2478 = vld [vmem:[%s2463 + $0x38] sm:$0xf]
      %v2479 = vld [vmem:[%s2463 + $0x3c] sm:$0xf]
      %v2480 = vld [vmem:[%s2463 + $0x40] sm:$0xf]
      %v2481 = vld [vmem:[%s2463 + $0x44] sm:$0xf]
      %v2482 = vld [vmem:[%s2463 + $0x48] sm:$0xf]
      %v2483 = vld [vmem:[%s2463 + $0x4c] sm:$0xf]
      %v2484 = vld [vmem:[%s2463 + $0x50] sm:$0xf]
      %v2485 = vld [vmem:[%s2463 + $0x54] sm:$0xf]
      %v2486 = vld [vmem:[%s2463 + $0x58] sm:$0xf]
      %v2487 = vld [vmem:[%s2463 + $0x5c] sm:$0xf]
      %v2488 = vld [vmem:[%s2463 + $0x60] sm:$0xf]
      %v2489 = vld [vmem:[%s2463 + $0x64] sm:$0xf]
      %v2490 = vld [vmem:[%s2463 + $0x68] sm:$0xf]
      %v2491 = vld [vmem:[%s2463 + $0x6c] sm:$0xf]
      %v2492 = vld [vmem:[%s2463 + $0x70] sm:$0xf]
      %v2493 = vld [vmem:[%s2463 + $0x74] sm:$0xf]
      %v2494 = vld [vmem:[%s2463 + $0x78] sm:$0xf]
      %v2495 = vld [vmem:[%s2463 + $0x7c] sm:$0xf]
      %v2528 = vunpack.c.l.b16 %v2464
      %v2529 = vunpack.c.l.b16 %v2465
      %v2530 = vunpack.c.l.b16 %v2466
      %v2531 = vunpack.c.l.b16 %v2467
      %v2532 = vunpack.c.l.b16 %v2468
      %v2533 = vunpack.c.l.b16 %v2469
      %v2534 = vunpack.c.l.b16 %v2470
      %v2535 = vunpack.c.l.b16 %v2471
      %v2536 = vunpack.c.l.b16 %v2472
      %v2537 = vunpack.c.l.b16 %v2473
      %v2538 = vunpack.c.l.b16 %v2474
      %v2539 = vunpack.c.l.b16 %v2475
      %v2540 = vunpack.c.l.b16 %v2476
      %v2541 = vunpack.c.l.b16 %v2477
      %v2542 = vunpack.c.l.b16 %v2478
      %v2543 = vunpack.c.l.b16 %v2479
      %v2544 = vunpack.c.l.b16 %v2480
      %v2545 = vunpack.c.l.b16 %v2481
      %v2546 = vunpack.c.l.b16 %v2482
      %v2547 = vunpack.c.l.b16 %v2483
      %v2548 = vunpack.c.l.b16 %v2484
      %v2549 = vunpack.c.l.b16 %v2485
      %v2550 = vunpack.c.l.b16 %v2486
      %v2551 = vunpack.c.l.b16 %v2487
      %v2552 = vunpack.c.l.b16 %v2488
      %v2553 = vunpack.c.l.b16 %v2489
      %v2554 = vunpack.c.l.b16 %v2490
      %v2555 = vunpack.c.l.b16 %v2491
      %v2556 = vunpack.c.l.b16 %v2492
      %v2557 = vunpack.c.l.b16 %v2493
      %v2558 = vunpack.c.l.b16 %v2494
      %v2559 = vunpack.c.l.b16 %v2495
      %v2560 = vpack.c.b16 %v2529, %v2528
      %v2561 = vpack.c.b16 %v2531, %v2530
      %v2562 = vpack.c.b16 %v2533, %v2532
      %v2563 = vpack.c.b16 %v2535, %v2534
      %v2564 = vpack.c.b16 %v2537, %v2536
      %v2565 = vpack.c.b16 %v2539, %v2538
      %v2566 = vpack.c.b16 %v2541, %v2540
      %v2567 = vpack.c.b16 %v2543, %v2542
      %v2568 = vpack.c.b16 %v2545, %v2544
      %v2569 = vpack.c.b16 %v2547, %v2546
      %v2570 = vpack.c.b16 %v2549, %v2548
      %v2571 = vpack.c.b16 %v2551, %v2550
      %v2572 = vpack.c.b16 %v2553, %v2552
      %v2573 = vpack.c.b16 %v2555, %v2554
      %v2574 = vpack.c.b16 %v2557, %v2556
      %v2575 = vpack.c.b16 %v2559, %v2558
      %2592 = vmatprep.subr.bf16.mxu0 0
      %2593 = vmatpush1.bf16.msra.mxu0 %v2560
      %2594 = vmatprep.subr.bf16.mxu0 0
      %2595 = vmatpush1.bf16.msra.mxu0 %v2561
      %2596 = vmatprep.subr.bf16.mxu0 0
      %2597 = vmatpush1.bf16.msra.mxu0 %v2562
      %2598 = vmatprep.subr.bf16.mxu0 0
      %2599 = vmatpush1.bf16.msra.mxu0 %v2563
      %2600 = vmatprep.subr.bf16.mxu0 0
      %2601 = vmatpush1.bf16.msra.mxu0 %v2564
      %2602 = vmatprep.subr.bf16.mxu0 0
      %2603 = vmatpush1.bf16.msra.mxu0 %v2565
      %2604 = vmatprep.subr.bf16.mxu0 0
      %2605 = vmatpush1.bf16.msra.mxu0 %v2566
      %2606 = vmatprep.subr.bf16.mxu0 0
      %2607 = vmatpush1.bf16.msra.mxu0 %v2567
      %2608 = vmatprep.subr.bf16.mxu0 0
      %2609 = vmatpush1.bf16.msra.mxu0 %v2568
      %2610 = vmatprep.subr.bf16.mxu0 0
      %2611 = vmatpush1.bf16.msra.mxu0 %v2569
      %2612 = vmatprep.subr.bf16.mxu0 0
      %2613 = vmatpush1.bf16.msra.mxu0 %v2570
      %2614 = vmatprep.subr.bf16.mxu0 0
      %2615 = vmatpush1.bf16.msra.mxu0 %v2571
      %2616 = vmatprep.subr.bf16.mxu0 0
      %2617 = vmatpush1.bf16.msra.mxu0 %v2572
      %2618 = vmatprep.subr.bf16.mxu0 0
      %2619 = vmatpush1.bf16.msra.mxu0 %v2573
      %2620 = vmatprep.subr.bf16.mxu0 0
      %2621 = vmatpush1.bf16.msra.mxu0 %v2574
      %2622 = vmatprep.subr.bf16.mxu0 0
      %2623 = vmatpush1.bf16.msra.mxu0 %v2575
      %2624 = vmatprep.mubr.bf16.mxu0 %v2462
      %2625 = vmatmul.mubr.bf16.gmra.mrb[0].mxu0 %v2461
      %v2626 = vpop.f32.mrb[0].mxu0
      %v2627 = vadd.f32 0.0, %v2626
      %v2628 = vpop.f32.mrb[0].mxu0
      %v2629 = vpop.f32.mrb[0].mxu0
      %v2630 = vpop.f32.mrb[0].mxu0
      %2631 = vdwg.mxu0
      %v2664 = vunpack.c.l.b16 %v2416
      %v2665 = vunpack.c.l.b16 %v2417
      %v2666 = vunpack.c.l.b16 %v2418
      %v2667 = vunpack.c.l.b16 %v2419
      %v2668 = vunpack.c.l.b16 %v2420
      %v2669 = vunpack.c.l.b16 %v2421
      %v2670 = vunpack.c.l.b16 %v2422
      %v2671 = vunpack.c.l.b16 %v2423
      %v2672 = vunpack.c.l.b16 %v2424
      %v2673 = vunpack.c.l.b16 %v2425
      %v2674 = vunpack.c.l.b16 %v2426
      %v2675 = vunpack.c.l.b16 %v2427
      %v2676 = vunpack.c.l.b16 %v2428
      %v2677 = vunpack.c.l.b16 %v2429
      %v2678 = vunpack.c.l.b16 %v2430
      %v2679 = vunpack.c.l.b16 %v2431
      %v2680 = vunpack.c.l.b16 %v2432
      %v2681 = vunpack.c.l.b16 %v2433
      %v2682 = vunpack.c.l.b16 %v2434
      %v2683 = vunpack.c.l.b16 %v2435
      %v2684 = vunpack.c.l.b16 %v2436
      %v2685 = vunpack.c.l.b16 %v2437
      %v2686 = vunpack.c.l.b16 %v2438
      %v2687 = vunpack.c.l.b16 %v2439
      %v2688 = vunpack.c.l.b16 %v2440
      %v2689 = vunpack.c.l.b16 %v2441
      %v2690 = vunpack.c.l.b16 %v2442
      %v2691 = vunpack.c.l.b16 %v2443
      %v2692 = vunpack.c.l.b16 %v2444
      %v2693 = vunpack.c.l.b16 %v2445
      %v2694 = vunpack.c.l.b16 %v2446
      %v2695 = vunpack.c.l.b16 %v2447
      %v2696 = vpack.c.b16 %v2665, %v2664
      %v2697 = vpack.c.b16 %v2667, %v2666
      %v2698 = vpack.c.b16 %v2669, %v2668
      %v2699 = vpack.c.b16 %v2671, %v2670
      %v2700 = vpack.c.b16 %v2673, %v2672
      %v2701 = vpack.c.b16 %v2675, %v2674
      %v2702 = vpack.c.b16 %v2677, %v2676
      %v2703 = vpack.c.b16 %v2679, %v2678
      %v2704 = vpack.c.b16 %v2681, %v2680
      %v2705 = vpack.c.b16 %v2683, %v2682
      %v2706 = vpack.c.b16 %v2685, %v2684
      %v2707 = vpack.c.b16 %v2687, %v2686
      %v2708 = vpack.c.b16 %v2689, %v2688
      %v2709 = vpack.c.b16 %v2691, %v2690
      %v2710 = vpack.c.b16 %v2693, %v2692
      %v2711 = vpack.c.b16 %v2695, %v2694
      %2728 = vmatprep.subr.bf16.mxu0 0
      %2729 = vmatpush1.bf16.msra.mxu0 %v2696
      %2730 = vmatprep.subr.bf16.mxu0 0
      %2731 = vmatpush1.bf16.msra.mxu0 %v2697
      %2732 = vmatprep.subr.bf16.mxu0 0
      %2733 = vmatpush1.bf16.msra.mxu0 %v2698
      %2734 = vmatprep.subr.bf16.mxu0 0
      %2735 = vmatpush1.bf16.msra.mxu0 %v2699
      %2736 = vmatprep.subr.bf16.mxu0 0
      %2737 = vmatpush1.bf16.msra.mxu0 %v2700
      %2738 = vmatprep.subr.bf16.mxu0 0
      %2739 = vmatpush1.bf16.msra.mxu0 %v2701
      %2740 = vmatprep.subr.bf16.mxu0 0
      %2741 = vmatpush1.bf16.msra.mxu0 %v2702
      %2742 = vmatprep.subr.bf16.mxu0 0
      %2743 = vmatpush1.bf16.msra.mxu0 %v2703
      %2744 = vmatprep.subr.bf16.mxu0 0
      %2745 = vmatpush1.bf16.msra.mxu0 %v2704
      %2746 = vmatprep.subr.bf16.mxu0 0
      %2747 = vmatpush1.bf16.msra.mxu0 %v2705
      %2748 = vmatprep.subr.bf16.mxu0 0
      %2749 = vmatpush1.bf16.msra.mxu0 %v2706
      %2750 = vmatprep.subr.bf16.mxu0 0
      %2751 = vmatpush1.bf16.msra.mxu0 %v2707
      %2752 = vmatprep.subr.bf16.mxu0 0
      %2753 = vmatpush1.bf16.msra.mxu0 %v2708
      %2754 = vmatprep.subr.bf16.mxu0 0
      %2755 = vmatpush1.bf16.msra.mxu0 %v2709
      %2756 = vmatprep.subr.bf16.mxu0 0
      %2757 = vmatpush1.bf16.msra.mxu0 %v2710
      %2758 = vmatprep.subr.bf16.mxu0 0
      %2759 = vmatpush1.bf16.msra.mxu0 %v2711
      %2760 = vmatprep.mubr.bf16.mxu0 %v2415
      %2761 = vmatmul.mubr.bf16.gmra.mrb[0].mxu0 %v2414
      %v2762 = vpop.f32.mrb[0].mxu0
      %v2763 = vadd.f32 %v2627, %v2762
      %v2764 = vpop.f32.mrb[0].mxu0
      %v2765 = vpop.f32.mrb[0].mxu0
      %v2766 = vpop.f32.mrb[0].mxu0
      %2767 = vdwg.mxu0
      %v2768 = vld [vmem:[%s2387] ss:$2 sm:$0x3]
      %v2770 = vlaneseq
      %v2771 = vshrl.u32 %v2770, 7
      %v2772 = vsub.s32 0, %v2771
      %v2773 = vrot.slane %v2768, %v2772
      %v2774 = vlaneseq
      %v2775 = vshrl.u32 %v2774, 7
      %v2776 = vsub.s32 1, %v2775
      %v2777 = vrot.slane %v2768, %v2776
      %v2780 = vpack.c.bf16 %v2773, %v2773
      %v2781 = vpack.c.bf16 %v2777, %v2777
      %s2782 = scalar_lea.vmem %s7, 256
      %v2783 = vld [vmem:[%s2782] sm:$0xf]
      %v2784 = vld [vmem:[%s2782 + $0x4] sm:$0xf]
      %v2785 = vld [vmem:[%s2782 + $0x8] sm:$0xf]
      %v2786 = vld [vmem:[%s2782 + $0xc] sm:$0xf]
      %v2787 = vld [vmem:[%s2782 + $0x10] sm:$0xf]
      %v2788 = vld [vmem:[%s2782 + $0x14] sm:$0xf]
      %v2789 = vld [vmem:[%s2782 + $0x18] sm:$0xf]
      %v2790 = vld [vmem:[%s2782 + $0x1c] sm:$0xf]
      %v2791 = vld [vmem:[%s2782 + $0x20] sm:$0xf]
      %v2792 = vld [vmem:[%s2782 + $0x24] sm:$0xf]
      %v2793 = vld [vmem:[%s2782 + $0x28] sm:$0xf]
      %v2794 = vld [vmem:[%s2782 + $0x2c] sm:$0xf]
      %v2795 = vld [vmem:[%s2782 + $0x30] sm:$0xf]
      %v2796 = vld [vmem:[%s2782 + $0x34] sm:$0xf]
      %v2797 = vld [vmem:[%s2782 + $0x38] sm:$0xf]
      %v2798 = vld [vmem:[%s2782 + $0x3c] sm:$0xf]
      %v2799 = vld [vmem:[%s2782 + $0x40] sm:$0xf]
      %v2800 = vld [vmem:[%s2782 + $0x44] sm:$0xf]
      %v2801 = vld [vmem:[%s2782 + $0x48] sm:$0xf]
      %v2802 = vld [vmem:[%s2782 + $0x4c] sm:$0xf]
      %v2803 = vld [vmem:[%s2782 + $0x50] sm:$0xf]
      %v2804 = vld [vmem:[%s2782 + $0x54] sm:$0xf]
      %v2805 = vld [vmem:[%s2782 + $0x58] sm:$0xf]
      %v2806 = vld [vmem:[%s2782 + $0x5c] sm:$0xf]
      %v2807 = vld [vmem:[%s2782 + $0x60] sm:$0xf]
      %v2808 = vld [vmem:[%s2782 + $0x64] sm:$0xf]
      %v2809 = vld [vmem:[%s2782 + $0x68] sm:$0xf]
      %v2810 = vld [vmem:[%s2782 + $0x6c] sm:$0xf]
      %v2811 = vld [vmem:[%s2782 + $0x70] sm:$0xf]
      %v2812 = vld [vmem:[%s2782 + $0x74] sm:$0xf]
      %v2813 = vld [vmem:[%s2782 + $0x78] sm:$0xf]
      %v2814 = vld [vmem:[%s2782 + $0x7c] sm:$0xf]
      %v2847 = vunpack.c.l.b16 %v2783
      %v2848 = vunpack.c.l.b16 %v2784
      %v2849 = vunpack.c.l.b16 %v2785
      %v2850 = vunpack.c.l.b16 %v2786
      %v2851 = vunpack.c.l.b16 %v2787
      %v2852 = vunpack.c.l.b16 %v2788
      %v2853 = vunpack.c.l.b16 %v2789
      %v2854 = vunpack.c.l.b16 %v2790
      %v2855 = vunpack.c.l.b16 %v2791
      %v2856 = vunpack.c.l.b16 %v2792
      %v2857 = vunpack.c.l.b16 %v2793
      %v2858 = vunpack.c.l.b16 %v2794
      %v2859 = vunpack.c.l.b16 %v2795
      %v2860 = vunpack.c.l.b16 %v2796
      %v2861 = vunpack.c.l.b16 %v2797
      %v2862 = vunpack.c.l.b16 %v2798
      %v2863 = vunpack.c.l.b16 %v2799
      %v2864 = vunpack.c.l.b16 %v2800
      %v2865 = vunpack.c.l.b16 %v2801
      %v2866 = vunpack.c.l.b16 %v2802
      %v2867 = vunpack.c.l.b16 %v2803
      %v2868 = vunpack.c.l.b16 %v2804
      %v2869 = vunpack.c.l.b16 %v2805
      %v2870 = vunpack.c.l.b16 %v2806
      %v2871 = vunpack.c.l.b16 %v2807
      %v2872 = vunpack.c.l.b16 %v2808
      %v2873 = vunpack.c.l.b16 %v2809
      %v2874 = vunpack.c.l.b16 %v2810
      %v2875 = vunpack.c.l.b16 %v2811
      %v2876 = vunpack.c.l.b16 %v2812
      %v2877 = vunpack.c.l.b16 %v2813
      %v2878 = vunpack.c.l.b16 %v2814
      %v2879 = vpack.c.b16 %v2848, %v2847
      %v2880 = vpack.c.b16 %v2850, %v2849
      %v2881 = vpack.c.b16 %v2852, %v2851
      %v2882 = vpack.c.b16 %v2854, %v2853
      %v2883 = vpack.c.b16 %v2856, %v2855
      %v2884 = vpack.c.b16 %v2858, %v2857
      %v2885 = vpack.c.b16 %v2860, %v2859
      %v2886 = vpack.c.b16 %v2862, %v2861
      %v2887 = vpack.c.b16 %v2864, %v2863
      %v2888 = vpack.c.b16 %v2866, %v2865
      %v2889 = vpack.c.b16 %v2868, %v2867
      %v2890 = vpack.c.b16 %v2870, %v2869
      %v2891 = vpack.c.b16 %v2872, %v2871
      %v2892 = vpack.c.b16 %v2874, %v2873
      %v2893 = vpack.c.b16 %v2876, %v2875
      %v2894 = vpack.c.b16 %v2878, %v2877
      %2911 = vmatprep.subr.bf16.mxu0 0
      %2912 = vmatpush1.bf16.msra.mxu0 %v2879
      %2913 = vmatprep.subr.bf16.mxu0 0
      %2914 = vmatpush1.bf16.msra.mxu0 %v2880
      %2915 = vmatprep.subr.bf16.mxu0 0
      %2916 = vmatpush1.bf16.msra.mxu0 %v2881
      %2917 = vmatprep.subr.bf16.mxu0 0
      %2918 = vmatpush1.bf16.msra.mxu0 %v2882
      %2919 = vmatprep.subr.bf16.mxu0 0
      %2920 = vmatpush1.bf16.msra.mxu0 %v2883
      %2921 = vmatprep.subr.bf16.mxu0 0
      %2922 = vmatpush1.bf16.msra.mxu0 %v2884
      %2923 = vmatprep.subr.bf16.mxu0 0
      %2924 = vmatpush1.bf16.msra.mxu0 %v2885
      %2925 = vmatprep.subr.bf16.mxu0 0
      %2926 = vmatpush1.bf16.msra.mxu0 %v2886
      %2927 = vmatprep.subr.bf16.mxu0 0
      %2928 = vmatpush1.bf16.msra.mxu0 %v2887
      %2929 = vmatprep.subr.bf16.mxu0 0
      %2930 = vmatpush1.bf16.msra.mxu0 %v2888
      %2931 = vmatprep.subr.bf16.mxu0 0
      %2932 = vmatpush1.bf16.msra.mxu0 %v2889
      %2933 = vmatprep.subr.bf16.mxu0 0
      %2934 = vmatpush1.bf16.msra.mxu0 %v2890
      %2935 = vmatprep.subr.bf16.mxu0 0
      %2936 = vmatpush1.bf16.msra.mxu0 %v2891
      %2937 = vmatprep.subr.bf16.mxu0 0
      %2938 = vmatpush1.bf16.msra.mxu0 %v2892
      %2939 = vmatprep.subr.bf16.mxu0 0
      %2940 = vmatpush1.bf16.msra.mxu0 %v2893
      %2941 = vmatprep.subr.bf16.mxu0 0
      %2942 = vmatpush1.bf16.msra.mxu0 %v2894
      %2943 = vmatprep.mubr.bf16.mxu0 %v2781
      %2944 = vmatmul.mubr.bf16.gmra.mrb[0].mxu0 %v2780
      %v2945 = vpop.f32.mrb[0].mxu0
      %v2946 = vadd.f32 0.0, %v2945
      %v2947 = vpop.f32.mrb[0].mxu0
      %v2948 = vpop.f32.mrb[0].mxu0
      %v2949 = vpop.f32.mrb[0].mxu0
      %2950 = vdwg.mxu0
      %v2951 = vadd.f32 %v2763, %v2946
      %s2952 = scalar_lea.vmem %s2387, 1 [#allocation7]
      %v2953 = vld [vmem:[%s2952] ss:$2 sm:$0x3]
      %v2955 = vlaneseq
      %v2956 = vshrl.u32 %v2955, 7
      %v2957 = vsub.s32 0, %v2956
      %v2958 = vrot.slane %v2953, %v2957
      %v2959 = vlaneseq
      %v2960 = vshrl.u32 %v2959, 7
      %v2961 = vsub.s32 1, %v2960
      %v2962 = vrot.slane %v2953, %v2961
      %v2965 = vpack.c.bf16 %v2958, %v2958
      %v2966 = vpack.c.bf16 %v2962, %v2962
      %s2967 = scalar_lea.vmem %s7, 384
      %v2968 = vld [vmem:[%s2967] sm:$0xf]
      %v2969 = vld [vmem:[%s2967 + $0x4] sm:$0xf]
      %v2970 = vld [vmem:[%s2967 + $0x8] sm:$0xf]
      %v2971 = vld [vmem:[%s2967 + $0xc] sm:$0xf]
      %v2972 = vld [vmem:[%s2967 + $0x10] sm:$0xf]
      %v2973 = vld [vmem:[%s2967 + $0x14] sm:$0xf]
      %v2974 = vld [vmem:[%s2967 + $0x18] sm:$0xf]
      %v2975 = vld [vmem:[%s2967 + $0x1c] sm:$0xf]
      %v2976 = vld [vmem:[%s2967 + $0x20] sm:$0xf]
      %v2977 = vld [vmem:[%s2967 + $0x24] sm:$0xf]
      %v2978 = vld [vmem:[%s2967 + $0x28] sm:$0xf]
      %v2979 = vld [vmem:[%s2967 + $0x2c] sm:$0xf]
      %v2980 = vld [vmem:[%s2967 + $0x30] sm:$0xf]
      %v2981 = vld [vmem:[%s2967 + $0x34] sm:$0xf]
      %v2982 = vld [vmem:[%s2967 + $0x38] sm:$0xf]
      %v2983 = vld [vmem:[%s2967 + $0x3c] sm:$0xf]
      %v2984 = vld [vmem:[%s2967 + $0x40] sm:$0xf]
      %v2985 = vld [vmem:[%s2967 + $0x44] sm:$0xf]
      %v2986 = vld [vmem:[%s2967 + $0x48] sm:$0xf]
      %v2987 = vld [vmem:[%s2967 + $0x4c] sm:$0xf]
      %v2988 = vld [vmem:[%s2967 + $0x50] sm:$0xf]
      %v2989 = vld [vmem:[%s2967 + $0x54] sm:$0xf]
      %v2990 = vld [vmem:[%s2967 + $0x58] sm:$0xf]
      %v2991 = vld [vmem:[%s2967 + $0x5c] sm:$0xf]
      %v2992 = vld [vmem:[%s2967 + $0x60] sm:$0xf]
      %v2993 = vld [vmem:[%s2967 + $0x64] sm:$0xf]
      %v2994 = vld [vmem:[%s2967 + $0x68] sm:$0xf]
      %v2995 = vld [vmem:[%s2967 + $0x6c] sm:$0xf]
      %v2996 = vld [vmem:[%s2967 + $0x70] sm:$0xf]
      %v2997 = vld [vmem:[%s2967 + $0x74] sm:$0xf]
      %v2998 = vld [vmem:[%s2967 + $0x78] sm:$0xf]
      %v2999 = vld [vmem:[%s2967 + $0x7c] sm:$0xf]
      %v3032 = vunpack.c.l.b16 %v2968
      %v3033 = vunpack.c.l.b16 %v2969
      %v3034 = vunpack.c.l.b16 %v2970
      %v3035 = vunpack.c.l.b16 %v2971
      %v3036 = vunpack.c.l.b16 %v2972
      %v3037 = vunpack.c.l.b16 %v2973
      %v3038 = vunpack.c.l.b16 %v2974
      %v3039 = vunpack.c.l.b16 %v2975
      %v3040 = vunpack.c.l.b16 %v2976
      %v3041 = vunpack.c.l.b16 %v2977
      %v3042 = vunpack.c.l.b16 %v2978
      %v3043 = vunpack.c.l.b16 %v2979
      %v3044 = vunpack.c.l.b16 %v2980
      %v3045 = vunpack.c.l.b16 %v2981
      %v3046 = vunpack.c.l.b16 %v2982
      %v3047 = vunpack.c.l.b16 %v2983
      %v3048 = vunpack.c.l.b16 %v2984
      %v3049 = vunpack.c.l.b16 %v2985
      %v3050 = vunpack.c.l.b16 %v2986
      %v3051 = vunpack.c.l.b16 %v2987
      %v3052 = vunpack.c.l.b16 %v2988
      %v3053 = vunpack.c.l.b16 %v2989
      %v3054 = vunpack.c.l.b16 %v2990
      %v3055 = vunpack.c.l.b16 %v2991
      %v3056 = vunpack.c.l.b16 %v2992
      %v3057 = vunpack.c.l.b16 %v2993
      %v3058 = vunpack.c.l.b16 %v2994
      %v3059 = vunpack.c.l.b16 %v2995
      %v3060 = vunpack.c.l.b16 %v2996
      %v3061 = vunpack.c.l.b16 %v2997
      %v3062 = vunpack.c.l.b16 %v2998
      %v3063 = vunpack.c.l.b16 %v2999
      %v3064 = vpack.c.b16 %v3033, %v3032
      %v3065 = vpack.c.b16 %v3035, %v3034
      %v3066 = vpack.c.b16 %v3037, %v3036
      %v3067 = vpack.c.b16 %v3039, %v3038
      %v3068 = vpack.c.b16 %v3041, %v3040
      %v3069 = vpack.c.b16 %v3043, %v3042
      %v3070 = vpack.c.b16 %v3045, %v3044
      %v3071 = vpack.c.b16 %v3047, %v3046
      %v3072 = vpack.c.b16 %v3049, %v3048
      %v3073 = vpack.c.b16 %v3051, %v3050
      %v3074 = vpack.c.b16 %v3053, %v3052
      %v3075 = vpack.c.b16 %v3055, %v3054
      %v3076 = vpack.c.b16 %v3057, %v3056
      %v3077 = vpack.c.b16 %v3059, %v3058
      %v3078 = vpack.c.b16 %v3061, %v3060
      %v3079 = vpack.c.b16 %v3063, %v3062
      %3096 = vmatprep.subr.bf16.mxu0 0
      %3097 = vmatpush1.bf16.msra.mxu0 %v3064
      %3098 = vmatprep.subr.bf16.mxu0 0
      %3099 = vmatpush1.bf16.msra.mxu0 %v3065
      %3100 = vmatprep.subr.bf16.mxu0 0
      %3101 = vmatpush1.bf16.msra.mxu0 %v3066
      %3102 = vmatprep.subr.bf16.mxu0 0
      %3103 = vmatpush1.bf16.msra.mxu0 %v3067
      %3104 = vmatprep.subr.bf16.mxu0 0
      %3105 = vmatpush1.bf16.msra.mxu0 %v3068
      %3106 = vmatprep.subr.bf16.mxu0 0
      %3107 = vmatpush1.bf16.msra.mxu0 %v3069
      %3108 = vmatprep.subr.bf16.mxu0 0
      %3109 = vmatpush1.bf16.msra.mxu0 %v3070
      %3110 = vmatprep.subr.bf16.mxu0 0
      %3111 = vmatpush1.bf16.msra.mxu0 %v3071
      %3112 = vmatprep.subr.bf16.mxu0 0
      %3113 = vmatpush1.bf16.msra.mxu0 %v3072
      %3114 = vmatprep.subr.bf16.mxu0 0
      %3115 = vmatpush1.bf16.msra.mxu0 %v3073
      %3116 = vmatprep.subr.bf16.mxu0 0
      %3117 = vmatpush1.bf16.msra.mxu0 %v3074
      %3118 = vmatprep.subr.bf16.mxu0 0
      %3119 = vmatpush1.bf16.msra.mxu0 %v3075
      %3120 = vmatprep.subr.bf16.mxu0 0
      %3121 = vmatpush1.bf16.msra.mxu0 %v3076
      %3122 = vmatprep.subr.bf16.mxu0 0
      %3123 = vmatpush1.bf16.msra.mxu0 %v3077
      %3124 = vmatprep.subr.bf16.mxu0 0
      %3125 = vmatpush1.bf16.msra.mxu0 %v3078
      %3126 = vmatprep.subr.bf16.mxu0 0
      %3127 = vmatpush1.bf16.msra.mxu0 %v3079
      %3128 = vmatprep.mubr.bf16.mxu0 %v2966
      %3129 = vmatmul.mubr.bf16.gmra.mrb[0].mxu0 %v2965
      %v3130 = vpop.f32.mrb[0].mxu0
      %v3131 = vadd.f32 0.0, %v3130
      %v3132 = vpop.f32.mrb[0].mxu0
      %v3133 = vpop.f32.mrb[0].mxu0
      %v3134 = vpop.f32.mrb[0].mxu0
      %3135 = vdwg.mxu0
      %v3136 = vadd.f32 %v2951, %v3131
      %v3137 = vld [vmem:[%s8] sm:$0x1]
      %v3138 = vadd.f32 %v3136, %v3137
      %v3139 = vmax.f32 %v3138, 0.0
      %v3140 = vpack.c.bf16 %v3139, %v3139
      %vm3141 = vcmask 516096
      %vm3142 = vsmask.f32 256
      %vm3143 = vmand %vm3141, %vm3142
      %v3144 = vld [vmem:[%s628] sm:$0x1]
      %v3145 = vsel %vm3143, %v3140, %v3144
      %3146 = vst [vmem:[%s628] sm:$0x1] %v3145
      %v3147 = vld [vmem:[%s9] sm:$0xf]
      %v3148 = vld [vmem:[%s9 + $0x4] sm:$0xf]
      %v3149 = vld [vmem:[%s9 + $0x8] sm:$0xf]
      %v3150 = vld [vmem:[%s9 + $0xc] sm:$0xf]
      %v3151 = vld [vmem:[%s9 + $0x10] sm:$0xf]
      %v3152 = vld [vmem:[%s9 + $0x14] sm:$0xf]
      %v3153 = vld [vmem:[%s9 + $0x18] sm:$0xf]
      %v3154 = vld [vmem:[%s9 + $0x1c] sm:$0xf]
      %v3155 = vld [vmem:[%s10] sm:$0x1]
      %v3164 = vunpack.c.l.b16 %v3147
      %v3165 = vunpack.c.l.b16 %v3148
      %v3166 = vunpack.c.l.b16 %v3149
      %v3167 = vunpack.c.l.b16 %v3150
      %v3168 = vunpack.c.l.b16 %v3151
      %v3169 = vunpack.c.l.b16 %v3152
      %v3170 = vunpack.c.l.b16 %v3153
      %v3171 = vunpack.c.l.b16 %v3154
      %v3172 = vpack.c.b16 %v3165, %v3164
      %v3173 = vpack.c.b16 %v3167, %v3166
      %v3174 = vpack.c.b16 %v3169, %v3168
      %v3175 = vpack.c.b16 %v3171, %v3170
      %vm3180 = vcmask 523264
      %v3182 = vsel %vm3180, %v3140, 0
      %3184 = vmatprep.subr.bf16.mxu0 0
      %3185 = vmatpush1.bf16.msra.mxu0 %v3172
      %3186 = vmatprep.subr.bf16.mxu0 0
      %3187 = vmatpush1.bf16.msra.mxu0 %v3173
      %3188 = vmatprep.subr.bf16.mxu0 0
      %3189 = vmatpush1.bf16.msra.mxu0 %v3174
      %3190 = vmatprep.subr.bf16.mxu0 0
      %3191 = vmatpush1.bf16.msra.mxu0 %v3175
      %3192 = vmatprep.subr.bf16.mxu0 0
      %3193 = vmatpush1.bf16.msra.mxu0 0
      %3194 = vmatprep.subr.bf16.mxu0 0
      %3195 = vmatpush1.bf16.msra.mxu0 0
      %3196 = vmatprep.subr.bf16.mxu0 0
      %3197 = vmatpush1.bf16.msra.mxu0 0
      %3198 = vmatprep.subr.bf16.mxu0 0
      %3199 = vmatpush1.bf16.msra.mxu0 0
      %3200 = vmatprep.subr.bf16.mxu0 0
      %3201 = vmatpush1.bf16.msra.mxu0 0
      %3202 = vmatprep.subr.bf16.mxu0 0
      %3203 = vmatpush1.bf16.msra.mxu0 0
      %3204 = vmatprep.subr.bf16.mxu0 0
      %3205 = vmatpush1.bf16.msra.mxu0 0
      %3206 = vmatprep.subr.bf16.mxu0 0
      %3207 = vmatpush1.bf16.msra.mxu0 0
      %3208 = vmatprep.subr.bf16.mxu0 0
      %3209 = vmatpush1.bf16.msra.mxu0 0
      %3210 = vmatprep.subr.bf16.mxu0 0
      %3211 = vmatpush1.bf16.msra.mxu0 0
      %3212 = vmatprep.subr.bf16.mxu0 0
      %3213 = vmatpush1.bf16.msra.mxu0 0
      %3214 = vmatprep.subr.bf16.mxu0 0
      %3215 = vmatpush1.bf16.msra.mxu0 0
      %3216 = vmatprep.mubr.bf16.mxu0 0
      %3217 = vmatmul.mubr.bf16.gmra.mrb[0].mxu0 %v3182
      %v3218 = vpop.f32.mrb[0].mxu0
      %v3219 = vadd.f32 %v3155, %v3218
      %v3220 = vpop.f32.mrb[0].mxu0
      %v3221 = vpop.f32.mrb[0].mxu0
      %v3222 = vpop.f32.mrb[0].mxu0
      %3223 = vdwg.mxu0
      %v3224 = vpack.c.bf16 %v3219, %v3219
      %v3225 = vld [vmem:[%s11] sm:$0xf]
      %v3226 = vld [vmem:[%s11 + $0x4] sm:$0xf]
      %v3227 = vld [vmem:[%s11 + $0x8] sm:$0xf]
      %v3228 = vld [vmem:[%s11 + $0xc] sm:$0xf]
      %v3229 = vld [vmem:[%s12] sm:$0x1]
      %v3234 = vunpack.c.l.b16 %v3225
      %v3235 = vunpack.c.l.b16 %v3226
      %v3236 = vunpack.c.l.b16 %v3227
      %v3237 = vunpack.c.l.b16 %v3228
      %v3238 = vpack.c.b16 %v3235, %v3234
      %v3239 = vpack.c.b16 %v3237, %v3236
      %v3243 = vsel %vm1088, %v3224, 0
      %3245 = vmatprep.subr.bf16.mxu0 0
      %3246 = vmatpush1.bf16.msra.mxu0 %v3238
      %3247 = vmatprep.subr.bf16.mxu0 0
      %3248 = vmatpush1.bf16.msra.mxu0 %v3239
      %3249 = vmatprep.subr.bf16.mxu0 0
      %3250 = vmatpush1.bf16.msra.mxu0 0
      %3251 = vmatprep.subr.bf16.mxu0 0
      %3252 = vmatpush1.bf16.msra.mxu0 0
      %3253 = vmatprep.subr.bf16.mxu0 0
      %3254 = vmatpush1.bf16.msra.mxu0 0
      %3255 = vmatprep.subr.bf16.mxu0 0
      %3256 = vmatpush1.bf16.msra.mxu0 0
      %3257 = vmatprep.subr.bf16.mxu0 0
      %3258 = vmatpush1.bf16.msra.mxu0 0
      %3259 = vmatprep.subr.bf16.mxu0 0
      %3260 = vmatpush1.bf16.msra.mxu0 0
      %3261 = vmatprep.subr.bf16.mxu0 0
      %3262 = vmatpush1.bf16.msra.mxu0 0
      %3263 = vmatprep.subr.bf16.mxu0 0
      %3264 = vmatpush1.bf16.msra.mxu0 0
      %3265 = vmatprep.subr.bf16.mxu0 0
      %3266 = vmatpush1.bf16.msra.mxu0 0
      %3267 = vmatprep.subr.bf16.mxu0 0
      %3268 = vmatpush1.bf16.msra.mxu0 0
      %3269 = vmatprep.subr.bf16.mxu0 0
      %3270 = vmatpush1.bf16.msra.mxu0 0
      %3271 = vmatprep.subr.bf16.mxu0 0
      %3272 = vmatpush1.bf16.msra.mxu0 0
      %3273 = vmatprep.subr.bf16.mxu0 0
      %3274 = vmatpush1.bf16.msra.mxu0 0
      %3275 = vmatprep.subr.bf16.mxu0 0
      %3276 = vmatpush1.bf16.msra.mxu0 0
      %3277 = vmatprep.mubr.bf16.mxu0 0
      %3278 = vmatmul.mubr.bf16.gmra.mrb[0].mxu0 %v3243
      %v3279 = vpop.f32.mrb[0].mxu0
      %v3280 = vadd.f32 %v3229, %v3279
      %v3281 = vpop.f32.mrb[0].mxu0
      %v3282 = vpop.f32.mrb[0].mxu0
      %v3283 = vpop.f32.mrb[0].mxu0
      %3284 = vdwg.mxu0
      %v3285 = vmul.f32 %v3280, 0.5
      %v3286 = vmul.f32 %v3285, 1.442695
      %v3287 = vpow.pop %v3286
      %v3288 = vld [vmem:[%s608] sm:$0x1]
      %v3290 = vlaneseq
      %v3291 = vshrl.u32 %v3290, 7
      %v3292 = vsub.s32 0, %v3291
      %v3293 = vrot.slane %v3288, %v3292
      %3294 = vrot.lane.b32.xlu0 %v3293, 8
      %v3295 = vpop.permute.xlu0 %3294
      %v3297 = vmul.f32 %v3287, %v3295
      %3299 = vrot.lane.b32.xlu0 %v3297, 120
      %v3300 = vpop.permute.xlu0 %3299
      %v3302 = vadd.f32 %v3280, %v3300
      %3304 = vrot.lane.b32.xlu0 %v3280, 8
      %v3305 = vpop.permute.xlu0 %3304
      %vm3307 = vcmask 64512
      %v3308 = vsel %vm3307, %v3302, %v3305
      %vm3309 = vcmask 130048
      %v3310 = vsel %vm3309, %v3308, %v3305
      %vm3311 = vcmask 188416
      %3312 = vst.msk [vmem:[%s611] sm:$0x1] %vm3311, %v3310
      %p3313 = scmp.lt.s32.totalorder %s30, 1
      %s3314 = scalar_select %p3313, %s30, 1
      %s3315 = scalar_lea.vmem %s14, %s3314
      %p3316 = scmp.lt.s32.totalorder %s30, 1
      %s3317 = scalar_select %p3316, %s30, 1
      %s3318 = smul.addr %s3317, 8
      %s3319 = smul.addr %s3318, 4
      %s3320 = scalar_lea.vmem %s15, %s3319
      %p3321 = scmp.lt.s32.totalorder %s30, 1
      %s3322 = scalar_select %p3321, %s30, 1
      %s3323 = smul.addr %s3322, 2
      %s3324 = smul.addr %s3323, 4
      %s3325 = scalar_lea.vmem %s16, %s3324
      %p3326 = scmp.lt.s32.totalorder %s30, 1
      %s3327 = scalar_select %p3326, %s30, 1
      %s3328 = smul.addr %s3327, 2
      %s3329 = scalar_lea.vmem %s17, %s3328
      %p3330 = scmp.lt.s32.totalorder %s30, 1
      %s3331 = scalar_select %p3330, %s30, 1
      %s3332 = scalar_lea.vmem %s18, %s3331
      // Predicated region
      $region77: #{cnn2d_shapes_encoder.1} parent=75 // pred_check
        %p3333 = pneg %p352
      $region78: #{cnn2d_shapes_encoder.1} parent=75 // pred_check_branch
        %3335 = sbr.rel (%p3333) target = $region80
      $region79: #{cnn2d_shapes_encoder.1} parent=75 // pred_region
        _
      $region80: #{cnn2d_shapes_encoder.1} parent=75 // pred_fallthru
        _
      // Predicated region
      $region81: #{cnn2d_shapes_encoder.1} parent=75 // pred_check
        %p3336 = pneg %p378
      $region82: #{cnn2d_shapes_encoder.1} parent=75 // pred_check_branch
        %3338 = sbr.rel (%p3336) target = $region84
      $region83: #{cnn2d_shapes_encoder.1} parent=75 // pred_region
        _
      $region84: #{cnn2d_shapes_encoder.1} parent=75 // pred_fallthru
        _
      // Predicated region
      $region85: #{cnn2d_shapes_encoder.1} parent=75 // pred_check
        %p3339 = pneg %p404
      $region86: #{cnn2d_shapes_encoder.1} parent=75 // pred_check_branch
        %3341 = sbr.rel (%p3339) target = $region88
      $region87: #{cnn2d_shapes_encoder.1} parent=75 // pred_region
        _
      $region88: #{cnn2d_shapes_encoder.1} parent=75 // pred_fallthru
        _
      // Predicated region
      $region89: #{cnn2d_shapes_encoder.1} parent=75 // pred_check
        %p3342 = pneg %p430
      $region90: #{cnn2d_shapes_encoder.1} parent=75 // pred_check_branch
        %3344 = sbr.rel (%p3342) target = $region92
      $region91: #{cnn2d_shapes_encoder.1} parent=75 // pred_region
        _
      $region92: #{cnn2d_shapes_encoder.1} parent=75 // pred_fallthru
        _
      // Predicated region
      $region93: #{cnn2d_shapes_encoder.1} parent=75 // pred_check
        %p3345 = pneg %p456
      $region94: #{cnn2d_shapes_encoder.1} parent=75 // pred_check_branch
        %3347 = sbr.rel (%p3345) target = $region96
      $region95: #{cnn2d_shapes_encoder.1} parent=75 // pred_region
        _
      $region96: #{cnn2d_shapes_encoder.1} parent=75 // pred_fallthru
        _
    $region76: #{cnn2d_shapes_encoder.1} parent=5 // pred_fallthru
      _
    %p3348 = scmp.le.s32.totalorder 2, %s25
    // Predicated region
    $region97: #{cnn2d_shapes_encoder.1} parent=5 // pred_check
      %p3349 = pneg %p3348
    $region98: #{cnn2d_shapes_encoder.1} parent=5 // pred_check_branch
      %3351 = sbr.rel (%p3349) target = $region100
    $region99: #{cnn2d_shapes_encoder.1} parent=5 // pred_region
      %s3352 = ssub.s32 %s25, 2
      // Predicated region
      $region101: #{cnn2d_shapes_encoder.1} parent=99 // pred_check
        %p3353 = pneg %p358
      $region102: #{cnn2d_shapes_encoder.1} parent=99 // pred_check_branch
        %3355 = sbr.rel (%p3353) target = $region104
      $region103: #{cnn2d_shapes_encoder.1} parent=99 // pred_region
        %p3356 = scmp.lt.s32.totalorder %s31, 1
        %s3357 = scalar_select %p3356, %s31, 1
        %s3358 = scalar_lea.vmem %s14, %s3357
      $region104: #{cnn2d_shapes_encoder.1} parent=99 // pred_fallthru
        _
      // Predicated region
      $region105: #{cnn2d_shapes_encoder.1} parent=99 // pred_check
        %p3359 = pneg %p384
      $region106: #{cnn2d_shapes_encoder.1} parent=99 // pred_check_branch
        %3361 = sbr.rel (%p3359) target = $region108
      $region107: #{cnn2d_shapes_encoder.1} parent=99 // pred_region
        %p3362 = scmp.lt.s32.totalorder %s31, 1
        %s3363 = scalar_select %p3362, %s31, 1
        %s3364 = smul.addr %s3363, 8
        %s3365 = smul.addr %s3364, 4
        %s3366 = scalar_lea.vmem %s15, %s3365
      $region108: #{cnn2d_shapes_encoder.1} parent=99 // pred_fallthru
        _
      // Predicated region
      $region109: #{cnn2d_shapes_encoder.1} parent=99 // pred_check
        %p3367 = pneg %p410
      $region110: #{cnn2d_shapes_encoder.1} parent=99 // pred_check_branch
        %3369 = sbr.rel (%p3367) target = $region112
      $region111: #{cnn2d_shapes_encoder.1} parent=99 // pred_region
        %p3370 = scmp.lt.s32.totalorder %s31, 1
        %s3371 = scalar_select %p3370, %s31, 1
        %s3372 = smul.addr %s3371, 2
        %s3373 = smul.addr %s3372, 4
        %s3374 = scalar_lea.vmem %s16, %s3373
      $region112: #{cnn2d_shapes_encoder.1} parent=99 // pred_fallthru
        _
      // Predicated region
      $region113: #{cnn2d_shapes_encoder.1} parent=99 // pred_check
        %p3375 = pneg %p436
      $region114: #{cnn2d_shapes_encoder.1} parent=99 // pred_check_branch
        %3377 = sbr.rel (%p3375) target = $region116
      $region115: #{cnn2d_shapes_encoder.1} parent=99 // pred_region
        %p3378 = scmp.lt.s32.totalorder %s31, 1
        %s3379 = scalar_select %p3378, %s31, 1
        %s3380 = smul.addr %s3379, 2
        %s3381 = scalar_lea.vmem %s17, %s3380
      $region116: #{cnn2d_shapes_encoder.1} parent=99 // pred_fallthru
        _
      // Predicated region
      $region117: #{cnn2d_shapes_encoder.1} parent=99 // pred_check
        %p3382 = pneg %p462
      $region118: #{cnn2d_shapes_encoder.1} parent=99 // pred_check_branch
        %3384 = sbr.rel (%p3382) target = $region120
      $region119: #{cnn2d_shapes_encoder.1} parent=99 // pred_region
        %p3385 = scmp.lt.s32.totalorder %s31, 1
        %s3386 = scalar_select %p3385, %s31, 1
        %s3387 = scalar_lea.vmem %s18, %s3386
      $region120: #{cnn2d_shapes_encoder.1} parent=99 // pred_fallthru
        _
    $region100: #{cnn2d_shapes_encoder.1} parent=5 // pred_fallthru
      _
  $region6: #{cnn2d_shapes_encoder.1} parent=0 // loop_footer
    %s29 = sadd.s32 1, %s25
  $region7: #{cnn2d_shapes_encoder.1} parent=0 // loop_footer_branch
    %24 = sbr.rel target = $region3
  $region8: #{cnn2d_shapes_encoder.1} parent=0 // loop_exit
    _

</llo_original>
